<compile_context>
chip_gen: v7x
topology: tpu7x:2x2x1
jax: 0.10.0
libtpu: 0.0.40
codegen_flags: <defaults>
</compile_context>

<pallas_src>
import functools

import jax
import jax.numpy as jnp
from jax import lax
from jax.experimental import pallas as pl
from jax.experimental.pallas import tpu as pltpu


# ----------------------------------------------------------------------------
# Shared kernel body: one bidirectional LSTM layer
# ----------------------------------------------------------------------------

def _bilstm_recurrence(x_ref, w_ih_ref, w_hh_f_ref, w_hh_b_ref, b_ref,
                       hid_ref, xp_scr, *, T, B):
    """Bidirectional LSTM layer over a time-major (T*B, F) activation slab.

    x_ref:      (T*B, F)   input activations, row index = t*B + b
    w_ih_ref:   (F, 8H)    [W_ih_fwd.T | W_ih_bwd.T], PyTorch gate order i,f,g,o
    w_hh_*_ref: (H, 4H)    recurrent weights (transposed), per direction
    b_ref:      (1, 8H)    [b_ih_f + b_hh_f | b_ih_b + b_hh_b]
    hid_ref:    (T*B, 2H)  output: [:, :H] forward, [:, H:] backward, both in
                           natural time order (PyTorch bidirectional layout)
    xp_scr:     (T*B, 8H)  VMEM scratch for the hoisted input projection
    """
    H4 = w_hh_f_ref.shape[1]          # 4H
    H = H4 // 4

    # --- preamble: hoisted input projection (+ folded bias), all timesteps,
    # both directions, as a single lane-dense MXU matmul ----------------------
    xp_scr[...] = (
        jnp.dot(x_ref[...], w_ih_ref[...], preferred_element_type=jnp.float32)
        + b_ref[...])

    w_hh_f = w_hh_f_ref[...]
    w_hh_b = w_hh_b_ref[...]

    def lstm_cell(gates, c_prev):
        i_g = jax.nn.sigmoid(gates[:, 0 * H:1 * H])
        f_g = jax.nn.sigmoid(gates[:, 1 * H:2 * H])
        g_g = jnp.tanh(gates[:, 2 * H:3 * H])
        o_g = jax.nn.sigmoid(gates[:, 3 * H:4 * H])
        c_new = f_g * c_prev + i_g * g_g
        h_new = o_g * jnp.tanh(c_new)
        return h_new, c_new

    def step(t, carry):
        h_f, c_f, h_b, c_b = carry
        s = T - 1 - t                                    # backward time index
        # 128-lane-aligned slices of the precomputed projection.
        xp_f = xp_scr[pl.ds(t * B, B), :H4]              # fwd gates @ time t
        xp_b = xp_scr[pl.ds(s * B, B), H4:]              # bwd gates @ time s
        g_f = xp_f + jnp.dot(h_f, w_hh_f, preferred_element_type=jnp.float32)
        g_b = xp_b + jnp.dot(h_b, w_hh_b, preferred_element_type=jnp.float32)
        h_f, c_f = lstm_cell(g_f, c_f)
        h_b, c_b = lstm_cell(g_b, c_b)
        hid_ref[pl.ds(t * B, B), :H] = h_f               # fwd half, time t
        hid_ref[pl.ds(s * B, B), H:] = h_b               # bwd half, time s
        return h_f, c_f, h_b, c_b

    z = jnp.zeros((B, H), jnp.float32)
    # Fully unrolled: T is a small static trip count, so all row/lane offsets
    # become compile-time constants and the LLO scheduler sees straight-line code.
    lax.fori_loop(0, T, step, (z, z, z, z), unroll=True)


def _bilstm_layer_kernel(x_ref, w_ih_ref, w_hh_f_ref, w_hh_b_ref, b_ref,
                         out_ref, xp_scr, *, T, B):
    _bilstm_recurrence(x_ref, w_ih_ref, w_hh_f_ref, w_hh_b_ref, b_ref,
                       out_ref, xp_scr, T=T, B=B)


def _bilstm_layer_fc_kernel(x_ref, w_ih_ref, w_hh_f_ref, w_hh_b_ref, b_ref,
                            fc_w_ref, fc_b_ref, logits_ref, hid_scr, xp_scr,
                            *, T, B):
    _bilstm_recurrence(x_ref, w_ih_ref, w_hh_f_ref, w_hh_b_ref, b_ref,
                       hid_scr, xp_scr, T=T, B=B)
    # Fused nn.Linear epilogue on the VMEM-resident layer output.
    logits_ref[...] = (
        jnp.dot(hid_scr[...], fc_w_ref[...], preferred_element_type=jnp.float32)
        + fc_b_ref[...])


# ----------------------------------------------------------------------------
# pallas_call wrappers (single grid step; everything resident in VMEM)
# ----------------------------------------------------------------------------

def bilstm_layer(x, w_ih, w_hh_f, w_hh_b, b, *, seq_len, batch):
    N, F = x.shape
    H = w_hh_f.shape[0]
    kernel = functools.partial(_bilstm_layer_kernel, T=seq_len, B=batch)
    return pl.pallas_call(
        kernel,
        out_shape=jax.ShapeDtypeStruct((N, 2 * H), jnp.float32),
        in_specs=[
            pl.BlockSpec((N, F), lambda: (0, 0)),
            pl.BlockSpec((F, 8 * H), lambda: (0, 0)),
            pl.BlockSpec((H, 4 * H), lambda: (0, 0)),
            pl.BlockSpec((H, 4 * H), lambda: (0, 0)),
            pl.BlockSpec((1, 8 * H), lambda: (0, 0)),
        ],
        out_specs=pl.BlockSpec((N, 2 * H), lambda: (0, 0)),
        scratch_shapes=[pltpu.VMEM((N, 8 * H), jnp.float32)],
    )(x, w_ih, w_hh_f, w_hh_b, b)


def bilstm_layer_fc(x, w_ih, w_hh_f, w_hh_b, b, fc_w, fc_b, *, seq_len, batch):
    N, F = x.shape
    H = w_hh_f.shape[0]
    O = fc_w.shape[1]
    kernel = functools.partial(_bilstm_layer_fc_kernel, T=seq_len, B=batch)
    return pl.pallas_call(
        kernel,
        out_shape=jax.ShapeDtypeStruct((N, O), jnp.float32),
        in_specs=[
            pl.BlockSpec((N, F), lambda: (0, 0)),
            pl.BlockSpec((F, 8 * H), lambda: (0, 0)),
            pl.BlockSpec((H, 4 * H), lambda: (0, 0)),
            pl.BlockSpec((H, 4 * H), lambda: (0, 0)),
            pl.BlockSpec((1, 8 * H), lambda: (0, 0)),
            pl.BlockSpec((2 * H, O), lambda: (0, 0)),
            pl.BlockSpec((1, O), lambda: (0, 0)),
        ],
        out_specs=pl.BlockSpec((N, O), lambda: (0, 0)),
        scratch_shapes=[
            pltpu.VMEM((N, 2 * H), jnp.float32),   # last-layer hidden slab
            pltpu.VMEM((N, 8 * H), jnp.float32),   # hoisted input projection
        ],
    )(x, w_ih, w_hh_f, w_hh_b, b, fc_w, fc_b)


# ----------------------------------------------------------------------------
# Model: embedding -> multi-layer bidirectional LSTM -> linear (fused)
# ----------------------------------------------------------------------------

def lstm_ner_forward(params, x_ids):
    """x_ids: (B, T) int32 token ids.  Returns (B, T, output_size) float32."""
    B, T = x_ids.shape
    # Embedding gather directly in time-major, flattened (row = t*B + b) order,
    # so no activation transposes are needed anywhere downstream.
    # Dropout on embeddings: identity in eval mode.
    ids_tm = x_ids.T.reshape(-1)                        # (T*B,)
    h = params["embedding"][ids_tm]                     # (T*B, E)

    layers = params["lstm"]
    n_layers = len(layers)
    logits = None
    for li, layer in enumerate(layers):
        if li + 1 < n_layers:
            h = bilstm_layer(h, layer["w_ih"], layer["w_hh_f"],
                             layer["w_hh_b"], layer["b"],
                             seq_len=T, batch=B)
            # inter-layer dropout: identity in eval mode
        else:
            # Last layer: nn.Linear fused into the kernel epilogue.
            logits = bilstm_layer_fc(h, layer["w_ih"], layer["w_hh_f"],
                                     layer["w_hh_b"], layer["b"],
                                     params["fc_w"], params["fc_b"],
                                     seq_len=T, batch=B)
    O = logits.shape[-1]
    return logits.reshape(T, B, O).transpose(1, 0, 2)   # (B, T, O)


# ----------------------------------------------------------------------------
# Synthetic parameters in PyTorch layout + packing into the kernel layout
# ----------------------------------------------------------------------------

def init_torch_layout_params(key, vocab_size, embedding_dim, hidden_dim,
                             n_layers, output_size, pad_idx):
    """Deterministic synthetic weights in PyTorch nn.LSTM / nn.Linear layout."""
    keys = iter(jax.random.split(key, 1 + 8 * n_layers + 2))

    def rnd(shape, scale=0.1):
        return scale * jax.random.normal(next(keys), shape, dtype=jnp.float32)

    emb = rnd((vocab_size, embedding_dim), 1.0).at[pad_idx].set(0.0)

    lstm = []
    in_dim = embedding_dim
    for _ in range(n_layers):
        layer = {}
        for d in ("f", "b"):
            layer[f"w_ih_{d}"] = rnd((4 * hidden_dim, in_dim))      # (4H, F)
            layer[f"w_hh_{d}"] = rnd((4 * hidden_dim, hidden_dim))  # (4H, H)
            layer[f"b_ih_{d}"] = rnd((4 * hidden_dim,))
            layer[f"b_hh_{d}"] = rnd((4 * hidden_dim,))
        lstm.append(layer)
        in_dim = 2 * hidden_dim                                     # bidirectional

    fc_w = rnd((output_size, 2 * hidden_dim))                       # (O, 2H)
    fc_b = rnd((output_size,))
    return {"embedding": emb, "lstm": lstm, "fc_w": fc_w, "fc_b": fc_b}


def pack_params(raw):
    """PyTorch layout -> kernel layout:
       w_ih (F, 8H) = [W_ih_f.T | W_ih_b.T];  w_hh_* (H, 4H) = W_hh_*.T;
       b (1, 8H) = combined ih+hh biases;  fc_w (2H, O);  fc_b (1, O)."""
    lstm = []
    for layer in raw["lstm"]:
        lstm.append({
            "w_ih": jnp.concatenate([layer["w_ih_f"].T, layer["w_ih_b"].T],
                                    axis=1),
            "w_hh_f": layer["w_hh_f"].T,
            "w_hh_b": layer["w_hh_b"].T,
            "b": jnp.concatenate([layer["b_ih_f"] + layer["b_hh_f"],
                                  layer["b_ih_b"] + layer["b_hh_b"]])[None, :],
        })
    return {
        "embedding": raw["embedding"],
        "lstm": lstm,
        "fc_w": raw["fc_w"].T,
        "fc_b": raw["fc_b"][None, :],
    }


# ----------------------------------------------------------------------------
# Main
# ----------------------------------------------------------------------------

if __name__ == "__main__":
    vocab_size = 50
    embedding_dim = 32
    hidden_dim = 32
    n_layers = 2
    output_size = 8
    pad_idx = 0            # vocabulary['<pad>'] == 0
    batch = 2
    seq_len = 8

    key = jax.random.PRNGKey(0)
    k_params, k_data = jax.random.split(key)

    raw = init_torch_layout_params(k_params, vocab_size, embedding_dim,
                                   hidden_dim, n_layers, output_size, pad_idx)
    params = pack_params(raw)

    x_ids = jax.random.randint(k_data, (batch, seq_len), 0, vocab_size,
                               dtype=jnp.int32)

    fwd = jax.jit(lstm_ner_forward)
    logits = fwd(params, x_ids)
    jax.block_until_ready(logits)

    assert logits.shape == (batch, seq_len, output_size), logits.shape
    assert logits.dtype == jnp.float32
    print("KERNEL_OK")
</pallas_src>

<mosaic_0001>
module attributes {stable_mosaic.version = 11 : i64} {
  func.func @_bilstm_layer_kernel(%arg0: memref<16x32xf32, #tpu.memory_space<vmem>>, %arg1: memref<32x256xf32, #tpu.memory_space<vmem>>, %arg2: memref<32x128xf32, #tpu.memory_space<vmem>>, %arg3: memref<32x128xf32, #tpu.memory_space<vmem>>, %arg4: memref<1x256xf32, #tpu.memory_space<vmem>>, %arg5: memref<16x64xf32, #tpu.memory_space<vmem>>, %arg6: memref<16x256xf32, #tpu.memory_space<vmem>>) attributes {dimension_semantics = [], scalar_prefetch = 0 : i64, scratch_operands = 1 : i64, tpu.core_type = #tpu.core_type<tc>} {
    %c0 = arith.constant 0 : index
    %c0_0 = arith.constant 0 : index
    %0 = vector.load %arg0[%c0, %c0_0] : memref<16x32xf32, #tpu.memory_space<vmem>>, vector<16x32xf32>
    %c0_1 = arith.constant 0 : index
    %c0_2 = arith.constant 0 : index
    %1 = vector.load %arg1[%c0_1, %c0_2] : memref<32x256xf32, #tpu.memory_space<vmem>>, vector<32x256xf32>
    %cst = arith.constant dense<0.000000e+00> : vector<16x256xf32>
    %2 = tpu.matmul %0, %1, %cst {dimension_numbers = #tpu.dot_dimension_numbers<[1], [0], [0], [1], [0, 0, 1, 1], [], []>} : vector<16x32xf32>, vector<32x256xf32>, vector<16x256xf32> -> vector<16x256xf32>
    %c0_3 = arith.constant 0 : index
    %c0_4 = arith.constant 0 : index
    %3 = vector.load %arg4[%c0_3, %c0_4] : memref<1x256xf32, #tpu.memory_space<vmem>>, vector<1x256xf32>
    %4 = vector.broadcast %3 : vector<1x256xf32> to vector<16x256xf32>
    %5 = arith.addf %2, %4 : vector<16x256xf32>
    %c0_5 = arith.constant 0 : index
    %c0_6 = arith.constant 0 : index
    %6 = vector.load %arg6[%c0_5, %c0_6] : memref<16x256xf32, #tpu.memory_space<vmem>>, vector<16x256xf32>
    tpu.vector_store %arg6[%c0_5, %c0_6], %5 {strides = array<i32>} : memref<16x256xf32, #tpu.memory_space<vmem>>, vector<16x256xf32>,
    %c0_7 = arith.constant 0 : index
    %c0_8 = arith.constant 0 : index
    %7 = vector.load %arg2[%c0_7, %c0_8] : memref<32x128xf32, #tpu.memory_space<vmem>>, vector<32x128xf32>
    %c0_9 = arith.constant 0 : index
    %c0_10 = arith.constant 0 : index
    %8 = vector.load %arg3[%c0_9, %c0_10] : memref<32x128xf32, #tpu.memory_space<vmem>>, vector<32x128xf32>
    %cst_11 = arith.constant 0.000000e+00 : f32
    %9 = vector.broadcast %cst_11 : f32 to vector<2x32xf32>
    %c0_i32 = arith.constant 0 : i32
    %c7_i32 = arith.constant 7 : i32
    %10 = arith.subi %c7_i32, %c0_i32 : i32
    %c2_i32 = arith.constant 2 : i32
    %11 = arith.muli %c0_i32, %c2_i32 : i32
    %12 = arith.index_cast %11 : i32 to index
    %c0_12 = arith.constant 0 : index
    %13 = vector.load %arg6[%12, %c0_12] : memref<16x256xf32, #tpu.memory_space<vmem>>, vector<2x128xf32>
    %c2_i32_13 = arith.constant 2 : i32
    %14 = arith.muli %10, %c2_i32_13 : i32
    %15 = arith.index_cast %14 : i32 to index
    %c128 = arith.constant 128 : index
    %16 = vector.load %arg6[%15, %c128] : memref<16x256xf32, #tpu.memory_space<vmem>>, vector<2x128xf32>
    %cst_14 = arith.constant dense<0.000000e+00> : vector<2x128xf32>
    %17 = tpu.matmul %9, %7, %cst_14 {dimension_numbers = #tpu.dot_dimension_numbers<[1], [0], [0], [1], [0, 0, 1, 1], [], []>} : vector<2x32xf32>, vector<32x128xf32>, vector<2x128xf32> -> vector<2x128xf32>
    %18 = arith.addf %13, %17 : vector<2x128xf32>
    %cst_15 = arith.constant dense<0.000000e+00> : vector<2x128xf32>
    %19 = tpu.matmul %9, %8, %cst_15 {dimension_numbers = #tpu.dot_dimension_numbers<[1], [0], [0], [1], [0, 0, 1, 1], [], []>} : vector<2x32xf32>, vector<32x128xf32>, vector<2x128xf32> -> vector<2x128xf32>
    %20 = arith.addf %16, %19 : vector<2x128xf32>
    %21 = vector.extract_strided_slice %18 {offsets = [0, 0], sizes = [2, 32], strides = [1, 1]} : vector<2x128xf32> to vector<2x32xf32>
    %22 = arith.negf %21 : vector<2x32xf32>
    %23 = math.exp %22 : vector<2x32xf32>
    %cst_16 = arith.constant 1.000000e+00 : f32
    %24 = vector.broadcast %cst_16 : f32 to vector<2x32xf32>
    %25 = arith.addf %24, %23 : vector<2x32xf32>
    %26 = arith.divf %24, %25 : vector<2x32xf32>
    %27 = vector.extract_strided_slice %18 {offsets = [0, 32], sizes = [2, 32], strides = [1, 1]} : vector<2x128xf32> to vector<2x32xf32>
    %28 = arith.negf %27 : vector<2x32xf32>
    %29 = math.exp %28 : vector<2x32xf32>
    %cst_17 = arith.constant 1.000000e+00 : f32
    %30 = vector.broadcast %cst_17 : f32 to vector<2x32xf32>
    %31 = arith.addf %30, %29 : vector<2x32xf32>
    %32 = arith.divf %30, %31 : vector<2x32xf32>
    %33 = vector.extract_strided_slice %18 {offsets = [0, 64], sizes = [2, 32], strides = [1, 1]} : vector<2x128xf32> to vector<2x32xf32>
    %34 = math.tanh %33 : vector<2x32xf32>
    %35 = vector.extract_strided_slice %18 {offsets = [0, 96], sizes = [2, 32], strides = [1, 1]} : vector<2x128xf32> to vector<2x32xf32>
    %36 = arith.negf %35 : vector<2x32xf32>
    %37 = math.exp %36 : vector<2x32xf32>
    %cst_18 = arith.constant 1.000000e+00 : f32
    %38 = vector.broadcast %cst_18 : f32 to vector<2x32xf32>
    %39 = arith.addf %38, %37 : vector<2x32xf32>
    %40 = arith.divf %38, %39 : vector<2x32xf32>
    %41 = arith.mulf %32, %9 : vector<2x32xf32>
    %42 = arith.mulf %26, %34 : vector<2x32xf32>
    %43 = arith.addf %41, %42 : vector<2x32xf32>
    %44 = math.tanh %43 : vector<2x32xf32>
    %45 = arith.mulf %40, %44 : vector<2x32xf32>
    %46 = vector.extract_strided_slice %20 {offsets = [0, 0], sizes = [2, 32], strides = [1, 1]} : vector<2x128xf32> to vector<2x32xf32>
    %47 = arith.negf %46 : vector<2x32xf32>
    %48 = math.exp %47 : vector<2x32xf32>
    %cst_19 = arith.constant 1.000000e+00 : f32
    %49 = vector.broadcast %cst_19 : f32 to vector<2x32xf32>
    %50 = arith.addf %49, %48 : vector<2x32xf32>
    %51 = arith.divf %49, %50 : vector<2x32xf32>
    %52 = vector.extract_strided_slice %20 {offsets = [0, 32], sizes = [2, 32], strides = [1, 1]} : vector<2x128xf32> to vector<2x32xf32>
    %53 = arith.negf %52 : vector<2x32xf32>
    %54 = math.exp %53 : vector<2x32xf32>
    %cst_20 = arith.constant 1.000000e+00 : f32
    %55 = vector.broadcast %cst_20 : f32 to vector<2x32xf32>
    %56 = arith.addf %55, %54 : vector<2x32xf32>
    %57 = arith.divf %55, %56 : vector<2x32xf32>
    %58 = vector.extract_strided_slice %20 {offsets = [0, 64], sizes = [2, 32], strides = [1, 1]} : vector<2x128xf32> to vector<2x32xf32>
    %59 = math.tanh %58 : vector<2x32xf32>
    %60 = vector.extract_strided_slice %20 {offsets = [0, 96], sizes = [2, 32], strides = [1, 1]} : vector<2x128xf32> to vector<2x32xf32>
    %61 = arith.negf %60 : vector<2x32xf32>
    %62 = math.exp %61 : vector<2x32xf32>
    %cst_21 = arith.constant 1.000000e+00 : f32
    %63 = vector.broadcast %cst_21 : f32 to vector<2x32xf32>
    %64 = arith.addf %63, %62 : vector<2x32xf32>
    %65 = arith.divf %63, %64 : vector<2x32xf32>
    %66 = arith.mulf %57, %9 : vector<2x32xf32>
    %67 = arith.mulf %51, %59 : vector<2x32xf32>
    %68 = arith.addf %66, %67 : vector<2x32xf32>
    %69 = math.tanh %68 : vector<2x32xf32>
    %70 = arith.mulf %65, %69 : vector<2x32xf32>
    %c2_i32_22 = arith.constant 2 : i32
    %71 = arith.muli %c0_i32, %c2_i32_22 : i32
    %72 = arith.index_cast %71 : i32 to index
    %c0_23 = arith.constant 0 : index
    %73 = vector.load %arg5[%72, %c0_23] : memref<16x64xf32, #tpu.memory_space<vmem>>, vector<2x32xf32>
    tpu.vector_store %arg5[%72, %c0_23], %45 {strides = array<i32>} : memref<16x64xf32, #tpu.memory_space<vmem>>, vector<2x32xf32>,
    %c2_i32_24 = arith.constant 2 : i32
    %74 = arith.muli %10, %c2_i32_24 : i32
    %75 = arith.index_cast %74 : i32 to index
    %c32 = arith.constant 32 : index
    %76 = vector.load %arg5[%75, %c32] : memref<16x64xf32, #tpu.memory_space<vmem>>, vector<2x32xf32>
    tpu.vector_store %arg5[%75, %c32], %70 {strides = array<i32>} : memref<16x64xf32, #tpu.memory_space<vmem>>, vector<2x32xf32>,
    %c1_i32 = arith.constant 1 : i32
    %c7_i32_25 = arith.constant 7 : i32
    %77 = arith.subi %c7_i32_25, %c1_i32 : i32
    %c2_i32_26 = arith.constant 2 : i32
    %78 = arith.muli %c1_i32, %c2_i32_26 : i32
    %79 = arith.index_cast %78 : i32 to index
    %c0_27 = arith.constant 0 : index
    %80 = vector.load %arg6[%79, %c0_27] : memref<16x256xf32, #tpu.memory_space<vmem>>, vector<2x128xf32>
    %c2_i32_28 = arith.constant 2 : i32
    %81 = arith.muli %77, %c2_i32_28 : i32
    %82 = arith.index_cast %81 : i32 to index
    %c128_29 = arith.constant 128 : index
    %83 = vector.load %arg6[%82, %c128_29] : memref<16x256xf32, #tpu.memory_space<vmem>>, vector<2x128xf32>
    %cst_30 = arith.constant dense<0.000000e+00> : vector<2x128xf32>
    %84 = tpu.matmul %45, %7, %cst_30 {dimension_numbers = #tpu.dot_dimension_numbers<[1], [0], [0], [1], [0, 0, 1, 1], [], []>} : vector<2x32xf32>, vector<32x128xf32>, vector<2x128xf32> -> vector<2x128xf32>
    %85 = arith.addf %80, %84 : vector<2x128xf32>
    %cst_31 = arith.constant dense<0.000000e+00> : vector<2x128xf32>
    %86 = tpu.matmul %70, %8, %cst_31 {dimension_numbers = #tpu.dot_dimension_numbers<[1], [0], [0], [1], [0, 0, 1, 1], [], []>} : vector<2x32xf32>, vector<32x128xf32>, vector<2x128xf32> -> vector<2x128xf32>
    %87 = arith.addf %83, %86 : vector<2x128xf32>
    %88 = vector.extract_strided_slice %85 {offsets = [0, 0], sizes = [2, 32], strides = [1, 1]} : vector<2x128xf32> to vector<2x32xf32>
    %89 = arith.negf %88 : vector<2x32xf32>
    %90 = math.exp %89 : vector<2x32xf32>
    %cst_32 = arith.constant 1.000000e+00 : f32
    %91 = vector.broadcast %cst_32 : f32 to vector<2x32xf32>
    %92 = arith.addf %91, %90 : vector<2x32xf32>
    %93 = arith.divf %91, %92 : vector<2x32xf32>
    %94 = vector.extract_strided_slice %85 {offsets = [0, 32], sizes = [2, 32], strides = [1, 1]} : vector<2x128xf32> to vector<2x32xf32>
    %95 = arith.negf %94 : vector<2x32xf32>
    %96 = math.exp %95 : vector<2x32xf32>
    %cst_33 = arith.constant 1.000000e+00 : f32
    %97 = vector.broadcast %cst_33 : f32 to vector<2x32xf32>
    %98 = arith.addf %97, %96 : vector<2x32xf32>
    %99 = arith.divf %97, %98 : vector<2x32xf32>
    %100 = vector.extract_strided_slice %85 {offsets = [0, 64], sizes = [2, 32], strides = [1, 1]} : vector<2x128xf32> to vector<2x32xf32>
    %101 = math.tanh %100 : vector<2x32xf32>
    %102 = vector.extract_strided_slice %85 {offsets = [0, 96], sizes = [2, 32], strides = [1, 1]} : vector<2x128xf32> to vector<2x32xf32>
    %103 = arith.negf %102 : vector<2x32xf32>
    %104 = math.exp %103 : vector<2x32xf32>
    %cst_34 = arith.constant 1.000000e+00 : f32
    %105 = vector.broadcast %cst_34 : f32 to vector<2x32xf32>
    %106 = arith.addf %105, %104 : vector<2x32xf32>
    %107 = arith.divf %105, %106 : vector<2x32xf32>
    %108 = arith.mulf %99, %43 : vector<2x32xf32>
    %109 = arith.mulf %93, %101 : vector<2x32xf32>
    %110 = arith.addf %108, %109 : vector<2x32xf32>
    %111 = math.tanh %110 : vector<2x32xf32>
    %112 = arith.mulf %107, %111 : vector<2x32xf32>
    %113 = vector.extract_strided_slice %87 {offsets = [0, 0], sizes = [2, 32], strides = [1, 1]} : vector<2x128xf32> to vector<2x32xf32>
    %114 = arith.negf %113 : vector<2x32xf32>
    %115 = math.exp %114 : vector<2x32xf32>
    %cst_35 = arith.constant 1.000000e+00 : f32
    %116 = vector.broadcast %cst_35 : f32 to vector<2x32xf32>
    %117 = arith.addf %116, %115 : vector<2x32xf32>
    %118 = arith.divf %116, %117 : vector<2x32xf32>
    %119 = vector.extract_strided_slice %87 {offsets = [0, 32], sizes = [2, 32], strides = [1, 1]} : vector<2x128xf32> to vector<2x32xf32>
    %120 = arith.negf %119 : vector<2x32xf32>
    %121 = math.exp %120 : vector<2x32xf32>
    %cst_36 = arith.constant 1.000000e+00 : f32
    %122 = vector.broadcast %cst_36 : f32 to vector<2x32xf32>
    %123 = arith.addf %122, %121 : vector<2x32xf32>
    %124 = arith.divf %122, %123 : vector<2x32xf32>
    %125 = vector.extract_strided_slice %87 {offsets = [0, 64], sizes = [2, 32], strides = [1, 1]} : vector<2x128xf32> to vector<2x32xf32>
    %126 = math.tanh %125 : vector<2x32xf32>
    %127 = vector.extract_strided_slice %87 {offsets = [0, 96], sizes = [2, 32], strides = [1, 1]} : vector<2x128xf32> to vector<2x32xf32>
    %128 = arith.negf %127 : vector<2x32xf32>
    %129 = math.exp %128 : vector<2x32xf32>
    %cst_37 = arith.constant 1.000000e+00 : f32
    %130 = vector.broadcast %cst_37 : f32 to vector<2x32xf32>
    %131 = arith.addf %130, %129 : vector<2x32xf32>
    %132 = arith.divf %130, %131 : vector<2x32xf32>
    %133 = arith.mulf %124, %68 : vector<2x32xf32>
    %134 = arith.mulf %118, %126 : vector<2x32xf32>
    %135 = arith.addf %133, %134 : vector<2x32xf32>
    %136 = math.tanh %135 : vector<2x32xf32>
    %137 = arith.mulf %132, %136 : vector<2x32xf32>
    %c2_i32_38 = arith.constant 2 : i32
    %138 = arith.muli %c1_i32, %c2_i32_38 : i32
    %139 = arith.index_cast %138 : i32 to index
    %c0_39 = arith.constant 0 : index
    %140 = vector.load %arg5[%139, %c0_39] : memref<16x64xf32, #tpu.memory_space<vmem>>, vector<2x32xf32>
    tpu.vector_store %arg5[%139, %c0_39], %112 {strides = array<i32>} : memref<16x64xf32, #tpu.memory_space<vmem>>, vector<2x32xf32>,
    %c2_i32_40 = arith.constant 2 : i32
    %141 = arith.muli %77, %c2_i32_40 : i32
    %142 = arith.index_cast %141 : i32 to index
    %c32_41 = arith.constant 32 : index
    %143 = vector.load %arg5[%142, %c32_41] : memref<16x64xf32, #tpu.memory_space<vmem>>, vector<2x32xf32>
    tpu.vector_store %arg5[%142, %c32_41], %137 {strides = array<i32>} : memref<16x64xf32, #tpu.memory_space<vmem>>, vector<2x32xf32>,
    %c2_i32_42 = arith.constant 2 : i32
    %c7_i32_43 = arith.constant 7 : i32
    %144 = arith.subi %c7_i32_43, %c2_i32_42 : i32
    %c2_i32_44 = arith.constant 2 : i32
    %145 = arith.muli %c2_i32_42, %c2_i32_44 : i32
    %146 = arith.index_cast %145 : i32 to index
    %c0_45 = arith.constant 0 : index
    %147 = vector.load %arg6[%146, %c0_45] : memref<16x256xf32, #tpu.memory_space<vmem>>, vector<2x128xf32>
    %c2_i32_46 = arith.constant 2 : i32
    %148 = arith.muli %144, %c2_i32_46 : i32
    %149 = arith.index_cast %148 : i32 to index
    %c128_47 = arith.constant 128 : index
    %150 = vector.load %arg6[%149, %c128_47] : memref<16x256xf32, #tpu.memory_space<vmem>>, vector<2x128xf32>
    %cst_48 = arith.constant dense<0.000000e+00> : vector<2x128xf32>
    %151 = tpu.matmul %112, %7, %cst_48 {dimension_numbers = #tpu.dot_dimension_numbers<[1], [0], [0], [1], [0, 0, 1, 1], [], []>} : vector<2x32xf32>, vector<32x128xf32>, vector<2x128xf32> -> vector<2x128xf32>
    %152 = arith.addf %147, %151 : vector<2x128xf32>
    %cst_49 = arith.constant dense<0.000000e+00> : vector<2x128xf32>
    %153 = tpu.matmul %137, %8, %cst_49 {dimension_numbers = #tpu.dot_dimension_numbers<[1], [0], [0], [1], [0, 0, 1, 1], [], []>} : vector<2x32xf32>, vector<32x128xf32>, vector<2x128xf32> -> vector<2x128xf32>
    %154 = arith.addf %150, %153 : vector<2x128xf32>
    %155 = vector.extract_strided_slice %152 {offsets = [0, 0], sizes = [2, 32], strides = [1, 1]} : vector<2x128xf32> to vector<2x32xf32>
    %156 = arith.negf %155 : vector<2x32xf32>
    %157 = math.exp %156 : vector<2x32xf32>
    %cst_50 = arith.constant 1.000000e+00 : f32
    %158 = vector.broadcast %cst_50 : f32 to vector<2x32xf32>
    %159 = arith.addf %158, %157 : vector<2x32xf32>
    %160 = arith.divf %158, %159 : vector<2x32xf32>
    %161 = vector.extract_strided_slice %152 {offsets = [0, 32], sizes = [2, 32], strides = [1, 1]} : vector<2x128xf32> to vector<2x32xf32>
    %162 = arith.negf %161 : vector<2x32xf32>
    %163 = math.exp %162 : vector<2x32xf32>
    %cst_51 = arith.constant 1.000000e+00 : f32
    %164 = vector.broadcast %cst_51 : f32 to vector<2x32xf32>
    %165 = arith.addf %164, %163 : vector<2x32xf32>
    %166 = arith.divf %164, %165 : vector<2x32xf32>
    %167 = vector.extract_strided_slice %152 {offsets = [0, 64], sizes = [2, 32], strides = [1, 1]} : vector<2x128xf32> to vector<2x32xf32>
    %168 = math.tanh %167 : vector<2x32xf32>
    %169 = vector.extract_strided_slice %152 {offsets = [0, 96], sizes = [2, 32], strides = [1, 1]} : vector<2x128xf32> to vector<2x32xf32>
    %170 = arith.negf %169 : vector<2x32xf32>
    %171 = math.exp %170 : vector<2x32xf32>
    %cst_52 = arith.constant 1.000000e+00 : f32
    %172 = vector.broadcast %cst_52 : f32 to vector<2x32xf32>
    %173 = arith.addf %172, %171 : vector<2x32xf32>
    %174 = arith.divf %172, %173 : vector<2x32xf32>
    %175 = arith.mulf %166, %110 : vector<2x32xf32>
    %176 = arith.mulf %160, %168 : vector<2x32xf32>
    %177 = arith.addf %175, %176 : vector<2x32xf32>
    %178 = math.tanh %177 : vector<2x32xf32>
    %179 = arith.mulf %174, %178 : vector<2x32xf32>
    %180 = vector.extract_strided_slice %154 {offsets = [0, 0], sizes = [2, 32], strides = [1, 1]} : vector<2x128xf32> to vector<2x32xf32>
    %181 = arith.negf %180 : vector<2x32xf32>
    %182 = math.exp %181 : vector<2x32xf32>
    %cst_53 = arith.constant 1.000000e+00 : f32
    %183 = vector.broadcast %cst_53 : f32 to vector<2x32xf32>
    %184 = arith.addf %183, %182 : vector<2x32xf32>
    %185 = arith.divf %183, %184 : vector<2x32xf32>
    %186 = vector.extract_strided_slice %154 {offsets = [0, 32], sizes = [2, 32], strides = [1, 1]} : vector<2x128xf32> to vector<2x32xf32>
    %187 = arith.negf %186 : vector<2x32xf32>
    %188 = math.exp %187 : vector<2x32xf32>
    %cst_54 = arith.constant 1.000000e+00 : f32
    %189 = vector.broadcast %cst_54 : f32 to vector<2x32xf32>
    %190 = arith.addf %189, %188 : vector<2x32xf32>
    %191 = arith.divf %189, %190 : vector<2x32xf32>
    %192 = vector.extract_strided_slice %154 {offsets = [0, 64], sizes = [2, 32], strides = [1, 1]} : vector<2x128xf32> to vector<2x32xf32>
    %193 = math.tanh %192 : vector<2x32xf32>
    %194 = vector.extract_strided_slice %154 {offsets = [0, 96], sizes = [2, 32], strides = [1, 1]} : vector<2x128xf32> to vector<2x32xf32>
    %195 = arith.negf %194 : vector<2x32xf32>
    %196 = math.exp %195 : vector<2x32xf32>
    %cst_55 = arith.constant 1.000000e+00 : f32
    %197 = vector.broadcast %cst_55 : f32 to vector<2x32xf32>
    %198 = arith.addf %197, %196 : vector<2x32xf32>
    %199 = arith.divf %197, %198 : vector<2x32xf32>
    %200 = arith.mulf %191, %135 : vector<2x32xf32>
    %201 = arith.mulf %185, %193 : vector<2x32xf32>
    %202 = arith.addf %200, %201 : vector<2x32xf32>
    %203 = math.tanh %202 : vector<2x32xf32>
    %204 = arith.mulf %199, %203 : vector<2x32xf32>
    %c2_i32_56 = arith.constant 2 : i32
    %205 = arith.muli %c2_i32_42, %c2_i32_56 : i32
    %206 = arith.index_cast %205 : i32 to index
    %c0_57 = arith.constant 0 : index
    %207 = vector.load %arg5[%206, %c0_57] : memref<16x64xf32, #tpu.memory_space<vmem>>, vector<2x32xf32>
    tpu.vector_store %arg5[%206, %c0_57], %179 {strides = array<i32>} : memref<16x64xf32, #tpu.memory_space<vmem>>, vector<2x32xf32>,
    %c2_i32_58 = arith.constant 2 : i32
    %208 = arith.muli %144, %c2_i32_58 : i32
    %209 = arith.index_cast %208 : i32 to index
    %c32_59 = arith.constant 32 : index
    %210 = vector.load %arg5[%209, %c32_59] : memref<16x64xf32, #tpu.memory_space<vmem>>, vector<2x32xf32>
    tpu.vector_store %arg5[%209, %c32_59], %204 {strides = array<i32>} : memref<16x64xf32, #tpu.memory_space<vmem>>, vector<2x32xf32>,
    %c3_i32 = arith.constant 3 : i32
    %c7_i32_60 = arith.constant 7 : i32
    %211 = arith.subi %c7_i32_60, %c3_i32 : i32
    %c2_i32_61 = arith.constant 2 : i32
    %212 = arith.muli %c3_i32, %c2_i32_61 : i32
    %213 = arith.index_cast %212 : i32 to index
    %c0_62 = arith.constant 0 : index
    %214 = vector.load %arg6[%213, %c0_62] : memref<16x256xf32, #tpu.memory_space<vmem>>, vector<2x128xf32>
    %c2_i32_63 = arith.constant 2 : i32
    %215 = arith.muli %211, %c2_i32_63 : i32
    %216 = arith.index_cast %215 : i32 to index
    %c128_64 = arith.constant 128 : index
    %217 = vector.load %arg6[%216, %c128_64] : memref<16x256xf32, #tpu.memory_space<vmem>>, vector<2x128xf32>
    %cst_65 = arith.constant dense<0.000000e+00> : vector<2x128xf32>
    %218 = tpu.matmul %179, %7, %cst_65 {dimension_numbers = #tpu.dot_dimension_numbers<[1], [0], [0], [1], [0, 0, 1, 1], [], []>} : vector<2x32xf32>, vector<32x128xf32>, vector<2x128xf32> -> vector<2x128xf32>
    %219 = arith.addf %214, %218 : vector<2x128xf32>
    %cst_66 = arith.constant dense<0.000000e+00> : vector<2x128xf32>
    %220 = tpu.matmul %204, %8, %cst_66 {dimension_numbers = #tpu.dot_dimension_numbers<[1], [0], [0], [1], [0, 0, 1, 1], [], []>} : vector<2x32xf32>, vector<32x128xf32>, vector<2x128xf32> -> vector<2x128xf32>
    %221 = arith.addf %217, %220 : vector<2x128xf32>
    %222 = vector.extract_strided_slice %219 {offsets = [0, 0], sizes = [2, 32], strides = [1, 1]} : vector<2x128xf32> to vector<2x32xf32>
    %223 = arith.negf %222 : vector<2x32xf32>
    %224 = math.exp %223 : vector<2x32xf32>
    %cst_67 = arith.constant 1.000000e+00 : f32
    %225 = vector.broadcast %cst_67 : f32 to vector<2x32xf32>
    %226 = arith.addf %225, %224 : vector<2x32xf32>
    %227 = arith.divf %225, %226 : vector<2x32xf32>
    %228 = vector.extract_strided_slice %219 {offsets = [0, 32], sizes = [2, 32], strides = [1, 1]} : vector<2x128xf32> to vector<2x32xf32>
    %229 = arith.negf %228 : vector<2x32xf32>
    %230 = math.exp %229 : vector<2x32xf32>
    %cst_68 = arith.constant 1.000000e+00 : f32
    %231 = vector.broadcast %cst_68 : f32 to vector<2x32xf32>
    %232 = arith.addf %231, %230 : vector<2x32xf32>
    %233 = arith.divf %231, %232 : vector<2x32xf32>
    %234 = vector.extract_strided_slice %219 {offsets = [0, 64], sizes = [2, 32], strides = [1, 1]} : vector<2x128xf32> to vector<2x32xf32>
    %235 = math.tanh %234 : vector<2x32xf32>
    %236 = vector.extract_strided_slice %219 {offsets = [0, 96], sizes = [2, 32], strides = [1, 1]} : vector<2x128xf32> to vector<2x32xf32>
    %237 = arith.negf %236 : vector<2x32xf32>
    %238 = math.exp %237 : vector<2x32xf32>
    %cst_69 = arith.constant 1.000000e+00 : f32
    %239 = vector.broadcast %cst_69 : f32 to vector<2x32xf32>
    %240 = arith.addf %239, %238 : vector<2x32xf32>
    %241 = arith.divf %239, %240 : vector<2x32xf32>
    %242 = arith.mulf %233, %177 : vector<2x32xf32>
    %243 = arith.mulf %227, %235 : vector<2x32xf32>
    %244 = arith.addf %242, %243 : vector<2x32xf32>
    %245 = math.tanh %244 : vector<2x32xf32>
    %246 = arith.mulf %241, %245 : vector<2x32xf32>
    %247 = vector.extract_strided_slice %221 {offsets = [0, 0], sizes = [2, 32], strides = [1, 1]} : vector<2x128xf32> to vector<2x32xf32>
    %248 = arith.negf %247 : vector<2x32xf32>
    %249 = math.exp %248 : vector<2x32xf32>
    %cst_70 = arith.constant 1.000000e+00 : f32
    %250 = vector.broadcast %cst_70 : f32 to vector<2x32xf32>
    %251 = arith.addf %250, %249 : vector<2x32xf32>
    %252 = arith.divf %250, %251 : vector<2x32xf32>
    %253 = vector.extract_strided_slice %221 {offsets = [0, 32], sizes = [2, 32], strides = [1, 1]} : vector<2x128xf32> to vector<2x32xf32>
    %254 = arith.negf %253 : vector<2x32xf32>
    %255 = math.exp %254 : vector<2x32xf32>
    %cst_71 = arith.constant 1.000000e+00 : f32
    %256 = vector.broadcast %cst_71 : f32 to vector<2x32xf32>
    %257 = arith.addf %256, %255 : vector<2x32xf32>
    %258 = arith.divf %256, %257 : vector<2x32xf32>
    %259 = vector.extract_strided_slice %221 {offsets = [0, 64], sizes = [2, 32], strides = [1, 1]} : vector<2x128xf32> to vector<2x32xf32>
    %260 = math.tanh %259 : vector<2x32xf32>
    %261 = vector.extract_strided_slice %221 {offsets = [0, 96], sizes = [2, 32], strides = [1, 1]} : vector<2x128xf32> to vector<2x32xf32>
    %262 = arith.negf %261 : vector<2x32xf32>
    %263 = math.exp %262 : vector<2x32xf32>
    %cst_72 = arith.constant 1.000000e+00 : f32
    %264 = vector.broadcast %cst_72 : f32 to vector<2x32xf32>
    %265 = arith.addf %264, %263 : vector<2x32xf32>
    %266 = arith.divf %264, %265 : vector<2x32xf32>
    %267 = arith.mulf %258, %202 : vector<2x32xf32>
    %268 = arith.mulf %252, %260 : vector<2x32xf32>
    %269 = arith.addf %267, %268 : vector<2x32xf32>
    %270 = math.tanh %269 : vector<2x32xf32>
    %271 = arith.mulf %266, %270 : vector<2x32xf32>
    %c2_i32_73 = arith.constant 2 : i32
    %272 = arith.muli %c3_i32, %c2_i32_73 : i32
    %273 = arith.index_cast %272 : i32 to index
    %c0_74 = arith.constant 0 : index
    %274 = vector.load %arg5[%273, %c0_74] : memref<16x64xf32, #tpu.memory_space<vmem>>, vector<2x32xf32>
    tpu.vector_store %arg5[%273, %c0_74], %246 {strides = array<i32>} : memref<16x64xf32, #tpu.memory_space<vmem>>, vector<2x32xf32>,
    %c2_i32_75 = arith.constant 2 : i32
    %275 = arith.muli %211, %c2_i32_75 : i32
    %276 = arith.index_cast %275 : i32 to index
    %c32_76 = arith.constant 32 : index
    %277 = vector.load %arg5[%276, %c32_76] : memref<16x64xf32, #tpu.memory_space<vmem>>, vector<2x32xf32>
    tpu.vector_store %arg5[%276, %c32_76], %271 {strides = array<i32>} : memref<16x64xf32, #tpu.memory_space<vmem>>, vector<2x32xf32>,
    %c4_i32 = arith.constant 4 : i32
    %c7_i32_77 = arith.constant 7 : i32
    %278 = arith.subi %c7_i32_77, %c4_i32 : i32
    %c2_i32_78 = arith.constant 2 : i32
    %279 = arith.muli %c4_i32, %c2_i32_78 : i32
    %280 = arith.index_cast %279 : i32 to index
    %c0_79 = arith.constant 0 : index
    %281 = vector.load %arg6[%280, %c0_79] : memref<16x256xf32, #tpu.memory_space<vmem>>, vector<2x128xf32>
    %c2_i32_80 = arith.constant 2 : i32
    %282 = arith.muli %278, %c2_i32_80 : i32
    %283 = arith.index_cast %282 : i32 to index
    %c128_81 = arith.constant 128 : index
    %284 = vector.load %arg6[%283, %c128_81] : memref<16x256xf32, #tpu.memory_space<vmem>>, vector<2x128xf32>
    %cst_82 = arith.constant dense<0.000000e+00> : vector<2x128xf32>
    %285 = tpu.matmul %246, %7, %cst_82 {dimension_numbers = #tpu.dot_dimension_numbers<[1], [0], [0], [1], [0, 0, 1, 1], [], []>} : vector<2x32xf32>, vector<32x128xf32>, vector<2x128xf32> -> vector<2x128xf32>
    %286 = arith.addf %281, %285 : vector<2x128xf32>
    %cst_83 = arith.constant dense<0.000000e+00> : vector<2x128xf32>
    %287 = tpu.matmul %271, %8, %cst_83 {dimension_numbers = #tpu.dot_dimension_numbers<[1], [0], [0], [1], [0, 0, 1, 1], [], []>} : vector<2x32xf32>, vector<32x128xf32>, vector<2x128xf32> -> vector<2x128xf32>
    %288 = arith.addf %284, %287 : vector<2x128xf32>
    %289 = vector.extract_strided_slice %286 {offsets = [0, 0], sizes = [2, 32], strides = [1, 1]} : vector<2x128xf32> to vector<2x32xf32>
    %290 = arith.negf %289 : vector<2x32xf32>
    %291 = math.exp %290 : vector<2x32xf32>
    %cst_84 = arith.constant 1.000000e+00 : f32
    %292 = vector.broadcast %cst_84 : f32 to vector<2x32xf32>
    %293 = arith.addf %292, %291 : vector<2x32xf32>
    %294 = arith.divf %292, %293 : vector<2x32xf32>
    %295 = vector.extract_strided_slice %286 {offsets = [0, 32], sizes = [2, 32], strides = [1, 1]} : vector<2x128xf32> to vector<2x32xf32>
    %296 = arith.negf %295 : vector<2x32xf32>
    %297 = math.exp %296 : vector<2x32xf32>
    %cst_85 = arith.constant 1.000000e+00 : f32
    %298 = vector.broadcast %cst_85 : f32 to vector<2x32xf32>
    %299 = arith.addf %298, %297 : vector<2x32xf32>
    %300 = arith.divf %298, %299 : vector<2x32xf32>
    %301 = vector.extract_strided_slice %286 {offsets = [0, 64], sizes = [2, 32], strides = [1, 1]} : vector<2x128xf32> to vector<2x32xf32>
    %302 = math.tanh %301 : vector<2x32xf32>
    %303 = vector.extract_strided_slice %286 {offsets = [0, 96], sizes = [2, 32], strides = [1, 1]} : vector<2x128xf32> to vector<2x32xf32>
    %304 = arith.negf %303 : vector<2x32xf32>
    %305 = math.exp %304 : vector<2x32xf32>
    %cst_86 = arith.constant 1.000000e+00 : f32
    %306 = vector.broadcast %cst_86 : f32 to vector<2x32xf32>
    %307 = arith.addf %306, %305 : vector<2x32xf32>
    %308 = arith.divf %306, %307 : vector<2x32xf32>
    %309 = arith.mulf %300, %244 : vector<2x32xf32>
    %310 = arith.mulf %294, %302 : vector<2x32xf32>
    %311 = arith.addf %309, %310 : vector<2x32xf32>
    %312 = math.tanh %311 : vector<2x32xf32>
    %313 = arith.mulf %308, %312 : vector<2x32xf32>
    %314 = vector.extract_strided_slice %288 {offsets = [0, 0], sizes = [2, 32], strides = [1, 1]} : vector<2x128xf32> to vector<2x32xf32>
    %315 = arith.negf %314 : vector<2x32xf32>
    %316 = math.exp %315 : vector<2x32xf32>
    %cst_87 = arith.constant 1.000000e+00 : f32
    %317 = vector.broadcast %cst_87 : f32 to vector<2x32xf32>
    %318 = arith.addf %317, %316 : vector<2x32xf32>
    %319 = arith.divf %317, %318 : vector<2x32xf32>
    %320 = vector.extract_strided_slice %288 {offsets = [0, 32], sizes = [2, 32], strides = [1, 1]} : vector<2x128xf32> to vector<2x32xf32>
    %321 = arith.negf %320 : vector<2x32xf32>
    %322 = math.exp %321 : vector<2x32xf32>
    %cst_88 = arith.constant 1.000000e+00 : f32
    %323 = vector.broadcast %cst_88 : f32 to vector<2x32xf32>
    %324 = arith.addf %323, %322 : vector<2x32xf32>
    %325 = arith.divf %323, %324 : vector<2x32xf32>
    %326 = vector.extract_strided_slice %288 {offsets = [0, 64], sizes = [2, 32], strides = [1, 1]} : vector<2x128xf32> to vector<2x32xf32>
    %327 = math.tanh %326 : vector<2x32xf32>
    %328 = vector.extract_strided_slice %288 {offsets = [0, 96], sizes = [2, 32], strides = [1, 1]} : vector<2x128xf32> to vector<2x32xf32>
    %329 = arith.negf %328 : vector<2x32xf32>
    %330 = math.exp %329 : vector<2x32xf32>
    %cst_89 = arith.constant 1.000000e+00 : f32
    %331 = vector.broadcast %cst_89 : f32 to vector<2x32xf32>
    %332 = arith.addf %331, %330 : vector<2x32xf32>
    %333 = arith.divf %331, %332 : vector<2x32xf32>
    %334 = arith.mulf %325, %269 : vector<2x32xf32>
    %335 = arith.mulf %319, %327 : vector<2x32xf32>
    %336 = arith.addf %334, %335 : vector<2x32xf32>
    %337 = math.tanh %336 : vector<2x32xf32>
    %338 = arith.mulf %333, %337 : vector<2x32xf32>
    %c2_i32_90 = arith.constant 2 : i32
    %339 = arith.muli %c4_i32, %c2_i32_90 : i32
    %340 = arith.index_cast %339 : i32 to index
    %c0_91 = arith.constant 0 : index
    %341 = vector.load %arg5[%340, %c0_91] : memref<16x64xf32, #tpu.memory_space<vmem>>, vector<2x32xf32>
    tpu.vector_store %arg5[%340, %c0_91], %313 {strides = array<i32>} : memref<16x64xf32, #tpu.memory_space<vmem>>, vector<2x32xf32>,
    %c2_i32_92 = arith.constant 2 : i32
    %342 = arith.muli %278, %c2_i32_92 : i32
    %343 = arith.index_cast %342 : i32 to index
    %c32_93 = arith.constant 32 : index
    %344 = vector.load %arg5[%343, %c32_93] : memref<16x64xf32, #tpu.memory_space<vmem>>, vector<2x32xf32>
    tpu.vector_store %arg5[%343, %c32_93], %338 {strides = array<i32>} : memref<16x64xf32, #tpu.memory_space<vmem>>, vector<2x32xf32>,
    %c5_i32 = arith.constant 5 : i32
    %c7_i32_94 = arith.constant 7 : i32
    %345 = arith.subi %c7_i32_94, %c5_i32 : i32
    %c2_i32_95 = arith.constant 2 : i32
    %346 = arith.muli %c5_i32, %c2_i32_95 : i32
    %347 = arith.index_cast %346 : i32 to index
    %c0_96 = arith.constant 0 : index
    %348 = vector.load %arg6[%347, %c0_96] : memref<16x256xf32, #tpu.memory_space<vmem>>, vector<2x128xf32>
    %c2_i32_97 = arith.constant 2 : i32
    %349 = arith.muli %345, %c2_i32_97 : i32
    %350 = arith.index_cast %349 : i32 to index
    %c128_98 = arith.constant 128 : index
    %351 = vector.load %arg6[%350, %c128_98] : memref<16x256xf32, #tpu.memory_space<vmem>>, vector<2x128xf32>
    %cst_99 = arith.constant dense<0.000000e+00> : vector<2x128xf32>
    %352 = tpu.matmul %313, %7, %cst_99 {dimension_numbers = #tpu.dot_dimension_numbers<[1], [0], [0], [1], [0, 0, 1, 1], [], []>} : vector<2x32xf32>, vector<32x128xf32>, vector<2x128xf32> -> vector<2x128xf32>
    %353 = arith.addf %348, %352 : vector<2x128xf32>
    %cst_100 = arith.constant dense<0.000000e+00> : vector<2x128xf32>
    %354 = tpu.matmul %338, %8, %cst_100 {dimension_numbers = #tpu.dot_dimension_numbers<[1], [0], [0], [1], [0, 0, 1, 1], [], []>} : vector<2x32xf32>, vector<32x128xf32>, vector<2x128xf32> -> vector<2x128xf32>
    %355 = arith.addf %351, %354 : vector<2x128xf32>
    %356 = vector.extract_strided_slice %353 {offsets = [0, 0], sizes = [2, 32], strides = [1, 1]} : vector<2x128xf32> to vector<2x32xf32>
    %357 = arith.negf %356 : vector<2x32xf32>
    %358 = math.exp %357 : vector<2x32xf32>
    %cst_101 = arith.constant 1.000000e+00 : f32
    %359 = vector.broadcast %cst_101 : f32 to vector<2x32xf32>
    %360 = arith.addf %359, %358 : vector<2x32xf32>
    %361 = arith.divf %359, %360 : vector<2x32xf32>
    %362 = vector.extract_strided_slice %353 {offsets = [0, 32], sizes = [2, 32], strides = [1, 1]} : vector<2x128xf32> to vector<2x32xf32>
    %363 = arith.negf %362 : vector<2x32xf32>
    %364 = math.exp %363 : vector<2x32xf32>
    %cst_102 = arith.constant 1.000000e+00 : f32
    %365 = vector.broadcast %cst_102 : f32 to vector<2x32xf32>
    %366 = arith.addf %365, %364 : vector<2x32xf32>
    %367 = arith.divf %365, %366 : vector<2x32xf32>
    %368 = vector.extract_strided_slice %353 {offsets = [0, 64], sizes = [2, 32], strides = [1, 1]} : vector<2x128xf32> to vector<2x32xf32>
    %369 = math.tanh %368 : vector<2x32xf32>
    %370 = vector.extract_strided_slice %353 {offsets = [0, 96], sizes = [2, 32], strides = [1, 1]} : vector<2x128xf32> to vector<2x32xf32>
    %371 = arith.negf %370 : vector<2x32xf32>
    %372 = math.exp %371 : vector<2x32xf32>
    %cst_103 = arith.constant 1.000000e+00 : f32
    %373 = vector.broadcast %cst_103 : f32 to vector<2x32xf32>
    %374 = arith.addf %373, %372 : vector<2x32xf32>
    %375 = arith.divf %373, %374 : vector<2x32xf32>
    %376 = arith.mulf %367, %311 : vector<2x32xf32>
    %377 = arith.mulf %361, %369 : vector<2x32xf32>
    %378 = arith.addf %376, %377 : vector<2x32xf32>
    %379 = math.tanh %378 : vector<2x32xf32>
    %380 = arith.mulf %375, %379 : vector<2x32xf32>
    %381 = vector.extract_strided_slice %355 {offsets = [0, 0], sizes = [2, 32], strides = [1, 1]} : vector<2x128xf32> to vector<2x32xf32>
    %382 = arith.negf %381 : vector<2x32xf32>
    %383 = math.exp %382 : vector<2x32xf32>
    %cst_104 = arith.constant 1.000000e+00 : f32
    %384 = vector.broadcast %cst_104 : f32 to vector<2x32xf32>
    %385 = arith.addf %384, %383 : vector<2x32xf32>
    %386 = arith.divf %384, %385 : vector<2x32xf32>
    %387 = vector.extract_strided_slice %355 {offsets = [0, 32], sizes = [2, 32], strides = [1, 1]} : vector<2x128xf32> to vector<2x32xf32>
    %388 = arith.negf %387 : vector<2x32xf32>
    %389 = math.exp %388 : vector<2x32xf32>
    %cst_105 = arith.constant 1.000000e+00 : f32
    %390 = vector.broadcast %cst_105 : f32 to vector<2x32xf32>
    %391 = arith.addf %390, %389 : vector<2x32xf32>
    %392 = arith.divf %390, %391 : vector<2x32xf32>
    %393 = vector.extract_strided_slice %355 {offsets = [0, 64], sizes = [2, 32], strides = [1, 1]} : vector<2x128xf32> to vector<2x32xf32>
    %394 = math.tanh %393 : vector<2x32xf32>
    %395 = vector.extract_strided_slice %355 {offsets = [0, 96], sizes = [2, 32], strides = [1, 1]} : vector<2x128xf32> to vector<2x32xf32>
    %396 = arith.negf %395 : vector<2x32xf32>
    %397 = math.exp %396 : vector<2x32xf32>
    %cst_106 = arith.constant 1.000000e+00 : f32
    %398 = vector.broadcast %cst_106 : f32 to vector<2x32xf32>
    %399 = arith.addf %398, %397 : vector<2x32xf32>
    %400 = arith.divf %398, %399 : vector<2x32xf32>
    %401 = arith.mulf %392, %336 : vector<2x32xf32>
    %402 = arith.mulf %386, %394 : vector<2x32xf32>
    %403 = arith.addf %401, %402 : vector<2x32xf32>
    %404 = math.tanh %403 : vector<2x32xf32>
    %405 = arith.mulf %400, %404 : vector<2x32xf32>
    %c2_i32_107 = arith.constant 2 : i32
    %406 = arith.muli %c5_i32, %c2_i32_107 : i32
    %407 = arith.index_cast %406 : i32 to index
    %c0_108 = arith.constant 0 : index
    %408 = vector.load %arg5[%407, %c0_108] : memref<16x64xf32, #tpu.memory_space<vmem>>, vector<2x32xf32>
    tpu.vector_store %arg5[%407, %c0_108], %380 {strides = array<i32>} : memref<16x64xf32, #tpu.memory_space<vmem>>, vector<2x32xf32>,
    %c2_i32_109 = arith.constant 2 : i32
    %409 = arith.muli %345, %c2_i32_109 : i32
    %410 = arith.index_cast %409 : i32 to index
    %c32_110 = arith.constant 32 : index
    %411 = vector.load %arg5[%410, %c32_110] : memref<16x64xf32, #tpu.memory_space<vmem>>, vector<2x32xf32>
    tpu.vector_store %arg5[%410, %c32_110], %405 {strides = array<i32>} : memref<16x64xf32, #tpu.memory_space<vmem>>, vector<2x32xf32>,
    %c6_i32 = arith.constant 6 : i32
    %c7_i32_111 = arith.constant 7 : i32
    %412 = arith.subi %c7_i32_111, %c6_i32 : i32
    %c2_i32_112 = arith.constant 2 : i32
    %413 = arith.muli %c6_i32, %c2_i32_112 : i32
    %414 = arith.index_cast %413 : i32 to index
    %c0_113 = arith.constant 0 : index
    %415 = vector.load %arg6[%414, %c0_113] : memref<16x256xf32, #tpu.memory_space<vmem>>, vector<2x128xf32>
    %c2_i32_114 = arith.constant 2 : i32
    %416 = arith.muli %412, %c2_i32_114 : i32
    %417 = arith.index_cast %416 : i32 to index
    %c128_115 = arith.constant 128 : index
    %418 = vector.load %arg6[%417, %c128_115] : memref<16x256xf32, #tpu.memory_space<vmem>>, vector<2x128xf32>
    %cst_116 = arith.constant dense<0.000000e+00> : vector<2x128xf32>
    %419 = tpu.matmul %380, %7, %cst_116 {dimension_numbers = #tpu.dot_dimension_numbers<[1], [0], [0], [1], [0, 0, 1, 1], [], []>} : vector<2x32xf32>, vector<32x128xf32>, vector<2x128xf32> -> vector<2x128xf32>
    %420 = arith.addf %415, %419 : vector<2x128xf32>
    %cst_117 = arith.constant dense<0.000000e+00> : vector<2x128xf32>
    %421 = tpu.matmul %405, %8, %cst_117 {dimension_numbers = #tpu.dot_dimension_numbers<[1], [0], [0], [1], [0, 0, 1, 1], [], []>} : vector<2x32xf32>, vector<32x128xf32>, vector<2x128xf32> -> vector<2x128xf32>
    %422 = arith.addf %418, %421 : vector<2x128xf32>
    %423 = vector.extract_strided_slice %420 {offsets = [0, 0], sizes = [2, 32], strides = [1, 1]} : vector<2x128xf32> to vector<2x32xf32>
    %424 = arith.negf %423 : vector<2x32xf32>
    %425 = math.exp %424 : vector<2x32xf32>
    %cst_118 = arith.constant 1.000000e+00 : f32
    %426 = vector.broadcast %cst_118 : f32 to vector<2x32xf32>
    %427 = arith.addf %426, %425 : vector<2x32xf32>
    %428 = arith.divf %426, %427 : vector<2x32xf32>
    %429 = vector.extract_strided_slice %420 {offsets = [0, 32], sizes = [2, 32], strides = [1, 1]} : vector<2x128xf32> to vector<2x32xf32>
    %430 = arith.negf %429 : vector<2x32xf32>
    %431 = math.exp %430 : vector<2x32xf32>
    %cst_119 = arith.constant 1.000000e+00 : f32
    %432 = vector.broadcast %cst_119 : f32 to vector<2x32xf32>
    %433 = arith.addf %432, %431 : vector<2x32xf32>
    %434 = arith.divf %432, %433 : vector<2x32xf32>
    %435 = vector.extract_strided_slice %420 {offsets = [0, 64], sizes = [2, 32], strides = [1, 1]} : vector<2x128xf32> to vector<2x32xf32>
    %436 = math.tanh %435 : vector<2x32xf32>
    %437 = vector.extract_strided_slice %420 {offsets = [0, 96], sizes = [2, 32], strides = [1, 1]} : vector<2x128xf32> to vector<2x32xf32>
    %438 = arith.negf %437 : vector<2x32xf32>
    %439 = math.exp %438 : vector<2x32xf32>
    %cst_120 = arith.constant 1.000000e+00 : f32
    %440 = vector.broadcast %cst_120 : f32 to vector<2x32xf32>
    %441 = arith.addf %440, %439 : vector<2x32xf32>
    %442 = arith.divf %440, %441 : vector<2x32xf32>
    %443 = arith.mulf %434, %378 : vector<2x32xf32>
    %444 = arith.mulf %428, %436 : vector<2x32xf32>
    %445 = arith.addf %443, %444 : vector<2x32xf32>
    %446 = math.tanh %445 : vector<2x32xf32>
    %447 = arith.mulf %442, %446 : vector<2x32xf32>
    %448 = vector.extract_strided_slice %422 {offsets = [0, 0], sizes = [2, 32], strides = [1, 1]} : vector<2x128xf32> to vector<2x32xf32>
    %449 = arith.negf %448 : vector<2x32xf32>
    %450 = math.exp %449 : vector<2x32xf32>
    %cst_121 = arith.constant 1.000000e+00 : f32
    %451 = vector.broadcast %cst_121 : f32 to vector<2x32xf32>
    %452 = arith.addf %451, %450 : vector<2x32xf32>
    %453 = arith.divf %451, %452 : vector<2x32xf32>
    %454 = vector.extract_strided_slice %422 {offsets = [0, 32], sizes = [2, 32], strides = [1, 1]} : vector<2x128xf32> to vector<2x32xf32>
    %455 = arith.negf %454 : vector<2x32xf32>
    %456 = math.exp %455 : vector<2x32xf32>
    %cst_122 = arith.constant 1.000000e+00 : f32
    %457 = vector.broadcast %cst_122 : f32 to vector<2x32xf32>
    %458 = arith.addf %457, %456 : vector<2x32xf32>
    %459 = arith.divf %457, %458 : vector<2x32xf32>
    %460 = vector.extract_strided_slice %422 {offsets = [0, 64], sizes = [2, 32], strides = [1, 1]} : vector<2x128xf32> to vector<2x32xf32>
    %461 = math.tanh %460 : vector<2x32xf32>
    %462 = vector.extract_strided_slice %422 {offsets = [0, 96], sizes = [2, 32], strides = [1, 1]} : vector<2x128xf32> to vector<2x32xf32>
    %463 = arith.negf %462 : vector<2x32xf32>
    %464 = math.exp %463 : vector<2x32xf32>
    %cst_123 = arith.constant 1.000000e+00 : f32
    %465 = vector.broadcast %cst_123 : f32 to vector<2x32xf32>
    %466 = arith.addf %465, %464 : vector<2x32xf32>
    %467 = arith.divf %465, %466 : vector<2x32xf32>
    %468 = arith.mulf %459, %403 : vector<2x32xf32>
    %469 = arith.mulf %453, %461 : vector<2x32xf32>
    %470 = arith.addf %468, %469 : vector<2x32xf32>
    %471 = math.tanh %470 : vector<2x32xf32>
    %472 = arith.mulf %467, %471 : vector<2x32xf32>
    %c2_i32_124 = arith.constant 2 : i32
    %473 = arith.muli %c6_i32, %c2_i32_124 : i32
    %474 = arith.index_cast %473 : i32 to index
    %c0_125 = arith.constant 0 : index
    %475 = vector.load %arg5[%474, %c0_125] : memref<16x64xf32, #tpu.memory_space<vmem>>, vector<2x32xf32>
    tpu.vector_store %arg5[%474, %c0_125], %447 {strides = array<i32>} : memref<16x64xf32, #tpu.memory_space<vmem>>, vector<2x32xf32>,
    %c2_i32_126 = arith.constant 2 : i32
    %476 = arith.muli %412, %c2_i32_126 : i32
    %477 = arith.index_cast %476 : i32 to index
    %c32_127 = arith.constant 32 : index
    %478 = vector.load %arg5[%477, %c32_127] : memref<16x64xf32, #tpu.memory_space<vmem>>, vector<2x32xf32>
    tpu.vector_store %arg5[%477, %c32_127], %472 {strides = array<i32>} : memref<16x64xf32, #tpu.memory_space<vmem>>, vector<2x32xf32>,
    %c7_i32_128 = arith.constant 7 : i32
    %c7_i32_129 = arith.constant 7 : i32
    %479 = arith.subi %c7_i32_129, %c7_i32_128 : i32
    %c2_i32_130 = arith.constant 2 : i32
    %480 = arith.muli %c7_i32_128, %c2_i32_130 : i32
    %481 = arith.index_cast %480 : i32 to index
    %c0_131 = arith.constant 0 : index
    %482 = vector.load %arg6[%481, %c0_131] : memref<16x256xf32, #tpu.memory_space<vmem>>, vector<2x128xf32>
    %c2_i32_132 = arith.constant 2 : i32
    %483 = arith.muli %479, %c2_i32_132 : i32
    %484 = arith.index_cast %483 : i32 to index
    %c128_133 = arith.constant 128 : index
    %485 = vector.load %arg6[%484, %c128_133] : memref<16x256xf32, #tpu.memory_space<vmem>>, vector<2x128xf32>
    %cst_134 = arith.constant dense<0.000000e+00> : vector<2x128xf32>
    %486 = tpu.matmul %447, %7, %cst_134 {dimension_numbers = #tpu.dot_dimension_numbers<[1], [0], [0], [1], [0, 0, 1, 1], [], []>} : vector<2x32xf32>, vector<32x128xf32>, vector<2x128xf32> -> vector<2x128xf32>
    %487 = arith.addf %482, %486 : vector<2x128xf32>
    %cst_135 = arith.constant dense<0.000000e+00> : vector<2x128xf32>
    %488 = tpu.matmul %472, %8, %cst_135 {dimension_numbers = #tpu.dot_dimension_numbers<[1], [0], [0], [1], [0, 0, 1, 1], [], []>} : vector<2x32xf32>, vector<32x128xf32>, vector<2x128xf32> -> vector<2x128xf32>
    %489 = arith.addf %485, %488 : vector<2x128xf32>
    %490 = vector.extract_strided_slice %487 {offsets = [0, 0], sizes = [2, 32], strides = [1, 1]} : vector<2x128xf32> to vector<2x32xf32>
    %491 = arith.negf %490 : vector<2x32xf32>
    %492 = math.exp %491 : vector<2x32xf32>
    %cst_136 = arith.constant 1.000000e+00 : f32
    %493 = vector.broadcast %cst_136 : f32 to vector<2x32xf32>
    %494 = arith.addf %493, %492 : vector<2x32xf32>
    %495 = arith.divf %493, %494 : vector<2x32xf32>
    %496 = vector.extract_strided_slice %487 {offsets = [0, 32], sizes = [2, 32], strides = [1, 1]} : vector<2x128xf32> to vector<2x32xf32>
    %497 = arith.negf %496 : vector<2x32xf32>
    %498 = math.exp %497 : vector<2x32xf32>
    %cst_137 = arith.constant 1.000000e+00 : f32
    %499 = vector.broadcast %cst_137 : f32 to vector<2x32xf32>
    %500 = arith.addf %499, %498 : vector<2x32xf32>
    %501 = arith.divf %499, %500 : vector<2x32xf32>
    %502 = vector.extract_strided_slice %487 {offsets = [0, 64], sizes = [2, 32], strides = [1, 1]} : vector<2x128xf32> to vector<2x32xf32>
    %503 = math.tanh %502 : vector<2x32xf32>
    %504 = vector.extract_strided_slice %487 {offsets = [0, 96], sizes = [2, 32], strides = [1, 1]} : vector<2x128xf32> to vector<2x32xf32>
    %505 = arith.negf %504 : vector<2x32xf32>
    %506 = math.exp %505 : vector<2x32xf32>
    %cst_138 = arith.constant 1.000000e+00 : f32
    %507 = vector.broadcast %cst_138 : f32 to vector<2x32xf32>
    %508 = arith.addf %507, %506 : vector<2x32xf32>
    %509 = arith.divf %507, %508 : vector<2x32xf32>
    %510 = arith.mulf %501, %445 : vector<2x32xf32>
    %511 = arith.mulf %495, %503 : vector<2x32xf32>
    %512 = arith.addf %510, %511 : vector<2x32xf32>
    %513 = math.tanh %512 : vector<2x32xf32>
    %514 = arith.mulf %509, %513 : vector<2x32xf32>
    %515 = vector.extract_strided_slice %489 {offsets = [0, 0], sizes = [2, 32], strides = [1, 1]} : vector<2x128xf32> to vector<2x32xf32>
    %516 = arith.negf %515 : vector<2x32xf32>
    %517 = math.exp %516 : vector<2x32xf32>
    %cst_139 = arith.constant 1.000000e+00 : f32
    %518 = vector.broadcast %cst_139 : f32 to vector<2x32xf32>
    %519 = arith.addf %518, %517 : vector<2x32xf32>
    %520 = arith.divf %518, %519 : vector<2x32xf32>
    %521 = vector.extract_strided_slice %489 {offsets = [0, 32], sizes = [2, 32], strides = [1, 1]} : vector<2x128xf32> to vector<2x32xf32>
    %522 = arith.negf %521 : vector<2x32xf32>
    %523 = math.exp %522 : vector<2x32xf32>
    %cst_140 = arith.constant 1.000000e+00 : f32
    %524 = vector.broadcast %cst_140 : f32 to vector<2x32xf32>
    %525 = arith.addf %524, %523 : vector<2x32xf32>
    %526 = arith.divf %524, %525 : vector<2x32xf32>
    %527 = vector.extract_strided_slice %489 {offsets = [0, 64], sizes = [2, 32], strides = [1, 1]} : vector<2x128xf32> to vector<2x32xf32>
    %528 = math.tanh %527 : vector<2x32xf32>
    %529 = vector.extract_strided_slice %489 {offsets = [0, 96], sizes = [2, 32], strides = [1, 1]} : vector<2x128xf32> to vector<2x32xf32>
    %530 = arith.negf %529 : vector<2x32xf32>
    %531 = math.exp %530 : vector<2x32xf32>
    %cst_141 = arith.constant 1.000000e+00 : f32
    %532 = vector.broadcast %cst_141 : f32 to vector<2x32xf32>
    %533 = arith.addf %532, %531 : vector<2x32xf32>
    %534 = arith.divf %532, %533 : vector<2x32xf32>
    %535 = arith.mulf %526, %470 : vector<2x32xf32>
    %536 = arith.mulf %520, %528 : vector<2x32xf32>
    %537 = arith.addf %535, %536 : vector<2x32xf32>
    %538 = math.tanh %537 : vector<2x32xf32>
    %539 = arith.mulf %534, %538 : vector<2x32xf32>
    %c2_i32_142 = arith.constant 2 : i32
    %540 = arith.muli %c7_i32_128, %c2_i32_142 : i32
    %541 = arith.index_cast %540 : i32 to index
    %c0_143 = arith.constant 0 : index
    %542 = vector.load %arg5[%541, %c0_143] : memref<16x64xf32, #tpu.memory_space<vmem>>, vector<2x32xf32>
    tpu.vector_store %arg5[%541, %c0_143], %514 {strides = array<i32>} : memref<16x64xf32, #tpu.memory_space<vmem>>, vector<2x32xf32>,
    %c2_i32_144 = arith.constant 2 : i32
    %543 = arith.muli %479, %c2_i32_144 : i32
    %544 = arith.index_cast %543 : i32 to index
    %c32_145 = arith.constant 32 : index
    %545 = vector.load %arg5[%544, %c32_145] : memref<16x64xf32, #tpu.memory_space<vmem>>, vector<2x32xf32>
    tpu.vector_store %arg5[%544, %c32_145], %539 {strides = array<i32>} : memref<16x64xf32, #tpu.memory_space<vmem>>, vector<2x32xf32>,
    %c8_i32 = arith.constant 8 : i32
    return
  }
}

module attributes {stable_mosaic.version = 11 : i64} {
  func.func @_bilstm_layer_fc_kernel(%arg0: memref<16x64xf32, #tpu.memory_space<vmem>>, %arg1: memref<64x256xf32, #tpu.memory_space<vmem>>, %arg2: memref<32x128xf32, #tpu.memory_space<vmem>>, %arg3: memref<32x128xf32, #tpu.memory_space<vmem>>, %arg4: memref<1x256xf32, #tpu.memory_space<vmem>>, %arg5: memref<64x8xf32, #tpu.memory_space<vmem>>, %arg6: memref<1x8xf32, #tpu.memory_space<vmem>>, %arg7: memref<16x8xf32, #tpu.memory_space<vmem>>, %arg8: memref<16x64xf32, #tpu.memory_space<vmem>>, %arg9: memref<16x256xf32, #tpu.memory_space<vmem>>) attributes {dimension_semantics = [], scalar_prefetch = 0 : i64, scratch_operands = 2 : i64, tpu.core_type = #tpu.core_type<tc>} {
    %c0 = arith.constant 0 : index
    %c0_0 = arith.constant 0 : index
    %0 = vector.load %arg0[%c0, %c0_0] : memref<16x64xf32, #tpu.memory_space<vmem>>, vector<16x64xf32>
    %c0_1 = arith.constant 0 : index
    %c0_2 = arith.constant 0 : index
    %1 = vector.load %arg1[%c0_1, %c0_2] : memref<64x256xf32, #tpu.memory_space<vmem>>, vector<64x256xf32>
    %cst = arith.constant dense<0.000000e+00> : vector<16x256xf32>
    %2 = tpu.matmul %0, %1, %cst {dimension_numbers = #tpu.dot_dimension_numbers<[1], [0], [0], [1], [0, 0, 1, 1], [], []>} : vector<16x64xf32>, vector<64x256xf32>, vector<16x256xf32> -> vector<16x256xf32>
    %c0_3 = arith.constant 0 : index
    %c0_4 = arith.constant 0 : index
    %3 = vector.load %arg4[%c0_3, %c0_4] : memref<1x256xf32, #tpu.memory_space<vmem>>, vector<1x256xf32>
    %4 = vector.broadcast %3 : vector<1x256xf32> to vector<16x256xf32>
    %5 = arith.addf %2, %4 : vector<16x256xf32>
    %c0_5 = arith.constant 0 : index
    %c0_6 = arith.constant 0 : index
    %6 = vector.load %arg9[%c0_5, %c0_6] : memref<16x256xf32, #tpu.memory_space<vmem>>, vector<16x256xf32>
    tpu.vector_store %arg9[%c0_5, %c0_6], %5 {strides = array<i32>} : memref<16x256xf32, #tpu.memory_space<vmem>>, vector<16x256xf32>,
    %c0_7 = arith.constant 0 : index
    %c0_8 = arith.constant 0 : index
    %7 = vector.load %arg2[%c0_7, %c0_8] : memref<32x128xf32, #tpu.memory_space<vmem>>, vector<32x128xf32>
    %c0_9 = arith.constant 0 : index
    %c0_10 = arith.constant 0 : index
    %8 = vector.load %arg3[%c0_9, %c0_10] : memref<32x128xf32, #tpu.memory_space<vmem>>, vector<32x128xf32>
    %cst_11 = arith.constant 0.000000e+00 : f32
    %9 = vector.broadcast %cst_11 : f32 to vector<2x32xf32>
    %c0_i32 = arith.constant 0 : i32
    %c7_i32 = arith.constant 7 : i32
    %10 = arith.subi %c7_i32, %c0_i32 : i32
    %c2_i32 = arith.constant 2 : i32
    %11 = arith.muli %c0_i32, %c2_i32 : i32
    %12 = arith.index_cast %11 : i32 to index
    %c0_12 = arith.constant 0 : index
    %13 = vector.load %arg9[%12, %c0_12] : memref<16x256xf32, #tpu.memory_space<vmem>>, vector<2x128xf32>
    %c2_i32_13 = arith.constant 2 : i32
    %14 = arith.muli %10, %c2_i32_13 : i32
    %15 = arith.index_cast %14 : i32 to index
    %c128 = arith.constant 128 : index
    %16 = vector.load %arg9[%15, %c128] : memref<16x256xf32, #tpu.memory_space<vmem>>, vector<2x128xf32>
    %cst_14 = arith.constant dense<0.000000e+00> : vector<2x128xf32>
    %17 = tpu.matmul %9, %7, %cst_14 {dimension_numbers = #tpu.dot_dimension_numbers<[1], [0], [0], [1], [0, 0, 1, 1], [], []>} : vector<2x32xf32>, vector<32x128xf32>, vector<2x128xf32> -> vector<2x128xf32>
    %18 = arith.addf %13, %17 : vector<2x128xf32>
    %cst_15 = arith.constant dense<0.000000e+00> : vector<2x128xf32>
    %19 = tpu.matmul %9, %8, %cst_15 {dimension_numbers = #tpu.dot_dimension_numbers<[1], [0], [0], [1], [0, 0, 1, 1], [], []>} : vector<2x32xf32>, vector<32x128xf32>, vector<2x128xf32> -> vector<2x128xf32>
    %20 = arith.addf %16, %19 : vector<2x128xf32>
    %21 = vector.extract_strided_slice %18 {offsets = [0, 0], sizes = [2, 32], strides = [1, 1]} : vector<2x128xf32> to vector<2x32xf32>
    %22 = arith.negf %21 : vector<2x32xf32>
    %23 = math.exp %22 : vector<2x32xf32>
    %cst_16 = arith.constant 1.000000e+00 : f32
    %24 = vector.broadcast %cst_16 : f32 to vector<2x32xf32>
    %25 = arith.addf %24, %23 : vector<2x32xf32>
    %26 = arith.divf %24, %25 : vector<2x32xf32>
    %27 = vector.extract_strided_slice %18 {offsets = [0, 32], sizes = [2, 32], strides = [1, 1]} : vector<2x128xf32> to vector<2x32xf32>
    %28 = arith.negf %27 : vector<2x32xf32>
    %29 = math.exp %28 : vector<2x32xf32>
    %cst_17 = arith.constant 1.000000e+00 : f32
    %30 = vector.broadcast %cst_17 : f32 to vector<2x32xf32>
    %31 = arith.addf %30, %29 : vector<2x32xf32>
    %32 = arith.divf %30, %31 : vector<2x32xf32>
    %33 = vector.extract_strided_slice %18 {offsets = [0, 64], sizes = [2, 32], strides = [1, 1]} : vector<2x128xf32> to vector<2x32xf32>
    %34 = math.tanh %33 : vector<2x32xf32>
    %35 = vector.extract_strided_slice %18 {offsets = [0, 96], sizes = [2, 32], strides = [1, 1]} : vector<2x128xf32> to vector<2x32xf32>
    %36 = arith.negf %35 : vector<2x32xf32>
    %37 = math.exp %36 : vector<2x32xf32>
    %cst_18 = arith.constant 1.000000e+00 : f32
    %38 = vector.broadcast %cst_18 : f32 to vector<2x32xf32>
    %39 = arith.addf %38, %37 : vector<2x32xf32>
    %40 = arith.divf %38, %39 : vector<2x32xf32>
    %41 = arith.mulf %32, %9 : vector<2x32xf32>
    %42 = arith.mulf %26, %34 : vector<2x32xf32>
    %43 = arith.addf %41, %42 : vector<2x32xf32>
    %44 = math.tanh %43 : vector<2x32xf32>
    %45 = arith.mulf %40, %44 : vector<2x32xf32>
    %46 = vector.extract_strided_slice %20 {offsets = [0, 0], sizes = [2, 32], strides = [1, 1]} : vector<2x128xf32> to vector<2x32xf32>
    %47 = arith.negf %46 : vector<2x32xf32>
    %48 = math.exp %47 : vector<2x32xf32>
    %cst_19 = arith.constant 1.000000e+00 : f32
    %49 = vector.broadcast %cst_19 : f32 to vector<2x32xf32>
    %50 = arith.addf %49, %48 : vector<2x32xf32>
    %51 = arith.divf %49, %50 : vector<2x32xf32>
    %52 = vector.extract_strided_slice %20 {offsets = [0, 32], sizes = [2, 32], strides = [1, 1]} : vector<2x128xf32> to vector<2x32xf32>
    %53 = arith.negf %52 : vector<2x32xf32>
    %54 = math.exp %53 : vector<2x32xf32>
    %cst_20 = arith.constant 1.000000e+00 : f32
    %55 = vector.broadcast %cst_20 : f32 to vector<2x32xf32>
    %56 = arith.addf %55, %54 : vector<2x32xf32>
    %57 = arith.divf %55, %56 : vector<2x32xf32>
    %58 = vector.extract_strided_slice %20 {offsets = [0, 64], sizes = [2, 32], strides = [1, 1]} : vector<2x128xf32> to vector<2x32xf32>
    %59 = math.tanh %58 : vector<2x32xf32>
    %60 = vector.extract_strided_slice %20 {offsets = [0, 96], sizes = [2, 32], strides = [1, 1]} : vector<2x128xf32> to vector<2x32xf32>
    %61 = arith.negf %60 : vector<2x32xf32>
    %62 = math.exp %61 : vector<2x32xf32>
    %cst_21 = arith.constant 1.000000e+00 : f32
    %63 = vector.broadcast %cst_21 : f32 to vector<2x32xf32>
    %64 = arith.addf %63, %62 : vector<2x32xf32>
    %65 = arith.divf %63, %64 : vector<2x32xf32>
    %66 = arith.mulf %57, %9 : vector<2x32xf32>
    %67 = arith.mulf %51, %59 : vector<2x32xf32>
    %68 = arith.addf %66, %67 : vector<2x32xf32>
    %69 = math.tanh %68 : vector<2x32xf32>
    %70 = arith.mulf %65, %69 : vector<2x32xf32>
    %c2_i32_22 = arith.constant 2 : i32
    %71 = arith.muli %c0_i32, %c2_i32_22 : i32
    %72 = arith.index_cast %71 : i32 to index
    %c0_23 = arith.constant 0 : index
    %73 = vector.load %arg8[%72, %c0_23] : memref<16x64xf32, #tpu.memory_space<vmem>>, vector<2x32xf32>
    tpu.vector_store %arg8[%72, %c0_23], %45 {strides = array<i32>} : memref<16x64xf32, #tpu.memory_space<vmem>>, vector<2x32xf32>,
    %c2_i32_24 = arith.constant 2 : i32
    %74 = arith.muli %10, %c2_i32_24 : i32
    %75 = arith.index_cast %74 : i32 to index
    %c32 = arith.constant 32 : index
    %76 = vector.load %arg8[%75, %c32] : memref<16x64xf32, #tpu.memory_space<vmem>>, vector<2x32xf32>
    tpu.vector_store %arg8[%75, %c32], %70 {strides = array<i32>} : memref<16x64xf32, #tpu.memory_space<vmem>>, vector<2x32xf32>,
    %c1_i32 = arith.constant 1 : i32
    %c7_i32_25 = arith.constant 7 : i32
    %77 = arith.subi %c7_i32_25, %c1_i32 : i32
    %c2_i32_26 = arith.constant 2 : i32
    %78 = arith.muli %c1_i32, %c2_i32_26 : i32
    %79 = arith.index_cast %78 : i32 to index
    %c0_27 = arith.constant 0 : index
    %80 = vector.load %arg9[%79, %c0_27] : memref<16x256xf32, #tpu.memory_space<vmem>>, vector<2x128xf32>
    %c2_i32_28 = arith.constant 2 : i32
    %81 = arith.muli %77, %c2_i32_28 : i32
    %82 = arith.index_cast %81 : i32 to index
    %c128_29 = arith.constant 128 : index
    %83 = vector.load %arg9[%82, %c128_29] : memref<16x256xf32, #tpu.memory_space<vmem>>, vector<2x128xf32>
    %cst_30 = arith.constant dense<0.000000e+00> : vector<2x128xf32>
    %84 = tpu.matmul %45, %7, %cst_30 {dimension_numbers = #tpu.dot_dimension_numbers<[1], [0], [0], [1], [0, 0, 1, 1], [], []>} : vector<2x32xf32>, vector<32x128xf32>, vector<2x128xf32> -> vector<2x128xf32>
    %85 = arith.addf %80, %84 : vector<2x128xf32>
    %cst_31 = arith.constant dense<0.000000e+00> : vector<2x128xf32>
    %86 = tpu.matmul %70, %8, %cst_31 {dimension_numbers = #tpu.dot_dimension_numbers<[1], [0], [0], [1], [0, 0, 1, 1], [], []>} : vector<2x32xf32>, vector<32x128xf32>, vector<2x128xf32> -> vector<2x128xf32>
    %87 = arith.addf %83, %86 : vector<2x128xf32>
    %88 = vector.extract_strided_slice %85 {offsets = [0, 0], sizes = [2, 32], strides = [1, 1]} : vector<2x128xf32> to vector<2x32xf32>
    %89 = arith.negf %88 : vector<2x32xf32>
    %90 = math.exp %89 : vector<2x32xf32>
    %cst_32 = arith.constant 1.000000e+00 : f32
    %91 = vector.broadcast %cst_32 : f32 to vector<2x32xf32>
    %92 = arith.addf %91, %90 : vector<2x32xf32>
    %93 = arith.divf %91, %92 : vector<2x32xf32>
    %94 = vector.extract_strided_slice %85 {offsets = [0, 32], sizes = [2, 32], strides = [1, 1]} : vector<2x128xf32> to vector<2x32xf32>
    %95 = arith.negf %94 : vector<2x32xf32>
    %96 = math.exp %95 : vector<2x32xf32>
    %cst_33 = arith.constant 1.000000e+00 : f32
    %97 = vector.broadcast %cst_33 : f32 to vector<2x32xf32>
    %98 = arith.addf %97, %96 : vector<2x32xf32>
    %99 = arith.divf %97, %98 : vector<2x32xf32>
    %100 = vector.extract_strided_slice %85 {offsets = [0, 64], sizes = [2, 32], strides = [1, 1]} : vector<2x128xf32> to vector<2x32xf32>
    %101 = math.tanh %100 : vector<2x32xf32>
    %102 = vector.extract_strided_slice %85 {offsets = [0, 96], sizes = [2, 32], strides = [1, 1]} : vector<2x128xf32> to vector<2x32xf32>
    %103 = arith.negf %102 : vector<2x32xf32>
    %104 = math.exp %103 : vector<2x32xf32>
    %cst_34 = arith.constant 1.000000e+00 : f32
    %105 = vector.broadcast %cst_34 : f32 to vector<2x32xf32>
    %106 = arith.addf %105, %104 : vector<2x32xf32>
    %107 = arith.divf %105, %106 : vector<2x32xf32>
    %108 = arith.mulf %99, %43 : vector<2x32xf32>
    %109 = arith.mulf %93, %101 : vector<2x32xf32>
    %110 = arith.addf %108, %109 : vector<2x32xf32>
    %111 = math.tanh %110 : vector<2x32xf32>
    %112 = arith.mulf %107, %111 : vector<2x32xf32>
    %113 = vector.extract_strided_slice %87 {offsets = [0, 0], sizes = [2, 32], strides = [1, 1]} : vector<2x128xf32> to vector<2x32xf32>
    %114 = arith.negf %113 : vector<2x32xf32>
    %115 = math.exp %114 : vector<2x32xf32>
    %cst_35 = arith.constant 1.000000e+00 : f32
    %116 = vector.broadcast %cst_35 : f32 to vector<2x32xf32>
    %117 = arith.addf %116, %115 : vector<2x32xf32>
    %118 = arith.divf %116, %117 : vector<2x32xf32>
    %119 = vector.extract_strided_slice %87 {offsets = [0, 32], sizes = [2, 32], strides = [1, 1]} : vector<2x128xf32> to vector<2x32xf32>
    %120 = arith.negf %119 : vector<2x32xf32>
    %121 = math.exp %120 : vector<2x32xf32>
    %cst_36 = arith.constant 1.000000e+00 : f32
    %122 = vector.broadcast %cst_36 : f32 to vector<2x32xf32>
    %123 = arith.addf %122, %121 : vector<2x32xf32>
    %124 = arith.divf %122, %123 : vector<2x32xf32>
    %125 = vector.extract_strided_slice %87 {offsets = [0, 64], sizes = [2, 32], strides = [1, 1]} : vector<2x128xf32> to vector<2x32xf32>
    %126 = math.tanh %125 : vector<2x32xf32>
    %127 = vector.extract_strided_slice %87 {offsets = [0, 96], sizes = [2, 32], strides = [1, 1]} : vector<2x128xf32> to vector<2x32xf32>
    %128 = arith.negf %127 : vector<2x32xf32>
    %129 = math.exp %128 : vector<2x32xf32>
    %cst_37 = arith.constant 1.000000e+00 : f32
    %130 = vector.broadcast %cst_37 : f32 to vector<2x32xf32>
    %131 = arith.addf %130, %129 : vector<2x32xf32>
    %132 = arith.divf %130, %131 : vector<2x32xf32>
    %133 = arith.mulf %124, %68 : vector<2x32xf32>
    %134 = arith.mulf %118, %126 : vector<2x32xf32>
    %135 = arith.addf %133, %134 : vector<2x32xf32>
    %136 = math.tanh %135 : vector<2x32xf32>
    %137 = arith.mulf %132, %136 : vector<2x32xf32>
    %c2_i32_38 = arith.constant 2 : i32
    %138 = arith.muli %c1_i32, %c2_i32_38 : i32
    %139 = arith.index_cast %138 : i32 to index
    %c0_39 = arith.constant 0 : index
    %140 = vector.load %arg8[%139, %c0_39] : memref<16x64xf32, #tpu.memory_space<vmem>>, vector<2x32xf32>
    tpu.vector_store %arg8[%139, %c0_39], %112 {strides = array<i32>} : memref<16x64xf32, #tpu.memory_space<vmem>>, vector<2x32xf32>,
    %c2_i32_40 = arith.constant 2 : i32
    %141 = arith.muli %77, %c2_i32_40 : i32
    %142 = arith.index_cast %141 : i32 to index
    %c32_41 = arith.constant 32 : index
    %143 = vector.load %arg8[%142, %c32_41] : memref<16x64xf32, #tpu.memory_space<vmem>>, vector<2x32xf32>
    tpu.vector_store %arg8[%142, %c32_41], %137 {strides = array<i32>} : memref<16x64xf32, #tpu.memory_space<vmem>>, vector<2x32xf32>,
    %c2_i32_42 = arith.constant 2 : i32
    %c7_i32_43 = arith.constant 7 : i32
    %144 = arith.subi %c7_i32_43, %c2_i32_42 : i32
    %c2_i32_44 = arith.constant 2 : i32
    %145 = arith.muli %c2_i32_42, %c2_i32_44 : i32
    %146 = arith.index_cast %145 : i32 to index
    %c0_45 = arith.constant 0 : index
    %147 = vector.load %arg9[%146, %c0_45] : memref<16x256xf32, #tpu.memory_space<vmem>>, vector<2x128xf32>
    %c2_i32_46 = arith.constant 2 : i32
    %148 = arith.muli %144, %c2_i32_46 : i32
    %149 = arith.index_cast %148 : i32 to index
    %c128_47 = arith.constant 128 : index
    %150 = vector.load %arg9[%149, %c128_47] : memref<16x256xf32, #tpu.memory_space<vmem>>, vector<2x128xf32>
    %cst_48 = arith.constant dense<0.000000e+00> : vector<2x128xf32>
    %151 = tpu.matmul %112, %7, %cst_48 {dimension_numbers = #tpu.dot_dimension_numbers<[1], [0], [0], [1], [0, 0, 1, 1], [], []>} : vector<2x32xf32>, vector<32x128xf32>, vector<2x128xf32> -> vector<2x128xf32>
    %152 = arith.addf %147, %151 : vector<2x128xf32>
    %cst_49 = arith.constant dense<0.000000e+00> : vector<2x128xf32>
    %153 = tpu.matmul %137, %8, %cst_49 {dimension_numbers = #tpu.dot_dimension_numbers<[1], [0], [0], [1], [0, 0, 1, 1], [], []>} : vector<2x32xf32>, vector<32x128xf32>, vector<2x128xf32> -> vector<2x128xf32>
    %154 = arith.addf %150, %153 : vector<2x128xf32>
    %155 = vector.extract_strided_slice %152 {offsets = [0, 0], sizes = [2, 32], strides = [1, 1]} : vector<2x128xf32> to vector<2x32xf32>
    %156 = arith.negf %155 : vector<2x32xf32>
    %157 = math.exp %156 : vector<2x32xf32>
    %cst_50 = arith.constant 1.000000e+00 : f32
    %158 = vector.broadcast %cst_50 : f32 to vector<2x32xf32>
    %159 = arith.addf %158, %157 : vector<2x32xf32>
    %160 = arith.divf %158, %159 : vector<2x32xf32>
    %161 = vector.extract_strided_slice %152 {offsets = [0, 32], sizes = [2, 32], strides = [1, 1]} : vector<2x128xf32> to vector<2x32xf32>
    %162 = arith.negf %161 : vector<2x32xf32>
    %163 = math.exp %162 : vector<2x32xf32>
    %cst_51 = arith.constant 1.000000e+00 : f32
    %164 = vector.broadcast %cst_51 : f32 to vector<2x32xf32>
    %165 = arith.addf %164, %163 : vector<2x32xf32>
    %166 = arith.divf %164, %165 : vector<2x32xf32>
    %167 = vector.extract_strided_slice %152 {offsets = [0, 64], sizes = [2, 32], strides = [1, 1]} : vector<2x128xf32> to vector<2x32xf32>
    %168 = math.tanh %167 : vector<2x32xf32>
    %169 = vector.extract_strided_slice %152 {offsets = [0, 96], sizes = [2, 32], strides = [1, 1]} : vector<2x128xf32> to vector<2x32xf32>
    %170 = arith.negf %169 : vector<2x32xf32>
    %171 = math.exp %170 : vector<2x32xf32>
    %cst_52 = arith.constant 1.000000e+00 : f32
    %172 = vector.broadcast %cst_52 : f32 to vector<2x32xf32>
    %173 = arith.addf %172, %171 : vector<2x32xf32>
    %174 = arith.divf %172, %173 : vector<2x32xf32>
    %175 = arith.mulf %166, %110 : vector<2x32xf32>
    %176 = arith.mulf %160, %168 : vector<2x32xf32>
    %177 = arith.addf %175, %176 : vector<2x32xf32>
    %178 = math.tanh %177 : vector<2x32xf32>
    %179 = arith.mulf %174, %178 : vector<2x32xf32>
    %180 = vector.extract_strided_slice %154 {offsets = [0, 0], sizes = [2, 32], strides = [1, 1]} : vector<2x128xf32> to vector<2x32xf32>
    %181 = arith.negf %180 : vector<2x32xf32>
    %182 = math.exp %181 : vector<2x32xf32>
    %cst_53 = arith.constant 1.000000e+00 : f32
    %183 = vector.broadcast %cst_53 : f32 to vector<2x32xf32>
    %184 = arith.addf %183, %182 : vector<2x32xf32>
    %185 = arith.divf %183, %184 : vector<2x32xf32>
    %186 = vector.extract_strided_slice %154 {offsets = [0, 32], sizes = [2, 32], strides = [1, 1]} : vector<2x128xf32> to vector<2x32xf32>
    %187 = arith.negf %186 : vector<2x32xf32>
    %188 = math.exp %187 : vector<2x32xf32>
    %cst_54 = arith.constant 1.000000e+00 : f32
    %189 = vector.broadcast %cst_54 : f32 to vector<2x32xf32>
    %190 = arith.addf %189, %188 : vector<2x32xf32>
    %191 = arith.divf %189, %190 : vector<2x32xf32>
    %192 = vector.extract_strided_slice %154 {offsets = [0, 64], sizes = [2, 32], strides = [1, 1]} : vector<2x128xf32> to vector<2x32xf32>
    %193 = math.tanh %192 : vector<2x32xf32>
    %194 = vector.extract_strided_slice %154 {offsets = [0, 96], sizes = [2, 32], strides = [1, 1]} : vector<2x128xf32> to vector<2x32xf32>
    %195 = arith.negf %194 : vector<2x32xf32>
    %196 = math.exp %195 : vector<2x32xf32>
    %cst_55 = arith.constant 1.000000e+00 : f32
    %197 = vector.broadcast %cst_55 : f32 to vector<2x32xf32>
    %198 = arith.addf %197, %196 : vector<2x32xf32>
    %199 = arith.divf %197, %198 : vector<2x32xf32>
    %200 = arith.mulf %191, %135 : vector<2x32xf32>
    %201 = arith.mulf %185, %193 : vector<2x32xf32>
    %202 = arith.addf %200, %201 : vector<2x32xf32>
    %203 = math.tanh %202 : vector<2x32xf32>
    %204 = arith.mulf %199, %203 : vector<2x32xf32>
    %c2_i32_56 = arith.constant 2 : i32
    %205 = arith.muli %c2_i32_42, %c2_i32_56 : i32
    %206 = arith.index_cast %205 : i32 to index
    %c0_57 = arith.constant 0 : index
    %207 = vector.load %arg8[%206, %c0_57] : memref<16x64xf32, #tpu.memory_space<vmem>>, vector<2x32xf32>
    tpu.vector_store %arg8[%206, %c0_57], %179 {strides = array<i32>} : memref<16x64xf32, #tpu.memory_space<vmem>>, vector<2x32xf32>,
    %c2_i32_58 = arith.constant 2 : i32
    %208 = arith.muli %144, %c2_i32_58 : i32
    %209 = arith.index_cast %208 : i32 to index
    %c32_59 = arith.constant 32 : index
    %210 = vector.load %arg8[%209, %c32_59] : memref<16x64xf32, #tpu.memory_space<vmem>>, vector<2x32xf32>
    tpu.vector_store %arg8[%209, %c32_59], %204 {strides = array<i32>} : memref<16x64xf32, #tpu.memory_space<vmem>>, vector<2x32xf32>,
    %c3_i32 = arith.constant 3 : i32
    %c7_i32_60 = arith.constant 7 : i32
    %211 = arith.subi %c7_i32_60, %c3_i32 : i32
    %c2_i32_61 = arith.constant 2 : i32
    %212 = arith.muli %c3_i32, %c2_i32_61 : i32
    %213 = arith.index_cast %212 : i32 to index
    %c0_62 = arith.constant 0 : index
    %214 = vector.load %arg9[%213, %c0_62] : memref<16x256xf32, #tpu.memory_space<vmem>>, vector<2x128xf32>
    %c2_i32_63 = arith.constant 2 : i32
    %215 = arith.muli %211, %c2_i32_63 : i32
    %216 = arith.index_cast %215 : i32 to index
    %c128_64 = arith.constant 128 : index
    %217 = vector.load %arg9[%216, %c128_64] : memref<16x256xf32, #tpu.memory_space<vmem>>, vector<2x128xf32>
    %cst_65 = arith.constant dense<0.000000e+00> : vector<2x128xf32>
    %218 = tpu.matmul %179, %7, %cst_65 {dimension_numbers = #tpu.dot_dimension_numbers<[1], [0], [0], [1], [0, 0, 1, 1], [], []>} : vector<2x32xf32>, vector<32x128xf32>, vector<2x128xf32> -> vector<2x128xf32>
    %219 = arith.addf %214, %218 : vector<2x128xf32>
    %cst_66 = arith.constant dense<0.000000e+00> : vector<2x128xf32>
    %220 = tpu.matmul %204, %8, %cst_66 {dimension_numbers = #tpu.dot_dimension_numbers<[1], [0], [0], [1], [0, 0, 1, 1], [], []>} : vector<2x32xf32>, vector<32x128xf32>, vector<2x128xf32> -> vector<2x128xf32>
    %221 = arith.addf %217, %220 : vector<2x128xf32>
    %222 = vector.extract_strided_slice %219 {offsets = [0, 0], sizes = [2, 32], strides = [1, 1]} : vector<2x128xf32> to vector<2x32xf32>
    %223 = arith.negf %222 : vector<2x32xf32>
    %224 = math.exp %223 : vector<2x32xf32>
    %cst_67 = arith.constant 1.000000e+00 : f32
    %225 = vector.broadcast %cst_67 : f32 to vector<2x32xf32>
    %226 = arith.addf %225, %224 : vector<2x32xf32>
    %227 = arith.divf %225, %226 : vector<2x32xf32>
    %228 = vector.extract_strided_slice %219 {offsets = [0, 32], sizes = [2, 32], strides = [1, 1]} : vector<2x128xf32> to vector<2x32xf32>
    %229 = arith.negf %228 : vector<2x32xf32>
    %230 = math.exp %229 : vector<2x32xf32>
    %cst_68 = arith.constant 1.000000e+00 : f32
    %231 = vector.broadcast %cst_68 : f32 to vector<2x32xf32>
    %232 = arith.addf %231, %230 : vector<2x32xf32>
    %233 = arith.divf %231, %232 : vector<2x32xf32>
    %234 = vector.extract_strided_slice %219 {offsets = [0, 64], sizes = [2, 32], strides = [1, 1]} : vector<2x128xf32> to vector<2x32xf32>
    %235 = math.tanh %234 : vector<2x32xf32>
    %236 = vector.extract_strided_slice %219 {offsets = [0, 96], sizes = [2, 32], strides = [1, 1]} : vector<2x128xf32> to vector<2x32xf32>
    %237 = arith.negf %236 : vector<2x32xf32>
    %238 = math.exp %237 : vector<2x32xf32>
    %cst_69 = arith.constant 1.000000e+00 : f32
    %239 = vector.broadcast %cst_69 : f32 to vector<2x32xf32>
    %240 = arith.addf %239, %238 : vector<2x32xf32>
    %241 = arith.divf %239, %240 : vector<2x32xf32>
    %242 = arith.mulf %233, %177 : vector<2x32xf32>
    %243 = arith.mulf %227, %235 : vector<2x32xf32>
    %244 = arith.addf %242, %243 : vector<2x32xf32>
    %245 = math.tanh %244 : vector<2x32xf32>
    %246 = arith.mulf %241, %245 : vector<2x32xf32>
    %247 = vector.extract_strided_slice %221 {offsets = [0, 0], sizes = [2, 32], strides = [1, 1]} : vector<2x128xf32> to vector<2x32xf32>
    %248 = arith.negf %247 : vector<2x32xf32>
    %249 = math.exp %248 : vector<2x32xf32>
    %cst_70 = arith.constant 1.000000e+00 : f32
    %250 = vector.broadcast %cst_70 : f32 to vector<2x32xf32>
    %251 = arith.addf %250, %249 : vector<2x32xf32>
    %252 = arith.divf %250, %251 : vector<2x32xf32>
    %253 = vector.extract_strided_slice %221 {offsets = [0, 32], sizes = [2, 32], strides = [1, 1]} : vector<2x128xf32> to vector<2x32xf32>
    %254 = arith.negf %253 : vector<2x32xf32>
    %255 = math.exp %254 : vector<2x32xf32>
    %cst_71 = arith.constant 1.000000e+00 : f32
    %256 = vector.broadcast %cst_71 : f32 to vector<2x32xf32>
    %257 = arith.addf %256, %255 : vector<2x32xf32>
    %258 = arith.divf %256, %257 : vector<2x32xf32>
    %259 = vector.extract_strided_slice %221 {offsets = [0, 64], sizes = [2, 32], strides = [1, 1]} : vector<2x128xf32> to vector<2x32xf32>
    %260 = math.tanh %259 : vector<2x32xf32>
    %261 = vector.extract_strided_slice %221 {offsets = [0, 96], sizes = [2, 32], strides = [1, 1]} : vector<2x128xf32> to vector<2x32xf32>
    %262 = arith.negf %261 : vector<2x32xf32>
    %263 = math.exp %262 : vector<2x32xf32>
    %cst_72 = arith.constant 1.000000e+00 : f32
    %264 = vector.broadcast %cst_72 : f32 to vector<2x32xf32>
    %265 = arith.addf %264, %263 : vector<2x32xf32>
    %266 = arith.divf %264, %265 : vector<2x32xf32>
    %267 = arith.mulf %258, %202 : vector<2x32xf32>
    %268 = arith.mulf %252, %260 : vector<2x32xf32>
    %269 = arith.addf %267, %268 : vector<2x32xf32>
    %270 = math.tanh %269 : vector<2x32xf32>
    %271 = arith.mulf %266, %270 : vector<2x32xf32>
    %c2_i32_73 = arith.constant 2 : i32
    %272 = arith.muli %c3_i32, %c2_i32_73 : i32
    %273 = arith.index_cast %272 : i32 to index
    %c0_74 = arith.constant 0 : index
    %274 = vector.load %arg8[%273, %c0_74] : memref<16x64xf32, #tpu.memory_space<vmem>>, vector<2x32xf32>
    tpu.vector_store %arg8[%273, %c0_74], %246 {strides = array<i32>} : memref<16x64xf32, #tpu.memory_space<vmem>>, vector<2x32xf32>,
    %c2_i32_75 = arith.constant 2 : i32
    %275 = arith.muli %211, %c2_i32_75 : i32
    %276 = arith.index_cast %275 : i32 to index
    %c32_76 = arith.constant 32 : index
    %277 = vector.load %arg8[%276, %c32_76] : memref<16x64xf32, #tpu.memory_space<vmem>>, vector<2x32xf32>
    tpu.vector_store %arg8[%276, %c32_76], %271 {strides = array<i32>} : memref<16x64xf32, #tpu.memory_space<vmem>>, vector<2x32xf32>,
    %c4_i32 = arith.constant 4 : i32
    %c7_i32_77 = arith.constant 7 : i32
    %278 = arith.subi %c7_i32_77, %c4_i32 : i32
    %c2_i32_78 = arith.constant 2 : i32
    %279 = arith.muli %c4_i32, %c2_i32_78 : i32
    %280 = arith.index_cast %279 : i32 to index
    %c0_79 = arith.constant 0 : index
    %281 = vector.load %arg9[%280, %c0_79] : memref<16x256xf32, #tpu.memory_space<vmem>>, vector<2x128xf32>
    %c2_i32_80 = arith.constant 2 : i32
    %282 = arith.muli %278, %c2_i32_80 : i32
    %283 = arith.index_cast %282 : i32 to index
    %c128_81 = arith.constant 128 : index
    %284 = vector.load %arg9[%283, %c128_81] : memref<16x256xf32, #tpu.memory_space<vmem>>, vector<2x128xf32>
    %cst_82 = arith.constant dense<0.000000e+00> : vector<2x128xf32>
    %285 = tpu.matmul %246, %7, %cst_82 {dimension_numbers = #tpu.dot_dimension_numbers<[1], [0], [0], [1], [0, 0, 1, 1], [], []>} : vector<2x32xf32>, vector<32x128xf32>, vector<2x128xf32> -> vector<2x128xf32>
    %286 = arith.addf %281, %285 : vector<2x128xf32>
    %cst_83 = arith.constant dense<0.000000e+00> : vector<2x128xf32>
    %287 = tpu.matmul %271, %8, %cst_83 {dimension_numbers = #tpu.dot_dimension_numbers<[1], [0], [0], [1], [0, 0, 1, 1], [], []>} : vector<2x32xf32>, vector<32x128xf32>, vector<2x128xf32> -> vector<2x128xf32>
    %288 = arith.addf %284, %287 : vector<2x128xf32>
    %289 = vector.extract_strided_slice %286 {offsets = [0, 0], sizes = [2, 32], strides = [1, 1]} : vector<2x128xf32> to vector<2x32xf32>
    %290 = arith.negf %289 : vector<2x32xf32>
    %291 = math.exp %290 : vector<2x32xf32>
    %cst_84 = arith.constant 1.000000e+00 : f32
    %292 = vector.broadcast %cst_84 : f32 to vector<2x32xf32>
    %293 = arith.addf %292, %291 : vector<2x32xf32>
    %294 = arith.divf %292, %293 : vector<2x32xf32>
    %295 = vector.extract_strided_slice %286 {offsets = [0, 32], sizes = [2, 32], strides = [1, 1]} : vector<2x128xf32> to vector<2x32xf32>
    %296 = arith.negf %295 : vector<2x32xf32>
    %297 = math.exp %296 : vector<2x32xf32>
    %cst_85 = arith.constant 1.000000e+00 : f32
    %298 = vector.broadcast %cst_85 : f32 to vector<2x32xf32>
    %299 = arith.addf %298, %297 : vector<2x32xf32>
    %300 = arith.divf %298, %299 : vector<2x32xf32>
    %301 = vector.extract_strided_slice %286 {offsets = [0, 64], sizes = [2, 32], strides = [1, 1]} : vector<2x128xf32> to vector<2x32xf32>
    %302 = math.tanh %301 : vector<2x32xf32>
    %303 = vector.extract_strided_slice %286 {offsets = [0, 96], sizes = [2, 32], strides = [1, 1]} : vector<2x128xf32> to vector<2x32xf32>
    %304 = arith.negf %303 : vector<2x32xf32>
    %305 = math.exp %304 : vector<2x32xf32>
    %cst_86 = arith.constant 1.000000e+00 : f32
    %306 = vector.broadcast %cst_86 : f32 to vector<2x32xf32>
    %307 = arith.addf %306, %305 : vector<2x32xf32>
    %308 = arith.divf %306, %307 : vector<2x32xf32>
    %309 = arith.mulf %300, %244 : vector<2x32xf32>
    %310 = arith.mulf %294, %302 : vector<2x32xf32>
    %311 = arith.addf %309, %310 : vector<2x32xf32>
    %312 = math.tanh %311 : vector<2x32xf32>
    %313 = arith.mulf %308, %312 : vector<2x32xf32>
    %314 = vector.extract_strided_slice %288 {offsets = [0, 0], sizes = [2, 32], strides = [1, 1]} : vector<2x128xf32> to vector<2x32xf32>
    %315 = arith.negf %314 : vector<2x32xf32>
    %316 = math.exp %315 : vector<2x32xf32>
    %cst_87 = arith.constant 1.000000e+00 : f32
    %317 = vector.broadcast %cst_87 : f32 to vector<2x32xf32>
    %318 = arith.addf %317, %316 : vector<2x32xf32>
    %319 = arith.divf %317, %318 : vector<2x32xf32>
    %320 = vector.extract_strided_slice %288 {offsets = [0, 32], sizes = [2, 32], strides = [1, 1]} : vector<2x128xf32> to vector<2x32xf32>
    %321 = arith.negf %320 : vector<2x32xf32>
    %322 = math.exp %321 : vector<2x32xf32>
    %cst_88 = arith.constant 1.000000e+00 : f32
    %323 = vector.broadcast %cst_88 : f32 to vector<2x32xf32>
    %324 = arith.addf %323, %322 : vector<2x32xf32>
    %325 = arith.divf %323, %324 : vector<2x32xf32>
    %326 = vector.extract_strided_slice %288 {offsets = [0, 64], sizes = [2, 32], strides = [1, 1]} : vector<2x128xf32> to vector<2x32xf32>
    %327 = math.tanh %326 : vector<2x32xf32>
    %328 = vector.extract_strided_slice %288 {offsets = [0, 96], sizes = [2, 32], strides = [1, 1]} : vector<2x128xf32> to vector<2x32xf32>
    %329 = arith.negf %328 : vector<2x32xf32>
    %330 = math.exp %329 : vector<2x32xf32>
    %cst_89 = arith.constant 1.000000e+00 : f32
    %331 = vector.broadcast %cst_89 : f32 to vector<2x32xf32>
    %332 = arith.addf %331, %330 : vector<2x32xf32>
    %333 = arith.divf %331, %332 : vector<2x32xf32>
    %334 = arith.mulf %325, %269 : vector<2x32xf32>
    %335 = arith.mulf %319, %327 : vector<2x32xf32>
    %336 = arith.addf %334, %335 : vector<2x32xf32>
    %337 = math.tanh %336 : vector<2x32xf32>
    %338 = arith.mulf %333, %337 : vector<2x32xf32>
    %c2_i32_90 = arith.constant 2 : i32
    %339 = arith.muli %c4_i32, %c2_i32_90 : i32
    %340 = arith.index_cast %339 : i32 to index
    %c0_91 = arith.constant 0 : index
    %341 = vector.load %arg8[%340, %c0_91] : memref<16x64xf32, #tpu.memory_space<vmem>>, vector<2x32xf32>
    tpu.vector_store %arg8[%340, %c0_91], %313 {strides = array<i32>} : memref<16x64xf32, #tpu.memory_space<vmem>>, vector<2x32xf32>,
    %c2_i32_92 = arith.constant 2 : i32
    %342 = arith.muli %278, %c2_i32_92 : i32
    %343 = arith.index_cast %342 : i32 to index
    %c32_93 = arith.constant 32 : index
    %344 = vector.load %arg8[%343, %c32_93] : memref<16x64xf32, #tpu.memory_space<vmem>>, vector<2x32xf32>
    tpu.vector_store %arg8[%343, %c32_93], %338 {strides = array<i32>} : memref<16x64xf32, #tpu.memory_space<vmem>>, vector<2x32xf32>,
    %c5_i32 = arith.constant 5 : i32
    %c7_i32_94 = arith.constant 7 : i32
    %345 = arith.subi %c7_i32_94, %c5_i32 : i32
    %c2_i32_95 = arith.constant 2 : i32
    %346 = arith.muli %c5_i32, %c2_i32_95 : i32
    %347 = arith.index_cast %346 : i32 to index
    %c0_96 = arith.constant 0 : index
    %348 = vector.load %arg9[%347, %c0_96] : memref<16x256xf32, #tpu.memory_space<vmem>>, vector<2x128xf32>
    %c2_i32_97 = arith.constant 2 : i32
    %349 = arith.muli %345, %c2_i32_97 : i32
    %350 = arith.index_cast %349 : i32 to index
    %c128_98 = arith.constant 128 : index
    %351 = vector.load %arg9[%350, %c128_98] : memref<16x256xf32, #tpu.memory_space<vmem>>, vector<2x128xf32>
    %cst_99 = arith.constant dense<0.000000e+00> : vector<2x128xf32>
    %352 = tpu.matmul %313, %7, %cst_99 {dimension_numbers = #tpu.dot_dimension_numbers<[1], [0], [0], [1], [0, 0, 1, 1], [], []>} : vector<2x32xf32>, vector<32x128xf32>, vector<2x128xf32> -> vector<2x128xf32>
    %353 = arith.addf %348, %352 : vector<2x128xf32>
    %cst_100 = arith.constant dense<0.000000e+00> : vector<2x128xf32>
    %354 = tpu.matmul %338, %8, %cst_100 {dimension_numbers = #tpu.dot_dimension_numbers<[1], [0], [0], [1], [0, 0, 1, 1], [], []>} : vector<2x32xf32>, vector<32x128xf32>, vector<2x128xf32> -> vector<2x128xf32>
    %355 = arith.addf %351, %354 : vector<2x128xf32>
    %356 = vector.extract_strided_slice %353 {offsets = [0, 0], sizes = [2, 32], strides = [1, 1]} : vector<2x128xf32> to vector<2x32xf32>
    %357 = arith.negf %356 : vector<2x32xf32>
    %358 = math.exp %357 : vector<2x32xf32>
    %cst_101 = arith.constant 1.000000e+00 : f32
    %359 = vector.broadcast %cst_101 : f32 to vector<2x32xf32>
    %360 = arith.addf %359, %358 : vector<2x32xf32>
    %361 = arith.divf %359, %360 : vector<2x32xf32>
    %362 = vector.extract_strided_slice %353 {offsets = [0, 32], sizes = [2, 32], strides = [1, 1]} : vector<2x128xf32> to vector<2x32xf32>
    %363 = arith.negf %362 : vector<2x32xf32>
    %364 = math.exp %363 : vector<2x32xf32>
    %cst_102 = arith.constant 1.000000e+00 : f32
    %365 = vector.broadcast %cst_102 : f32 to vector<2x32xf32>
    %366 = arith.addf %365, %364 : vector<2x32xf32>
    %367 = arith.divf %365, %366 : vector<2x32xf32>
    %368 = vector.extract_strided_slice %353 {offsets = [0, 64], sizes = [2, 32], strides = [1, 1]} : vector<2x128xf32> to vector<2x32xf32>
    %369 = math.tanh %368 : vector<2x32xf32>
    %370 = vector.extract_strided_slice %353 {offsets = [0, 96], sizes = [2, 32], strides = [1, 1]} : vector<2x128xf32> to vector<2x32xf32>
    %371 = arith.negf %370 : vector<2x32xf32>
    %372 = math.exp %371 : vector<2x32xf32>
    %cst_103 = arith.constant 1.000000e+00 : f32
    %373 = vector.broadcast %cst_103 : f32 to vector<2x32xf32>
    %374 = arith.addf %373, %372 : vector<2x32xf32>
    %375 = arith.divf %373, %374 : vector<2x32xf32>
    %376 = arith.mulf %367, %311 : vector<2x32xf32>
    %377 = arith.mulf %361, %369 : vector<2x32xf32>
    %378 = arith.addf %376, %377 : vector<2x32xf32>
    %379 = math.tanh %378 : vector<2x32xf32>
    %380 = arith.mulf %375, %379 : vector<2x32xf32>
    %381 = vector.extract_strided_slice %355 {offsets = [0, 0], sizes = [2, 32], strides = [1, 1]} : vector<2x128xf32> to vector<2x32xf32>
    %382 = arith.negf %381 : vector<2x32xf32>
    %383 = math.exp %382 : vector<2x32xf32>
    %cst_104 = arith.constant 1.000000e+00 : f32
    %384 = vector.broadcast %cst_104 : f32 to vector<2x32xf32>
    %385 = arith.addf %384, %383 : vector<2x32xf32>
    %386 = arith.divf %384, %385 : vector<2x32xf32>
    %387 = vector.extract_strided_slice %355 {offsets = [0, 32], sizes = [2, 32], strides = [1, 1]} : vector<2x128xf32> to vector<2x32xf32>
    %388 = arith.negf %387 : vector<2x32xf32>
    %389 = math.exp %388 : vector<2x32xf32>
    %cst_105 = arith.constant 1.000000e+00 : f32
    %390 = vector.broadcast %cst_105 : f32 to vector<2x32xf32>
    %391 = arith.addf %390, %389 : vector<2x32xf32>
    %392 = arith.divf %390, %391 : vector<2x32xf32>
    %393 = vector.extract_strided_slice %355 {offsets = [0, 64], sizes = [2, 32], strides = [1, 1]} : vector<2x128xf32> to vector<2x32xf32>
    %394 = math.tanh %393 : vector<2x32xf32>
    %395 = vector.extract_strided_slice %355 {offsets = [0, 96], sizes = [2, 32], strides = [1, 1]} : vector<2x128xf32> to vector<2x32xf32>
    %396 = arith.negf %395 : vector<2x32xf32>
    %397 = math.exp %396 : vector<2x32xf32>
    %cst_106 = arith.constant 1.000000e+00 : f32
    %398 = vector.broadcast %cst_106 : f32 to vector<2x32xf32>
    %399 = arith.addf %398, %397 : vector<2x32xf32>
    %400 = arith.divf %398, %399 : vector<2x32xf32>
    %401 = arith.mulf %392, %336 : vector<2x32xf32>
    %402 = arith.mulf %386, %394 : vector<2x32xf32>
    %403 = arith.addf %401, %402 : vector<2x32xf32>
    %404 = math.tanh %403 : vector<2x32xf32>
    %405 = arith.mulf %400, %404 : vector<2x32xf32>
    %c2_i32_107 = arith.constant 2 : i32
    %406 = arith.muli %c5_i32, %c2_i32_107 : i32
    %407 = arith.index_cast %406 : i32 to index
    %c0_108 = arith.constant 0 : index
    %408 = vector.load %arg8[%407, %c0_108] : memref<16x64xf32, #tpu.memory_space<vmem>>, vector<2x32xf32>
    tpu.vector_store %arg8[%407, %c0_108], %380 {strides = array<i32>} : memref<16x64xf32, #tpu.memory_space<vmem>>, vector<2x32xf32>,
    %c2_i32_109 = arith.constant 2 : i32
    %409 = arith.muli %345, %c2_i32_109 : i32
    %410 = arith.index_cast %409 : i32 to index
    %c32_110 = arith.constant 32 : index
    %411 = vector.load %arg8[%410, %c32_110] : memref<16x64xf32, #tpu.memory_space<vmem>>, vector<2x32xf32>
    tpu.vector_store %arg8[%410, %c32_110], %405 {strides = array<i32>} : memref<16x64xf32, #tpu.memory_space<vmem>>, vector<2x32xf32>,
    %c6_i32 = arith.constant 6 : i32
    %c7_i32_111 = arith.constant 7 : i32
    %412 = arith.subi %c7_i32_111, %c6_i32 : i32
    %c2_i32_112 = arith.constant 2 : i32
    %413 = arith.muli %c6_i32, %c2_i32_112 : i32
    %414 = arith.index_cast %413 : i32 to index
    %c0_113 = arith.constant 0 : index
    %415 = vector.load %arg9[%414, %c0_113] : memref<16x256xf32, #tpu.memory_space<vmem>>, vector<2x128xf32>
    %c2_i32_114 = arith.constant 2 : i32
    %416 = arith.muli %412, %c2_i32_114 : i32
    %417 = arith.index_cast %416 : i32 to index
    %c128_115 = arith.constant 128 : index
    %418 = vector.load %arg9[%417, %c128_115] : memref<16x256xf32, #tpu.memory_space<vmem>>, vector<2x128xf32>
    %cst_116 = arith.constant dense<0.000000e+00> : vector<2x128xf32>
    %419 = tpu.matmul %380, %7, %cst_116 {dimension_numbers = #tpu.dot_dimension_numbers<[1], [0], [0], [1], [0, 0, 1, 1], [], []>} : vector<2x32xf32>, vector<32x128xf32>, vector<2x128xf32> -> vector<2x128xf32>
    %420 = arith.addf %415, %419 : vector<2x128xf32>
    %cst_117 = arith.constant dense<0.000000e+00> : vector<2x128xf32>
    %421 = tpu.matmul %405, %8, %cst_117 {dimension_numbers = #tpu.dot_dimension_numbers<[1], [0], [0], [1], [0, 0, 1, 1], [], []>} : vector<2x32xf32>, vector<32x128xf32>, vector<2x128xf32> -> vector<2x128xf32>
    %422 = arith.addf %418, %421 : vector<2x128xf32>
    %423 = vector.extract_strided_slice %420 {offsets = [0, 0], sizes = [2, 32], strides = [1, 1]} : vector<2x128xf32> to vector<2x32xf32>
    %424 = arith.negf %423 : vector<2x32xf32>
    %425 = math.exp %424 : vector<2x32xf32>
    %cst_118 = arith.constant 1.000000e+00 : f32
    %426 = vector.broadcast %cst_118 : f32 to vector<2x32xf32>
    %427 = arith.addf %426, %425 : vector<2x32xf32>
    %428 = arith.divf %426, %427 : vector<2x32xf32>
    %429 = vector.extract_strided_slice %420 {offsets = [0, 32], sizes = [2, 32], strides = [1, 1]} : vector<2x128xf32> to vector<2x32xf32>
    %430 = arith.negf %429 : vector<2x32xf32>
    %431 = math.exp %430 : vector<2x32xf32>
    %cst_119 = arith.constant 1.000000e+00 : f32
    %432 = vector.broadcast %cst_119 : f32 to vector<2x32xf32>
    %433 = arith.addf %432, %431 : vector<2x32xf32>
    %434 = arith.divf %432, %433 : vector<2x32xf32>
    %435 = vector.extract_strided_slice %420 {offsets = [0, 64], sizes = [2, 32], strides = [1, 1]} : vector<2x128xf32> to vector<2x32xf32>
    %436 = math.tanh %435 : vector<2x32xf32>
    %437 = vector.extract_strided_slice %420 {offsets = [0, 96], sizes = [2, 32], strides = [1, 1]} : vector<2x128xf32> to vector<2x32xf32>
    %438 = arith.negf %437 : vector<2x32xf32>
    %439 = math.exp %438 : vector<2x32xf32>
    %cst_120 = arith.constant 1.000000e+00 : f32
    %440 = vector.broadcast %cst_120 : f32 to vector<2x32xf32>
    %441 = arith.addf %440, %439 : vector<2x32xf32>
    %442 = arith.divf %440, %441 : vector<2x32xf32>
    %443 = arith.mulf %434, %378 : vector<2x32xf32>
    %444 = arith.mulf %428, %436 : vector<2x32xf32>
    %445 = arith.addf %443, %444 : vector<2x32xf32>
    %446 = math.tanh %445 : vector<2x32xf32>
    %447 = arith.mulf %442, %446 : vector<2x32xf32>
    %448 = vector.extract_strided_slice %422 {offsets = [0, 0], sizes = [2, 32], strides = [1, 1]} : vector<2x128xf32> to vector<2x32xf32>
    %449 = arith.negf %448 : vector<2x32xf32>
    %450 = math.exp %449 : vector<2x32xf32>
    %cst_121 = arith.constant 1.000000e+00 : f32
    %451 = vector.broadcast %cst_121 : f32 to vector<2x32xf32>
    %452 = arith.addf %451, %450 : vector<2x32xf32>
    %453 = arith.divf %451, %452 : vector<2x32xf32>
    %454 = vector.extract_strided_slice %422 {offsets = [0, 32], sizes = [2, 32], strides = [1, 1]} : vector<2x128xf32> to vector<2x32xf32>
    %455 = arith.negf %454 : vector<2x32xf32>
    %456 = math.exp %455 : vector<2x32xf32>
    %cst_122 = arith.constant 1.000000e+00 : f32
    %457 = vector.broadcast %cst_122 : f32 to vector<2x32xf32>
    %458 = arith.addf %457, %456 : vector<2x32xf32>
    %459 = arith.divf %457, %458 : vector<2x32xf32>
    %460 = vector.extract_strided_slice %422 {offsets = [0, 64], sizes = [2, 32], strides = [1, 1]} : vector<2x128xf32> to vector<2x32xf32>
    %461 = math.tanh %460 : vector<2x32xf32>
    %462 = vector.extract_strided_slice %422 {offsets = [0, 96], sizes = [2, 32], strides = [1, 1]} : vector<2x128xf32> to vector<2x32xf32>
    %463 = arith.negf %462 : vector<2x32xf32>
    %464 = math.exp %463 : vector<2x32xf32>
    %cst_123 = arith.constant 1.000000e+00 : f32
    %465 = vector.broadcast %cst_123 : f32 to vector<2x32xf32>
    %466 = arith.addf %465, %464 : vector<2x32xf32>
    %467 = arith.divf %465, %466 : vector<2x32xf32>
    %468 = arith.mulf %459, %403 : vector<2x32xf32>
    %469 = arith.mulf %453, %461 : vector<2x32xf32>
    %470 = arith.addf %468, %469 : vector<2x32xf32>
    %471 = math.tanh %470 : vector<2x32xf32>
    %472 = arith.mulf %467, %471 : vector<2x32xf32>
    %c2_i32_124 = arith.constant 2 : i32
    %473 = arith.muli %c6_i32, %c2_i32_124 : i32
    %474 = arith.index_cast %473 : i32 to index
    %c0_125 = arith.constant 0 : index
    %475 = vector.load %arg8[%474, %c0_125] : memref<16x64xf32, #tpu.memory_space<vmem>>, vector<2x32xf32>
    tpu.vector_store %arg8[%474, %c0_125], %447 {strides = array<i32>} : memref<16x64xf32, #tpu.memory_space<vmem>>, vector<2x32xf32>,
    %c2_i32_126 = arith.constant 2 : i32
    %476 = arith.muli %412, %c2_i32_126 : i32
    %477 = arith.index_cast %476 : i32 to index
    %c32_127 = arith.constant 32 : index
    %478 = vector.load %arg8[%477, %c32_127] : memref<16x64xf32, #tpu.memory_space<vmem>>, vector<2x32xf32>
    tpu.vector_store %arg8[%477, %c32_127], %472 {strides = array<i32>} : memref<16x64xf32, #tpu.memory_space<vmem>>, vector<2x32xf32>,
    %c7_i32_128 = arith.constant 7 : i32
    %c7_i32_129 = arith.constant 7 : i32
    %479 = arith.subi %c7_i32_129, %c7_i32_128 : i32
    %c2_i32_130 = arith.constant 2 : i32
    %480 = arith.muli %c7_i32_128, %c2_i32_130 : i32
    %481 = arith.index_cast %480 : i32 to index
    %c0_131 = arith.constant 0 : index
    %482 = vector.load %arg9[%481, %c0_131] : memref<16x256xf32, #tpu.memory_space<vmem>>, vector<2x128xf32>
    %c2_i32_132 = arith.constant 2 : i32
    %483 = arith.muli %479, %c2_i32_132 : i32
    %484 = arith.index_cast %483 : i32 to index
    %c128_133 = arith.constant 128 : index
    %485 = vector.load %arg9[%484, %c128_133] : memref<16x256xf32, #tpu.memory_space<vmem>>, vector<2x128xf32>
    %cst_134 = arith.constant dense<0.000000e+00> : vector<2x128xf32>
    %486 = tpu.matmul %447, %7, %cst_134 {dimension_numbers = #tpu.dot_dimension_numbers<[1], [0], [0], [1], [0, 0, 1, 1], [], []>} : vector<2x32xf32>, vector<32x128xf32>, vector<2x128xf32> -> vector<2x128xf32>
    %487 = arith.addf %482, %486 : vector<2x128xf32>
    %cst_135 = arith.constant dense<0.000000e+00> : vector<2x128xf32>
    %488 = tpu.matmul %472, %8, %cst_135 {dimension_numbers = #tpu.dot_dimension_numbers<[1], [0], [0], [1], [0, 0, 1, 1], [], []>} : vector<2x32xf32>, vector<32x128xf32>, vector<2x128xf32> -> vector<2x128xf32>
    %489 = arith.addf %485, %488 : vector<2x128xf32>
    %490 = vector.extract_strided_slice %487 {offsets = [0, 0], sizes = [2, 32], strides = [1, 1]} : vector<2x128xf32> to vector<2x32xf32>
    %491 = arith.negf %490 : vector<2x32xf32>
    %492 = math.exp %491 : vector<2x32xf32>
    %cst_136 = arith.constant 1.000000e+00 : f32
    %493 = vector.broadcast %cst_136 : f32 to vector<2x32xf32>
    %494 = arith.addf %493, %492 : vector<2x32xf32>
    %495 = arith.divf %493, %494 : vector<2x32xf32>
    %496 = vector.extract_strided_slice %487 {offsets = [0, 32], sizes = [2, 32], strides = [1, 1]} : vector<2x128xf32> to vector<2x32xf32>
    %497 = arith.negf %496 : vector<2x32xf32>
    %498 = math.exp %497 : vector<2x32xf32>
    %cst_137 = arith.constant 1.000000e+00 : f32
    %499 = vector.broadcast %cst_137 : f32 to vector<2x32xf32>
    %500 = arith.addf %499, %498 : vector<2x32xf32>
    %501 = arith.divf %499, %500 : vector<2x32xf32>
    %502 = vector.extract_strided_slice %487 {offsets = [0, 64], sizes = [2, 32], strides = [1, 1]} : vector<2x128xf32> to vector<2x32xf32>
    %503 = math.tanh %502 : vector<2x32xf32>
    %504 = vector.extract_strided_slice %487 {offsets = [0, 96], sizes = [2, 32], strides = [1, 1]} : vector<2x128xf32> to vector<2x32xf32>
    %505 = arith.negf %504 : vector<2x32xf32>
    %506 = math.exp %505 : vector<2x32xf32>
    %cst_138 = arith.constant 1.000000e+00 : f32
    %507 = vector.broadcast %cst_138 : f32 to vector<2x32xf32>
    %508 = arith.addf %507, %506 : vector<2x32xf32>
    %509 = arith.divf %507, %508 : vector<2x32xf32>
    %510 = arith.mulf %501, %445 : vector<2x32xf32>
    %511 = arith.mulf %495, %503 : vector<2x32xf32>
    %512 = arith.addf %510, %511 : vector<2x32xf32>
    %513 = math.tanh %512 : vector<2x32xf32>
    %514 = arith.mulf %509, %513 : vector<2x32xf32>
    %515 = vector.extract_strided_slice %489 {offsets = [0, 0], sizes = [2, 32], strides = [1, 1]} : vector<2x128xf32> to vector<2x32xf32>
    %516 = arith.negf %515 : vector<2x32xf32>
    %517 = math.exp %516 : vector<2x32xf32>
    %cst_139 = arith.constant 1.000000e+00 : f32
    %518 = vector.broadcast %cst_139 : f32 to vector<2x32xf32>
    %519 = arith.addf %518, %517 : vector<2x32xf32>
    %520 = arith.divf %518, %519 : vector<2x32xf32>
    %521 = vector.extract_strided_slice %489 {offsets = [0, 32], sizes = [2, 32], strides = [1, 1]} : vector<2x128xf32> to vector<2x32xf32>
    %522 = arith.negf %521 : vector<2x32xf32>
    %523 = math.exp %522 : vector<2x32xf32>
    %cst_140 = arith.constant 1.000000e+00 : f32
    %524 = vector.broadcast %cst_140 : f32 to vector<2x32xf32>
    %525 = arith.addf %524, %523 : vector<2x32xf32>
    %526 = arith.divf %524, %525 : vector<2x32xf32>
    %527 = vector.extract_strided_slice %489 {offsets = [0, 64], sizes = [2, 32], strides = [1, 1]} : vector<2x128xf32> to vector<2x32xf32>
    %528 = math.tanh %527 : vector<2x32xf32>
    %529 = vector.extract_strided_slice %489 {offsets = [0, 96], sizes = [2, 32], strides = [1, 1]} : vector<2x128xf32> to vector<2x32xf32>
    %530 = arith.negf %529 : vector<2x32xf32>
    %531 = math.exp %530 : vector<2x32xf32>
    %cst_141 = arith.constant 1.000000e+00 : f32
    %532 = vector.broadcast %cst_141 : f32 to vector<2x32xf32>
    %533 = arith.addf %532, %531 : vector<2x32xf32>
    %534 = arith.divf %532, %533 : vector<2x32xf32>
    %535 = arith.mulf %526, %470 : vector<2x32xf32>
    %536 = arith.mulf %520, %528 : vector<2x32xf32>
    %537 = arith.addf %535, %536 : vector<2x32xf32>
    %538 = math.tanh %537 : vector<2x32xf32>
    %539 = arith.mulf %534, %538 : vector<2x32xf32>
    %c2_i32_142 = arith.constant 2 : i32
    %540 = arith.muli %c7_i32_128, %c2_i32_142 : i32
    %541 = arith.index_cast %540 : i32 to index
    %c0_143 = arith.constant 0 : index
    %542 = vector.load %arg8[%541, %c0_143] : memref<16x64xf32, #tpu.memory_space<vmem>>, vector<2x32xf32>
    tpu.vector_store %arg8[%541, %c0_143], %514 {strides = array<i32>} : memref<16x64xf32, #tpu.memory_space<vmem>>, vector<2x32xf32>,
    %c2_i32_144 = arith.constant 2 : i32
    %543 = arith.muli %479, %c2_i32_144 : i32
    %544 = arith.index_cast %543 : i32 to index
    %c32_145 = arith.constant 32 : index
    %545 = vector.load %arg8[%544, %c32_145] : memref<16x64xf32, #tpu.memory_space<vmem>>, vector<2x32xf32>
    tpu.vector_store %arg8[%544, %c32_145], %539 {strides = array<i32>} : memref<16x64xf32, #tpu.memory_space<vmem>>, vector<2x32xf32>,
    %c8_i32 = arith.constant 8 : i32
    %c0_146 = arith.constant 0 : index
    %c0_147 = arith.constant 0 : index
    %546 = vector.load %arg8[%c0_146, %c0_147] : memref<16x64xf32, #tpu.memory_space<vmem>>, vector<16x64xf32>
    %c0_148 = arith.constant 0 : index
    %c0_149 = arith.constant 0 : index
    %547 = vector.load %arg5[%c0_148, %c0_149] : memref<64x8xf32, #tpu.memory_space<vmem>>, vector<64x8xf32>
    %cst_150 = arith.constant dense<0.000000e+00> : vector<16x8xf32>
    %548 = tpu.matmul %546, %547, %cst_150 {dimension_numbers = #tpu.dot_dimension_numbers<[1], [0], [0], [1], [0, 0, 1, 1], [], []>} : vector<16x64xf32>, vector<64x8xf32>, vector<16x8xf32> -> vector<16x8xf32>
    %c0_151 = arith.constant 0 : index
    %c0_152 = arith.constant 0 : index
    %549 = vector.load %arg6[%c0_151, %c0_152] : memref<1x8xf32, #tpu.memory_space<vmem>>, vector<1x8xf32>
    %550 = vector.broadcast %549 : vector<1x8xf32> to vector<16x8xf32>
    %551 = arith.addf %548, %550 : vector<16x8xf32>
    %c0_153 = arith.constant 0 : index
    %c0_154 = arith.constant 0 : index
    %552 = vector.load %arg7[%c0_153, %c0_154] : memref<16x8xf32, #tpu.memory_space<vmem>>, vector<16x8xf32>
    tpu.vector_store %arg7[%c0_153, %c0_154], %551 {strides = array<i32>} : memref<16x8xf32, #tpu.memory_space<vmem>>, vector<16x8xf32>,
    return
  }
}

</mosaic_0001>

<llo_original>
// kernel: lstm_ner_forward.3
$region0: #{lstm_ner_forward.3}
  #allocation0 [shape = 'u32[]', space=smem, size = 0x4, offset = 0x4, fixed_abs, tag = 'smem constant byte address 0x4 - core index']
  #allocation1 [shape = 'u32[144,128]{1,0:T(1,128)}', space=vmem, size = 0x12000, scoped, tag = 'internal scratch']
  #allocation2 [shape = 'f32[16,64]{1,0:T(8,128)}', space=vmem, size = 0x2000, scoped, tag = 'scratch operand']
  #allocation3 [shape = 'f32[16,256]{1,0:T(8,128)}', space=vmem, size = 0x4000, scoped, tag = 'scratch operand']
  %s0 = inlined_call_operand.vmem [shape: f32[16,64], index: 0, kind: input, shape index: {}]
  %s1 = inlined_call_operand.vmem [shape: f32[64,256], index: 1, kind: input, shape index: {}]
  %s2 = inlined_call_operand.vmem [shape: f32[32,128], index: 2, kind: input, shape index: {}]
  %s3 = inlined_call_operand.vmem [shape: f32[32,128], index: 3, kind: input, shape index: {}]
  %s4 = inlined_call_operand.vmem [shape: f32[1,256], index: 4, kind: input, shape index: {}]
  %s5 = inlined_call_operand.vmem [shape: f32[64,8], index: 5, kind: input, shape index: {}]
  %s6 = inlined_call_operand.vmem [shape: f32[1,8], index: 6, kind: input, shape index: {}]
  %s7 = inlined_call_operand.vmem [shape: f32[16,8], index: 7, kind: output, shape index: {}]
  %s8 = sld [smem:[#allocation0]]
  $region38: #{lstm_ner_forward.3} parent=0
    _
  %s10 = ssub.s32 1, %s8
  %s11 = scalar_select 0, %s10, %s8
  // Predicated region
  $region2: #{lstm_ner_forward.3} parent=0 // pred_check
    _
  $region3: #{lstm_ner_forward.3} parent=0 // pred_check_branch
    %13 = sbr.rel (0) target = $region5
  $region4: #{lstm_ner_forward.3} parent=0 // pred_region
    _
  $region5: #{lstm_ner_forward.3} parent=0 // pred_fallthru
    _
  // Predicated region
  $region6: #{lstm_ner_forward.3} parent=0 // pred_check
    _
  $region7: #{lstm_ner_forward.3} parent=0 // pred_check_branch
    %15 = sbr.rel (0) target = $region9
  $region8: #{lstm_ner_forward.3} parent=0 // pred_region
    _
  $region9: #{lstm_ner_forward.3} parent=0 // pred_fallthru
    _
  // Predicated region
  $region10: #{lstm_ner_forward.3} parent=0 // pred_check
    _
  $region11: #{lstm_ner_forward.3} parent=0 // pred_check_branch
    %17 = sbr.rel (0) target = $region13
  $region12: #{lstm_ner_forward.3} parent=0 // pred_region
    _
  $region13: #{lstm_ner_forward.3} parent=0 // pred_fallthru
    _
  // Predicated region
  $region14: #{lstm_ner_forward.3} parent=0 // pred_check
    _
  $region15: #{lstm_ner_forward.3} parent=0 // pred_check_branch
    %19 = sbr.rel (0) target = $region17
  $region16: #{lstm_ner_forward.3} parent=0 // pred_region
    _
  $region17: #{lstm_ner_forward.3} parent=0 // pred_fallthru
    _
  // Predicated region
  $region18: #{lstm_ner_forward.3} parent=0 // pred_check
    _
  $region19: #{lstm_ner_forward.3} parent=0 // pred_check_branch
    %21 = sbr.rel (0) target = $region21
  $region20: #{lstm_ner_forward.3} parent=0 // pred_region
    _
  $region21: #{lstm_ner_forward.3} parent=0 // pred_fallthru
    _
  // Predicated region
  $region22: #{lstm_ner_forward.3} parent=0 // pred_check
    _
  $region23: #{lstm_ner_forward.3} parent=0 // pred_check_branch
    %23 = sbr.rel (0) target = $region25
  $region24: #{lstm_ner_forward.3} parent=0 // pred_region
    _
  $region25: #{lstm_ner_forward.3} parent=0 // pred_fallthru
    _
  // Predicated region
  $region26: #{lstm_ner_forward.3} parent=0 // pred_check
    _
  $region27: #{lstm_ner_forward.3} parent=0 // pred_check_branch
    %25 = sbr.rel (0) target = $region29
  $region28: #{lstm_ner_forward.3} parent=0 // pred_region
    _
  $region29: #{lstm_ner_forward.3} parent=0 // pred_fallthru
    _
  %v26 = vld [vmem:[%s0] sm:$0xff]
  %v27 = vld [vmem:[%s0 + $0x8] sm:$0xff]
  %v28 = vld [vmem:[%s1] sm:$0xff]
  %v29 = vld [vmem:[%s1 + $0x8] sm:$0xff]
  %v30 = vld [vmem:[%s1 + $0x10] sm:$0xff]
  %v31 = vld [vmem:[%s1 + $0x18] sm:$0xff]
  %v32 = vld [vmem:[%s1 + $0x20] sm:$0xff]
  %v33 = vld [vmem:[%s1 + $0x28] sm:$0xff]
  %v34 = vld [vmem:[%s1 + $0x30] sm:$0xff]
  %v35 = vld [vmem:[%s1 + $0x38] sm:$0xff]
  %v36 = vld [vmem:[%s1 + $0x40] sm:$0xff]
  %v37 = vld [vmem:[%s1 + $0x48] sm:$0xff]
  %v38 = vld [vmem:[%s1 + $0x50] sm:$0xff]
  %v39 = vld [vmem:[%s1 + $0x58] sm:$0xff]
  %v40 = vld [vmem:[%s1 + $0x60] sm:$0xff]
  %v41 = vld [vmem:[%s1 + $0x68] sm:$0xff]
  %v42 = vld [vmem:[%s1 + $0x70] sm:$0xff]
  %v43 = vld [vmem:[%s1 + $0x78] sm:$0xff]
  %v44 = vld [vmem:[%s4] sm:$0x3]
  %v46 = vlaneseq
  %v47 = vshrl.u32 %v46, 7
  %v48 = vsub.s32 0, %v47
  %v49 = vrot.slane %v44, %v48
  %v50 = vlaneseq
  %v51 = vshrl.u32 %v50, 7
  %v52 = vsub.s32 1, %v51
  %v53 = vrot.slane %v44, %v52
  %vm56 = vcmask 523264
  %v58 = vsel %vm56, %v26, 0
  %v61 = vsel %vm56, %v27, 0
  %63 = vmatprep.subr.mxu0 %v29
  %64 = vmatpush1.msra.mxu0 %v28
  %65 = vmatprep.subr.mxu0 %v31
  %66 = vmatpush1.msra.mxu0 %v30
  %67 = vmatprep.subr.mxu0 %v33
  %68 = vmatpush1.msra.mxu0 %v32
  %69 = vmatprep.subr.mxu0 %v35
  %70 = vmatpush1.msra.mxu0 %v34
  %71 = vmatprep.subr.mxu0 %v37
  %72 = vmatpush1.msra.mxu0 %v36
  %73 = vmatprep.subr.mxu0 %v39
  %74 = vmatpush1.msra.mxu0 %v38
  %75 = vmatprep.subr.mxu0 %v41
  %76 = vmatpush1.msra.mxu0 %v40
  %77 = vmatprep.subr.mxu0 %v43
  %78 = vmatpush1.msra.mxu0 %v42
  %79 = vmatprep.subr.mxu0 0.0
  %80 = vmatpush1.msra.mxu0 0.0
  %81 = vmatprep.subr.mxu0 0.0
  %82 = vmatpush1.msra.mxu0 0.0
  %83 = vmatprep.subr.mxu0 0.0
  %84 = vmatpush1.msra.mxu0 0.0
  %85 = vmatprep.subr.mxu0 0.0
  %86 = vmatpush1.msra.mxu0 0.0
  %87 = vmatprep.subr.mxu0 0.0
  %88 = vmatpush1.msra.mxu0 0.0
  %89 = vmatprep.subr.mxu0 0.0
  %90 = vmatpush1.msra.mxu0 0.0
  %91 = vmatprep.subr.mxu0 0.0
  %92 = vmatpush1.msra.mxu0 0.0
  %93 = vmatprep.subr.mxu0 0.0
  %94 = vmatpush1.msra.mxu0 0.0
  %95 = vmatprep.subr.mxu0 0.0
  %96 = vmatpush1.msra.mxu0 0.0
  %97 = vmatprep.subr.mxu0 0.0
  %98 = vmatpush1.msra.mxu0 0.0
  %99 = vmatprep.subr.mxu0 0.0
  %100 = vmatpush1.msra.mxu0 0.0
  %101 = vmatprep.subr.mxu0 0.0
  %102 = vmatpush1.msra.mxu0 0.0
  %103 = vmatprep.subr.mxu0 0.0
  %104 = vmatpush1.msra.mxu0 0.0
  %105 = vmatprep.subr.mxu0 0.0
  %106 = vmatpush1.msra.mxu0 0.0
  %107 = vmatprep.subr.mxu0 0.0
  %108 = vmatpush1.msra.mxu0 0.0
  %109 = vmatprep.subr.mxu0 0.0
  %110 = vmatpush1.msra.mxu0 0.0
  %111 = vmatprep.subr.mxu0 0.0
  %112 = vmatpush1.msra.mxu0 0.0
  %113 = vmatprep.subr.mxu0 0.0
  %114 = vmatpush1.msra.mxu0 0.0
  %115 = vmatprep.subr.mxu0 0.0
  %116 = vmatpush1.msra.mxu0 0.0
  %117 = vmatprep.subr.mxu0 0.0
  %118 = vmatpush1.msra.mxu0 0.0
  %119 = vmatprep.subr.mxu0 0.0
  %120 = vmatpush1.msra.mxu0 0.0
  %121 = vmatprep.subr.mxu0 0.0
  %122 = vmatpush1.msra.mxu0 0.0
  %123 = vmatprep.subr.mxu0 0.0
  %124 = vmatpush1.msra.mxu0 0.0
  %125 = vmatprep.subr.mxu0 0.0
  %126 = vmatpush1.msra.mxu0 0.0
  %127 = vmatprep.mubr.f32.mxu0 0.0
  %128 = vmatmul.mubr.f32.gmra.mrb[0].mxu0 %v58
  %v129 = vpop.f32.mrb[0].mxu0
  %v130 = vadd.f32 %v49, %v129
  %v131 = vpop.f32.mrb[0].mxu0
  %v132 = vadd.f32 %v53, %v131
  %133 = vmatprep.mubr.f32.mxu0 0.0
  %134 = vmatmul.mubr.f32.gmra.mrb[0].mxu0 %v61
  %v135 = vpop.f32.mrb[0].mxu0
  %v136 = vadd.f32 %v49, %v135
  %v137 = vpop.f32.mrb[0].mxu0
  %v138 = vadd.f32 %v53, %v137
  %139 = vdwg.mxu0
  %140 = vst [vmem:[#allocation3] sm:$0xff] %v130
  %141 = vst [vmem:[#allocation3 + $0x8] sm:$0xff] %v132
  %142 = vst [vmem:[#allocation3 + $0x10] sm:$0xff] %v136
  %143 = vst [vmem:[#allocation3 + $0x18] sm:$0xff] %v138
  %v144 = vld [vmem:[%s2] sm:$0xff]
  %v145 = vld [vmem:[%s2 + $0x8] sm:$0xff]
  %v146 = vld [vmem:[%s2 + $0x10] sm:$0xff]
  %v147 = vld [vmem:[%s2 + $0x18] sm:$0xff]
  %v148 = vld [vmem:[%s3] sm:$0xff]
  %v149 = vld [vmem:[%s3 + $0x8] sm:$0xff]
  %v150 = vld [vmem:[%s3 + $0x10] sm:$0xff]
  %v151 = vld [vmem:[%s3 + $0x18] sm:$0xff]
  %v152 = vld [vmem:[#allocation3] sm:$0x3]
  %v153 = vld [vmem:[#allocation3 + $0x18] sm:$0xc0]
  %vm154 = vcmask 261120
  %v156 = vsel %vm154, 0.0, 0
  %158 = vmatprep.subr.mxu0 0.0
  %159 = vmatpush1.msra.mxu0 %v144
  %160 = vmatprep.subr.mxu0 0.0
  %161 = vmatpush1.msra.mxu0 %v145
  %162 = vmatprep.subr.mxu0 0.0
  %163 = vmatpush1.msra.mxu0 %v146
  %164 = vmatprep.subr.mxu0 0.0
  %165 = vmatpush1.msra.mxu0 %v147
  %166 = vmatprep.subr.mxu0 0.0
  %167 = vmatpush1.msra.mxu0 0.0
  %168 = vmatprep.subr.mxu0 0.0
  %169 = vmatpush1.msra.mxu0 0.0
  %170 = vmatprep.subr.mxu0 0.0
  %171 = vmatpush1.msra.mxu0 0.0
  %172 = vmatprep.subr.mxu0 0.0
  %173 = vmatpush1.msra.mxu0 0.0
  %174 = vmatprep.subr.mxu0 0.0
  %175 = vmatpush1.msra.mxu0 0.0
  %176 = vmatprep.subr.mxu0 0.0
  %177 = vmatpush1.msra.mxu0 0.0
  %178 = vmatprep.subr.mxu0 0.0
  %179 = vmatpush1.msra.mxu0 0.0
  %180 = vmatprep.subr.mxu0 0.0
  %181 = vmatpush1.msra.mxu0 0.0
  %182 = vmatprep.subr.mxu0 0.0
  %183 = vmatpush1.msra.mxu0 0.0
  %184 = vmatprep.subr.mxu0 0.0
  %185 = vmatpush1.msra.mxu0 0.0
  %186 = vmatprep.subr.mxu0 0.0
  %187 = vmatpush1.msra.mxu0 0.0
  %188 = vmatprep.subr.mxu0 0.0
  %189 = vmatpush1.msra.mxu0 0.0
  %190 = vmatprep.subr.mxu0 0.0
  %191 = vmatpush1.msra.mxu0 0.0
  %192 = vmatprep.subr.mxu0 0.0
  %193 = vmatpush1.msra.mxu0 0.0
  %194 = vmatprep.subr.mxu0 0.0
  %195 = vmatpush1.msra.mxu0 0.0
  %196 = vmatprep.subr.mxu0 0.0
  %197 = vmatpush1.msra.mxu0 0.0
  %198 = vmatprep.subr.mxu0 0.0
  %199 = vmatpush1.msra.mxu0 0.0
  %200 = vmatprep.subr.mxu0 0.0
  %201 = vmatpush1.msra.mxu0 0.0
  %202 = vmatprep.subr.mxu0 0.0
  %203 = vmatpush1.msra.mxu0 0.0
  %204 = vmatprep.subr.mxu0 0.0
  %205 = vmatpush1.msra.mxu0 0.0
  %206 = vmatprep.subr.mxu0 0.0
  %207 = vmatpush1.msra.mxu0 0.0
  %208 = vmatprep.subr.mxu0 0.0
  %209 = vmatpush1.msra.mxu0 0.0
  %210 = vmatprep.subr.mxu0 0.0
  %211 = vmatpush1.msra.mxu0 0.0
  %212 = vmatprep.subr.mxu0 0.0
  %213 = vmatpush1.msra.mxu0 0.0
  %214 = vmatprep.subr.mxu0 0.0
  %215 = vmatpush1.msra.mxu0 0.0
  %216 = vmatprep.subr.mxu0 0.0
  %217 = vmatpush1.msra.mxu0 0.0
  %218 = vmatprep.subr.mxu0 0.0
  %219 = vmatpush1.msra.mxu0 0.0
  %220 = vmatprep.subr.mxu0 0.0
  %221 = vmatpush1.msra.mxu0 0.0
  %222 = vmatprep.mubr.f32.mxu0 0.0
  %223 = vmatmul.mubr.f32.gmra.mrb[0].mxu0 %v156
  %v224 = vpop.f32.mrb[0].mxu0
  %v225 = vadd.f32 0.0, %v224
  %v226 = vpop.f32.mrb[0].mxu0
  %227 = vdwg.mxu0
  %v228 = vadd.f32 %v152, %v225
  %229 = vmatprep.subr.mxu0 0.0
  %230 = vmatpush1.msra.mxu0 %v148
  %231 = vmatprep.subr.mxu0 0.0
  %232 = vmatpush1.msra.mxu0 %v149
  %233 = vmatprep.subr.mxu0 0.0
  %234 = vmatpush1.msra.mxu0 %v150
  %235 = vmatprep.subr.mxu0 0.0
  %236 = vmatpush1.msra.mxu0 %v151
  %237 = vmatprep.subr.mxu0 0.0
  %238 = vmatpush1.msra.mxu0 0.0
  %239 = vmatprep.subr.mxu0 0.0
  %240 = vmatpush1.msra.mxu0 0.0
  %241 = vmatprep.subr.mxu0 0.0
  %242 = vmatpush1.msra.mxu0 0.0
  %243 = vmatprep.subr.mxu0 0.0
  %244 = vmatpush1.msra.mxu0 0.0
  %245 = vmatprep.subr.mxu0 0.0
  %246 = vmatpush1.msra.mxu0 0.0
  %247 = vmatprep.subr.mxu0 0.0
  %248 = vmatpush1.msra.mxu0 0.0
  %249 = vmatprep.subr.mxu0 0.0
  %250 = vmatpush1.msra.mxu0 0.0
  %251 = vmatprep.subr.mxu0 0.0
  %252 = vmatpush1.msra.mxu0 0.0
  %253 = vmatprep.subr.mxu0 0.0
  %254 = vmatpush1.msra.mxu0 0.0
  %255 = vmatprep.subr.mxu0 0.0
  %256 = vmatpush1.msra.mxu0 0.0
  %257 = vmatprep.subr.mxu0 0.0
  %258 = vmatpush1.msra.mxu0 0.0
  %259 = vmatprep.subr.mxu0 0.0
  %260 = vmatpush1.msra.mxu0 0.0
  %261 = vmatprep.subr.mxu0 0.0
  %262 = vmatpush1.msra.mxu0 0.0
  %263 = vmatprep.subr.mxu0 0.0
  %264 = vmatpush1.msra.mxu0 0.0
  %265 = vmatprep.subr.mxu0 0.0
  %266 = vmatpush1.msra.mxu0 0.0
  %267 = vmatprep.subr.mxu0 0.0
  %268 = vmatpush1.msra.mxu0 0.0
  %269 = vmatprep.subr.mxu0 0.0
  %270 = vmatpush1.msra.mxu0 0.0
  %271 = vmatprep.subr.mxu0 0.0
  %272 = vmatpush1.msra.mxu0 0.0
  %273 = vmatprep.subr.mxu0 0.0
  %274 = vmatpush1.msra.mxu0 0.0
  %275 = vmatprep.subr.mxu0 0.0
  %276 = vmatpush1.msra.mxu0 0.0
  %277 = vmatprep.subr.mxu0 0.0
  %278 = vmatpush1.msra.mxu0 0.0
  %279 = vmatprep.subr.mxu0 0.0
  %280 = vmatpush1.msra.mxu0 0.0
  %281 = vmatprep.subr.mxu0 0.0
  %282 = vmatpush1.msra.mxu0 0.0
  %283 = vmatprep.subr.mxu0 0.0
  %284 = vmatpush1.msra.mxu0 0.0
  %285 = vmatprep.subr.mxu0 0.0
  %286 = vmatpush1.msra.mxu0 0.0
  %287 = vmatprep.subr.mxu0 0.0
  %288 = vmatpush1.msra.mxu0 0.0
  %289 = vmatprep.subr.mxu0 0.0
  %290 = vmatpush1.msra.mxu0 0.0
  %291 = vmatprep.subr.mxu0 0.0
  %292 = vmatpush1.msra.mxu0 0.0
  %293 = vmatprep.mubr.f32.mxu0 0.0
  %294 = vmatmul.mubr.f32.gmra.mrb[0].mxu0 %v156
  %v295 = vpop.f32.mrb[0].mxu0
  %v296 = vadd.f32 0.0, %v295
  %v297 = vpop.f32.mrb[0].mxu0
  %298 = vdwg.mxu0
  %v300 = vrot.slane %v296, 2
  %v302 = vadd.f32 %v153, %v300
  %v303 = vxor.u32 %v228, 2147483648
  %v304 = vmul.f32 %v303, 1.442695
  %v305 = vpow.pop %v304
  %v306 = vadd.f32 %v305, 1.0
  %v307 = vrcp.pop %v306
  %v308 = vmul.f32 1.0, %v307
  %v309 = vtanh.pop %v228
  %v310 = vmul.f32 %v308, 0.0
  %312 = vrot.lane.b32.xlu0 %v309, 64
  %v313 = vpop.permute.xlu0 %312
  %v315 = vmul.f32 %v308, %v313
  %317 = vrot.lane.b32.xlu0 %v315, 32
  %v318 = vpop.permute.xlu0 %317
  %v320 = vadd.f32 %v310, %v318
  %v321 = vtanh.pop %v320
  %323 = vrot.lane.b32.xlu0 %v321, 64
  %v324 = vpop.permute.xlu0 %323
  %v326 = vmul.f32 %v308, %v324
  %v327 = vxor.u32 %v302, 2147483648
  %v328 = vmul.f32 %v327, 1.442695
  %v329 = vpow.pop %v328
  %v330 = vadd.f32 %v329, 1.0
  %v331 = vrcp.pop %v330
  %v332 = vmul.f32 1.0, %v331
  %v333 = vtanh.pop %v302
  %v334 = vmul.f32 %v332, 0.0
  %336 = vrot.lane.b32.xlu0 %v333, 64
  %v337 = vpop.permute.xlu0 %336
  %v339 = vmul.f32 %v332, %v337
  %341 = vrot.lane.b32.xlu0 %v339, 32
  %v342 = vpop.permute.xlu0 %341
  %v344 = vadd.f32 %v334, %v342
  %v345 = vtanh.pop %v344
  %347 = vrot.lane.b32.xlu0 %v345, 64
  %v348 = vpop.permute.xlu0 %347
  %v350 = vmul.f32 %v332, %v348
  %352 = vrot.lane.b32.xlu0 %v326, 32
  %v353 = vpop.permute.xlu0 %352
  %vm355 = vcmask 254976
  %356 = vst.msk [vmem:[#allocation2] sm:$0x3] %vm355, %v353
  %358 = vrot.lane.b32.xlu0 %v350, 64
  %v359 = vpop.permute.xlu0 %358
  %vm361 = vcmask 523526
  %362 = vst.msk [vmem:[#allocation2 + $0x8] sm:$0xc0] %vm361, %v359
  %v363 = vld [vmem:[#allocation3] sm:$0xc]
  %v364 = vld [vmem:[#allocation3 + $0x18] sm:$0x30]
  %v365 = vsel %vm154, %v353, 0
  %367 = vmatprep.subr.mxu0 0.0
  %368 = vmatpush1.msra.mxu0 %v144
  %369 = vmatprep.subr.mxu0 0.0
  %370 = vmatpush1.msra.mxu0 %v145
  %371 = vmatprep.subr.mxu0 0.0
  %372 = vmatpush1.msra.mxu0 %v146
  %373 = vmatprep.subr.mxu0 0.0
  %374 = vmatpush1.msra.mxu0 %v147
  %375 = vmatprep.subr.mxu0 0.0
  %376 = vmatpush1.msra.mxu0 0.0
  %377 = vmatprep.subr.mxu0 0.0
  %378 = vmatpush1.msra.mxu0 0.0
  %379 = vmatprep.subr.mxu0 0.0
  %380 = vmatpush1.msra.mxu0 0.0
  %381 = vmatprep.subr.mxu0 0.0
  %382 = vmatpush1.msra.mxu0 0.0
  %383 = vmatprep.subr.mxu0 0.0
  %384 = vmatpush1.msra.mxu0 0.0
  %385 = vmatprep.subr.mxu0 0.0
  %386 = vmatpush1.msra.mxu0 0.0
  %387 = vmatprep.subr.mxu0 0.0
  %388 = vmatpush1.msra.mxu0 0.0
  %389 = vmatprep.subr.mxu0 0.0
  %390 = vmatpush1.msra.mxu0 0.0
  %391 = vmatprep.subr.mxu0 0.0
  %392 = vmatpush1.msra.mxu0 0.0
  %393 = vmatprep.subr.mxu0 0.0
  %394 = vmatpush1.msra.mxu0 0.0
  %395 = vmatprep.subr.mxu0 0.0
  %396 = vmatpush1.msra.mxu0 0.0
  %397 = vmatprep.subr.mxu0 0.0
  %398 = vmatpush1.msra.mxu0 0.0
  %399 = vmatprep.subr.mxu0 0.0
  %400 = vmatpush1.msra.mxu0 0.0
  %401 = vmatprep.subr.mxu0 0.0
  %402 = vmatpush1.msra.mxu0 0.0
  %403 = vmatprep.subr.mxu0 0.0
  %404 = vmatpush1.msra.mxu0 0.0
  %405 = vmatprep.subr.mxu0 0.0
  %406 = vmatpush1.msra.mxu0 0.0
  %407 = vmatprep.subr.mxu0 0.0
  %408 = vmatpush1.msra.mxu0 0.0
  %409 = vmatprep.subr.mxu0 0.0
  %410 = vmatpush1.msra.mxu0 0.0
  %411 = vmatprep.subr.mxu0 0.0
  %412 = vmatpush1.msra.mxu0 0.0
  %413 = vmatprep.subr.mxu0 0.0
  %414 = vmatpush1.msra.mxu0 0.0
  %415 = vmatprep.subr.mxu0 0.0
  %416 = vmatpush1.msra.mxu0 0.0
  %417 = vmatprep.subr.mxu0 0.0
  %418 = vmatpush1.msra.mxu0 0.0
  %419 = vmatprep.subr.mxu0 0.0
  %420 = vmatpush1.msra.mxu0 0.0
  %421 = vmatprep.subr.mxu0 0.0
  %422 = vmatpush1.msra.mxu0 0.0
  %423 = vmatprep.subr.mxu0 0.0
  %424 = vmatpush1.msra.mxu0 0.0
  %425 = vmatprep.subr.mxu0 0.0
  %426 = vmatpush1.msra.mxu0 0.0
  %427 = vmatprep.subr.mxu0 0.0
  %428 = vmatpush1.msra.mxu0 0.0
  %429 = vmatprep.subr.mxu0 0.0
  %430 = vmatpush1.msra.mxu0 0.0
  %431 = vmatprep.mubr.f32.mxu0 0.0
  %432 = vmatmul.mubr.f32.gmra.mrb[0].mxu0 %v365
  %v433 = vpop.f32.mrb[0].mxu0
  %v434 = vadd.f32 0.0, %v433
  %v435 = vpop.f32.mrb[0].mxu0
  %436 = vdwg.mxu0
  %v438 = vrot.slane %v434, 6
  %v440 = vadd.f32 %v363, %v438
  %v441 = vrot.slane %v350, 6
  %442 = vrot.lane.b32.xlu0 %v441, 32
  %v443 = vpop.permute.xlu0 %442
  %v444 = vsel %vm154, %v443, 0
  %446 = vmatprep.subr.mxu0 0.0
  %447 = vmatpush1.msra.mxu0 %v148
  %448 = vmatprep.subr.mxu0 0.0
  %449 = vmatpush1.msra.mxu0 %v149
  %450 = vmatprep.subr.mxu0 0.0
  %451 = vmatpush1.msra.mxu0 %v150
  %452 = vmatprep.subr.mxu0 0.0
  %453 = vmatpush1.msra.mxu0 %v151
  %454 = vmatprep.subr.mxu0 0.0
  %455 = vmatpush1.msra.mxu0 0.0
  %456 = vmatprep.subr.mxu0 0.0
  %457 = vmatpush1.msra.mxu0 0.0
  %458 = vmatprep.subr.mxu0 0.0
  %459 = vmatpush1.msra.mxu0 0.0
  %460 = vmatprep.subr.mxu0 0.0
  %461 = vmatpush1.msra.mxu0 0.0
  %462 = vmatprep.subr.mxu0 0.0
  %463 = vmatpush1.msra.mxu0 0.0
  %464 = vmatprep.subr.mxu0 0.0
  %465 = vmatpush1.msra.mxu0 0.0
  %466 = vmatprep.subr.mxu0 0.0
  %467 = vmatpush1.msra.mxu0 0.0
  %468 = vmatprep.subr.mxu0 0.0
  %469 = vmatpush1.msra.mxu0 0.0
  %470 = vmatprep.subr.mxu0 0.0
  %471 = vmatpush1.msra.mxu0 0.0
  %472 = vmatprep.subr.mxu0 0.0
  %473 = vmatpush1.msra.mxu0 0.0
  %474 = vmatprep.subr.mxu0 0.0
  %475 = vmatpush1.msra.mxu0 0.0
  %476 = vmatprep.subr.mxu0 0.0
  %477 = vmatpush1.msra.mxu0 0.0
  %478 = vmatprep.subr.mxu0 0.0
  %479 = vmatpush1.msra.mxu0 0.0
  %480 = vmatprep.subr.mxu0 0.0
  %481 = vmatpush1.msra.mxu0 0.0
  %482 = vmatprep.subr.mxu0 0.0
  %483 = vmatpush1.msra.mxu0 0.0
  %484 = vmatprep.subr.mxu0 0.0
  %485 = vmatpush1.msra.mxu0 0.0
  %486 = vmatprep.subr.mxu0 0.0
  %487 = vmatpush1.msra.mxu0 0.0
  %488 = vmatprep.subr.mxu0 0.0
  %489 = vmatpush1.msra.mxu0 0.0
  %490 = vmatprep.subr.mxu0 0.0
  %491 = vmatpush1.msra.mxu0 0.0
  %492 = vmatprep.subr.mxu0 0.0
  %493 = vmatpush1.msra.mxu0 0.0
  %494 = vmatprep.subr.mxu0 0.0
  %495 = vmatpush1.msra.mxu0 0.0
  %496 = vmatprep.subr.mxu0 0.0
  %497 = vmatpush1.msra.mxu0 0.0
  %498 = vmatprep.subr.mxu0 0.0
  %499 = vmatpush1.msra.mxu0 0.0
  %500 = vmatprep.subr.mxu0 0.0
  %501 = vmatpush1.msra.mxu0 0.0
  %502 = vmatprep.subr.mxu0 0.0
  %503 = vmatpush1.msra.mxu0 0.0
  %504 = vmatprep.subr.mxu0 0.0
  %505 = vmatpush1.msra.mxu0 0.0
  %506 = vmatprep.subr.mxu0 0.0
  %507 = vmatpush1.msra.mxu0 0.0
  %508 = vmatprep.subr.mxu0 0.0
  %509 = vmatpush1.msra.mxu0 0.0
  %510 = vmatprep.mubr.f32.mxu0 0.0
  %511 = vmatmul.mubr.f32.gmra.mrb[0].mxu0 %v444
  %v512 = vpop.f32.mrb[0].mxu0
  %v513 = vadd.f32 0.0, %v512
  %v514 = vpop.f32.mrb[0].mxu0
  %515 = vdwg.mxu0
  %v517 = vrot.slane %v513, 4
  %v519 = vadd.f32 %v364, %v517
  %v520 = vxor.u32 %v440, 2147483648
  %v521 = vmul.f32 %v520, 1.442695
  %v522 = vpow.pop %v521
  %v523 = vadd.f32 %v522, 1.0
  %v524 = vrcp.pop %v523
  %v525 = vmul.f32 1.0, %v524
  %v526 = vtanh.pop %v440
  %v528 = vrot.slane %v320, 6
  %v530 = vmul.f32 %v525, %v528
  %532 = vrot.lane.b32.xlu0 %v526, 64
  %v533 = vpop.permute.xlu0 %532
  %v535 = vmul.f32 %v525, %v533
  %537 = vrot.lane.b32.xlu0 %v535, 32
  %v538 = vpop.permute.xlu0 %537
  %v540 = vadd.f32 %v530, %v538
  %v541 = vtanh.pop %v540
  %543 = vrot.lane.b32.xlu0 %v541, 64
  %v544 = vpop.permute.xlu0 %543
  %v546 = vmul.f32 %v525, %v544
  %v547 = vxor.u32 %v519, 2147483648
  %v548 = vmul.f32 %v547, 1.442695
  %v549 = vpow.pop %v548
  %v550 = vadd.f32 %v549, 1.0
  %v551 = vrcp.pop %v550
  %v552 = vmul.f32 1.0, %v551
  %v553 = vtanh.pop %v519
  %v555 = vrot.slane %v344, 2
  %v557 = vmul.f32 %v552, %v555
  %559 = vrot.lane.b32.xlu0 %v553, 64
  %v560 = vpop.permute.xlu0 %559
  %v562 = vmul.f32 %v552, %v560
  %564 = vrot.lane.b32.xlu0 %v562, 32
  %v565 = vpop.permute.xlu0 %564
  %v567 = vadd.f32 %v557, %v565
  %v568 = vtanh.pop %v567
  %570 = vrot.lane.b32.xlu0 %v568, 64
  %v571 = vpop.permute.xlu0 %570
  %v573 = vmul.f32 %v552, %v571
  %575 = vrot.lane.b32.xlu0 %v546, 32
  %v576 = vpop.permute.xlu0 %575
  %vm578 = vcmask 257026
  %579 = vst.msk [vmem:[#allocation2] sm:$0xc] %vm578, %v576
  %581 = vrot.lane.b32.xlu0 %v573, 64
  %v582 = vpop.permute.xlu0 %581
  %vm584 = vcmask 521476
  %585 = vst.msk [vmem:[#allocation2 + $0x8] sm:$0x30] %vm584, %v582
  %v586 = vld [vmem:[#allocation3] sm:$0x30]
  %v587 = vld [vmem:[#allocation3 + $0x18] sm:$0xc]
  %v588 = vrot.slane %v546, 2
  %589 = vrot.lane.b32.xlu0 %v588, 32
  %v590 = vpop.permute.xlu0 %589
  %v591 = vsel %vm154, %v590, 0
  %593 = vmatprep.subr.mxu0 0.0
  %594 = vmatpush1.msra.mxu0 %v144
  %595 = vmatprep.subr.mxu0 0.0
  %596 = vmatpush1.msra.mxu0 %v145
  %597 = vmatprep.subr.mxu0 0.0
  %598 = vmatpush1.msra.mxu0 %v146
  %599 = vmatprep.subr.mxu0 0.0
  %600 = vmatpush1.msra.mxu0 %v147
  %601 = vmatprep.subr.mxu0 0.0
  %602 = vmatpush1.msra.mxu0 0.0
  %603 = vmatprep.subr.mxu0 0.0
  %604 = vmatpush1.msra.mxu0 0.0
  %605 = vmatprep.subr.mxu0 0.0
  %606 = vmatpush1.msra.mxu0 0.0
  %607 = vmatprep.subr.mxu0 0.0
  %608 = vmatpush1.msra.mxu0 0.0
  %609 = vmatprep.subr.mxu0 0.0
  %610 = vmatpush1.msra.mxu0 0.0
  %611 = vmatprep.subr.mxu0 0.0
  %612 = vmatpush1.msra.mxu0 0.0
  %613 = vmatprep.subr.mxu0 0.0
  %614 = vmatpush1.msra.mxu0 0.0
  %615 = vmatprep.subr.mxu0 0.0
  %616 = vmatpush1.msra.mxu0 0.0
  %617 = vmatprep.subr.mxu0 0.0
  %618 = vmatpush1.msra.mxu0 0.0
  %619 = vmatprep.subr.mxu0 0.0
  %620 = vmatpush1.msra.mxu0 0.0
  %621 = vmatprep.subr.mxu0 0.0
  %622 = vmatpush1.msra.mxu0 0.0
  %623 = vmatprep.subr.mxu0 0.0
  %624 = vmatpush1.msra.mxu0 0.0
  %625 = vmatprep.subr.mxu0 0.0
  %626 = vmatpush1.msra.mxu0 0.0
  %627 = vmatprep.subr.mxu0 0.0
  %628 = vmatpush1.msra.mxu0 0.0
  %629 = vmatprep.subr.mxu0 0.0
  %630 = vmatpush1.msra.mxu0 0.0
  %631 = vmatprep.subr.mxu0 0.0
  %632 = vmatpush1.msra.mxu0 0.0
  %633 = vmatprep.subr.mxu0 0.0
  %634 = vmatpush1.msra.mxu0 0.0
  %635 = vmatprep.subr.mxu0 0.0
  %636 = vmatpush1.msra.mxu0 0.0
  %637 = vmatprep.subr.mxu0 0.0
  %638 = vmatpush1.msra.mxu0 0.0
  %639 = vmatprep.subr.mxu0 0.0
  %640 = vmatpush1.msra.mxu0 0.0
  %641 = vmatprep.subr.mxu0 0.0
  %642 = vmatpush1.msra.mxu0 0.0
  %643 = vmatprep.subr.mxu0 0.0
  %644 = vmatpush1.msra.mxu0 0.0
  %645 = vmatprep.subr.mxu0 0.0
  %646 = vmatpush1.msra.mxu0 0.0
  %647 = vmatprep.subr.mxu0 0.0
  %648 = vmatpush1.msra.mxu0 0.0
  %649 = vmatprep.subr.mxu0 0.0
  %650 = vmatpush1.msra.mxu0 0.0
  %651 = vmatprep.subr.mxu0 0.0
  %652 = vmatpush1.msra.mxu0 0.0
  %653 = vmatprep.subr.mxu0 0.0
  %654 = vmatpush1.msra.mxu0 0.0
  %655 = vmatprep.subr.mxu0 0.0
  %656 = vmatpush1.msra.mxu0 0.0
  %657 = vmatprep.mubr.f32.mxu0 0.0
  %658 = vmatmul.mubr.f32.gmra.mrb[0].mxu0 %v591
  %v659 = vpop.f32.mrb[0].mxu0
  %v660 = vadd.f32 0.0, %v659
  %v661 = vpop.f32.mrb[0].mxu0
  %662 = vdwg.mxu0
  %v664 = vrot.slane %v660, 4
  %v666 = vadd.f32 %v586, %v664
  %v667 = vrot.slane %v573, 4
  %668 = vrot.lane.b32.xlu0 %v667, 32
  %v669 = vpop.permute.xlu0 %668
  %v670 = vsel %vm154, %v669, 0
  %672 = vmatprep.subr.mxu0 0.0
  %673 = vmatpush1.msra.mxu0 %v148
  %674 = vmatprep.subr.mxu0 0.0
  %675 = vmatpush1.msra.mxu0 %v149
  %676 = vmatprep.subr.mxu0 0.0
  %677 = vmatpush1.msra.mxu0 %v150
  %678 = vmatprep.subr.mxu0 0.0
  %679 = vmatpush1.msra.mxu0 %v151
  %680 = vmatprep.subr.mxu0 0.0
  %681 = vmatpush1.msra.mxu0 0.0
  %682 = vmatprep.subr.mxu0 0.0
  %683 = vmatpush1.msra.mxu0 0.0
  %684 = vmatprep.subr.mxu0 0.0
  %685 = vmatpush1.msra.mxu0 0.0
  %686 = vmatprep.subr.mxu0 0.0
  %687 = vmatpush1.msra.mxu0 0.0
  %688 = vmatprep.subr.mxu0 0.0
  %689 = vmatpush1.msra.mxu0 0.0
  %690 = vmatprep.subr.mxu0 0.0
  %691 = vmatpush1.msra.mxu0 0.0
  %692 = vmatprep.subr.mxu0 0.0
  %693 = vmatpush1.msra.mxu0 0.0
  %694 = vmatprep.subr.mxu0 0.0
  %695 = vmatpush1.msra.mxu0 0.0
  %696 = vmatprep.subr.mxu0 0.0
  %697 = vmatpush1.msra.mxu0 0.0
  %698 = vmatprep.subr.mxu0 0.0
  %699 = vmatpush1.msra.mxu0 0.0
  %700 = vmatprep.subr.mxu0 0.0
  %701 = vmatpush1.msra.mxu0 0.0
  %702 = vmatprep.subr.mxu0 0.0
  %703 = vmatpush1.msra.mxu0 0.0
  %704 = vmatprep.subr.mxu0 0.0
  %705 = vmatpush1.msra.mxu0 0.0
  %706 = vmatprep.subr.mxu0 0.0
  %707 = vmatpush1.msra.mxu0 0.0
  %708 = vmatprep.subr.mxu0 0.0
  %709 = vmatpush1.msra.mxu0 0.0
  %710 = vmatprep.subr.mxu0 0.0
  %711 = vmatpush1.msra.mxu0 0.0
  %712 = vmatprep.subr.mxu0 0.0
  %713 = vmatpush1.msra.mxu0 0.0
  %714 = vmatprep.subr.mxu0 0.0
  %715 = vmatpush1.msra.mxu0 0.0
  %716 = vmatprep.subr.mxu0 0.0
  %717 = vmatpush1.msra.mxu0 0.0
  %718 = vmatprep.subr.mxu0 0.0
  %719 = vmatpush1.msra.mxu0 0.0
  %720 = vmatprep.subr.mxu0 0.0
  %721 = vmatpush1.msra.mxu0 0.0
  %722 = vmatprep.subr.mxu0 0.0
  %723 = vmatpush1.msra.mxu0 0.0
  %724 = vmatprep.subr.mxu0 0.0
  %725 = vmatpush1.msra.mxu0 0.0
  %726 = vmatprep.subr.mxu0 0.0
  %727 = vmatpush1.msra.mxu0 0.0
  %728 = vmatprep.subr.mxu0 0.0
  %729 = vmatpush1.msra.mxu0 0.0
  %730 = vmatprep.subr.mxu0 0.0
  %731 = vmatpush1.msra.mxu0 0.0
  %732 = vmatprep.subr.mxu0 0.0
  %733 = vmatpush1.msra.mxu0 0.0
  %734 = vmatprep.subr.mxu0 0.0
  %735 = vmatpush1.msra.mxu0 0.0
  %736 = vmatprep.mubr.f32.mxu0 0.0
  %737 = vmatmul.mubr.f32.gmra.mrb[0].mxu0 %v670
  %v738 = vpop.f32.mrb[0].mxu0
  %v739 = vadd.f32 0.0, %v738
  %v740 = vpop.f32.mrb[0].mxu0
  %741 = vdwg.mxu0
  %v743 = vrot.slane %v739, 6
  %v745 = vadd.f32 %v587, %v743
  %v746 = vxor.u32 %v666, 2147483648
  %v747 = vmul.f32 %v746, 1.442695
  %v748 = vpow.pop %v747
  %v749 = vadd.f32 %v748, 1.0
  %v750 = vrcp.pop %v749
  %v751 = vmul.f32 1.0, %v750
  %v752 = vtanh.pop %v666
  %v754 = vrot.slane %v540, 6
  %v756 = vmul.f32 %v751, %v754
  %758 = vrot.lane.b32.xlu0 %v752, 64
  %v759 = vpop.permute.xlu0 %758
  %v761 = vmul.f32 %v751, %v759
  %763 = vrot.lane.b32.xlu0 %v761, 32
  %v764 = vpop.permute.xlu0 %763
  %v766 = vadd.f32 %v756, %v764
  %v767 = vtanh.pop %v766
  %769 = vrot.lane.b32.xlu0 %v767, 64
  %v770 = vpop.permute.xlu0 %769
  %v772 = vmul.f32 %v751, %v770
  %v773 = vxor.u32 %v745, 2147483648
  %v774 = vmul.f32 %v773, 1.442695
  %v775 = vpow.pop %v774
  %v776 = vadd.f32 %v775, 1.0
  %v777 = vrcp.pop %v776
  %v778 = vmul.f32 1.0, %v777
  %v779 = vtanh.pop %v745
  %v781 = vrot.slane %v567, 2
  %v783 = vmul.f32 %v778, %v781
  %785 = vrot.lane.b32.xlu0 %v779, 64
  %v786 = vpop.permute.xlu0 %785
  %v788 = vmul.f32 %v778, %v786
  %790 = vrot.lane.b32.xlu0 %v788, 32
  %v791 = vpop.permute.xlu0 %790
  %v793 = vadd.f32 %v783, %v791
  %v794 = vtanh.pop %v793
  %796 = vrot.lane.b32.xlu0 %v794, 64
  %v797 = vpop.permute.xlu0 %796
  %v799 = vmul.f32 %v778, %v797
  %801 = vrot.lane.b32.xlu0 %v772, 32
  %v802 = vpop.permute.xlu0 %801
  %vm804 = vcmask 259076
  %805 = vst.msk [vmem:[#allocation2] sm:$0x30] %vm804, %v802
  %807 = vrot.lane.b32.xlu0 %v799, 64
  %v808 = vpop.permute.xlu0 %807
  %vm810 = vcmask 519426
  %811 = vst.msk [vmem:[#allocation2 + $0x8] sm:$0xc] %vm810, %v808
  %v812 = vld [vmem:[#allocation3] sm:$0xc0]
  %v813 = vld [vmem:[#allocation3 + $0x18] sm:$0x3]
  %v814 = vrot.slane %v772, 4
  %815 = vrot.lane.b32.xlu0 %v814, 32
  %v816 = vpop.permute.xlu0 %815
  %v817 = vsel %vm154, %v816, 0
  %819 = vmatprep.subr.mxu0 0.0
  %820 = vmatpush1.msra.mxu0 %v144
  %821 = vmatprep.subr.mxu0 0.0
  %822 = vmatpush1.msra.mxu0 %v145
  %823 = vmatprep.subr.mxu0 0.0
  %824 = vmatpush1.msra.mxu0 %v146
  %825 = vmatprep.subr.mxu0 0.0
  %826 = vmatpush1.msra.mxu0 %v147
  %827 = vmatprep.subr.mxu0 0.0
  %828 = vmatpush1.msra.mxu0 0.0
  %829 = vmatprep.subr.mxu0 0.0
  %830 = vmatpush1.msra.mxu0 0.0
  %831 = vmatprep.subr.mxu0 0.0
  %832 = vmatpush1.msra.mxu0 0.0
  %833 = vmatprep.subr.mxu0 0.0
  %834 = vmatpush1.msra.mxu0 0.0
  %835 = vmatprep.subr.mxu0 0.0
  %836 = vmatpush1.msra.mxu0 0.0
  %837 = vmatprep.subr.mxu0 0.0
  %838 = vmatpush1.msra.mxu0 0.0
  %839 = vmatprep.subr.mxu0 0.0
  %840 = vmatpush1.msra.mxu0 0.0
  %841 = vmatprep.subr.mxu0 0.0
  %842 = vmatpush1.msra.mxu0 0.0
  %843 = vmatprep.subr.mxu0 0.0
  %844 = vmatpush1.msra.mxu0 0.0
  %845 = vmatprep.subr.mxu0 0.0
  %846 = vmatpush1.msra.mxu0 0.0
  %847 = vmatprep.subr.mxu0 0.0
  %848 = vmatpush1.msra.mxu0 0.0
  %849 = vmatprep.subr.mxu0 0.0
  %850 = vmatpush1.msra.mxu0 0.0
  %851 = vmatprep.subr.mxu0 0.0
  %852 = vmatpush1.msra.mxu0 0.0
  %853 = vmatprep.subr.mxu0 0.0
  %854 = vmatpush1.msra.mxu0 0.0
  %855 = vmatprep.subr.mxu0 0.0
  %856 = vmatpush1.msra.mxu0 0.0
  %857 = vmatprep.subr.mxu0 0.0
  %858 = vmatpush1.msra.mxu0 0.0
  %859 = vmatprep.subr.mxu0 0.0
  %860 = vmatpush1.msra.mxu0 0.0
  %861 = vmatprep.subr.mxu0 0.0
  %862 = vmatpush1.msra.mxu0 0.0
  %863 = vmatprep.subr.mxu0 0.0
  %864 = vmatpush1.msra.mxu0 0.0
  %865 = vmatprep.subr.mxu0 0.0
  %866 = vmatpush1.msra.mxu0 0.0
  %867 = vmatprep.subr.mxu0 0.0
  %868 = vmatpush1.msra.mxu0 0.0
  %869 = vmatprep.subr.mxu0 0.0
  %870 = vmatpush1.msra.mxu0 0.0
  %871 = vmatprep.subr.mxu0 0.0
  %872 = vmatpush1.msra.mxu0 0.0
  %873 = vmatprep.subr.mxu0 0.0
  %874 = vmatpush1.msra.mxu0 0.0
  %875 = vmatprep.subr.mxu0 0.0
  %876 = vmatpush1.msra.mxu0 0.0
  %877 = vmatprep.subr.mxu0 0.0
  %878 = vmatpush1.msra.mxu0 0.0
  %879 = vmatprep.subr.mxu0 0.0
  %880 = vmatpush1.msra.mxu0 0.0
  %881 = vmatprep.subr.mxu0 0.0
  %882 = vmatpush1.msra.mxu0 0.0
  %883 = vmatprep.mubr.f32.mxu0 0.0
  %884 = vmatmul.mubr.f32.gmra.mrb[0].mxu0 %v817
  %v885 = vpop.f32.mrb[0].mxu0
  %v886 = vadd.f32 0.0, %v885
  %v887 = vpop.f32.mrb[0].mxu0
  %888 = vdwg.mxu0
  %v890 = vrot.slane %v886, 2
  %v892 = vadd.f32 %v812, %v890
  %v893 = vrot.slane %v799, 2
  %894 = vrot.lane.b32.xlu0 %v893, 32
  %v895 = vpop.permute.xlu0 %894
  %v896 = vsel %vm154, %v895, 0
  %898 = vmatprep.subr.mxu0 0.0
  %899 = vmatpush1.msra.mxu0 %v148
  %900 = vmatprep.subr.mxu0 0.0
  %901 = vmatpush1.msra.mxu0 %v149
  %902 = vmatprep.subr.mxu0 0.0
  %903 = vmatpush1.msra.mxu0 %v150
  %904 = vmatprep.subr.mxu0 0.0
  %905 = vmatpush1.msra.mxu0 %v151
  %906 = vmatprep.subr.mxu0 0.0
  %907 = vmatpush1.msra.mxu0 0.0
  %908 = vmatprep.subr.mxu0 0.0
  %909 = vmatpush1.msra.mxu0 0.0
  %910 = vmatprep.subr.mxu0 0.0
  %911 = vmatpush1.msra.mxu0 0.0
  %912 = vmatprep.subr.mxu0 0.0
  %913 = vmatpush1.msra.mxu0 0.0
  %914 = vmatprep.subr.mxu0 0.0
  %915 = vmatpush1.msra.mxu0 0.0
  %916 = vmatprep.subr.mxu0 0.0
  %917 = vmatpush1.msra.mxu0 0.0
  %918 = vmatprep.subr.mxu0 0.0
  %919 = vmatpush1.msra.mxu0 0.0
  %920 = vmatprep.subr.mxu0 0.0
  %921 = vmatpush1.msra.mxu0 0.0
  %922 = vmatprep.subr.mxu0 0.0
  %923 = vmatpush1.msra.mxu0 0.0
  %924 = vmatprep.subr.mxu0 0.0
  %925 = vmatpush1.msra.mxu0 0.0
  %926 = vmatprep.subr.mxu0 0.0
  %927 = vmatpush1.msra.mxu0 0.0
  %928 = vmatprep.subr.mxu0 0.0
  %929 = vmatpush1.msra.mxu0 0.0
  %930 = vmatprep.subr.mxu0 0.0
  %931 = vmatpush1.msra.mxu0 0.0
  %932 = vmatprep.subr.mxu0 0.0
  %933 = vmatpush1.msra.mxu0 0.0
  %934 = vmatprep.subr.mxu0 0.0
  %935 = vmatpush1.msra.mxu0 0.0
  %936 = vmatprep.subr.mxu0 0.0
  %937 = vmatpush1.msra.mxu0 0.0
  %938 = vmatprep.subr.mxu0 0.0
  %939 = vmatpush1.msra.mxu0 0.0
  %940 = vmatprep.subr.mxu0 0.0
  %941 = vmatpush1.msra.mxu0 0.0
  %942 = vmatprep.subr.mxu0 0.0
  %943 = vmatpush1.msra.mxu0 0.0
  %944 = vmatprep.subr.mxu0 0.0
  %945 = vmatpush1.msra.mxu0 0.0
  %946 = vmatprep.subr.mxu0 0.0
  %947 = vmatpush1.msra.mxu0 0.0
  %948 = vmatprep.subr.mxu0 0.0
  %949 = vmatpush1.msra.mxu0 0.0
  %950 = vmatprep.subr.mxu0 0.0
  %951 = vmatpush1.msra.mxu0 0.0
  %952 = vmatprep.subr.mxu0 0.0
  %953 = vmatpush1.msra.mxu0 0.0
  %954 = vmatprep.subr.mxu0 0.0
  %955 = vmatpush1.msra.mxu0 0.0
  %956 = vmatprep.subr.mxu0 0.0
  %957 = vmatpush1.msra.mxu0 0.0
  %958 = vmatprep.subr.mxu0 0.0
  %959 = vmatpush1.msra.mxu0 0.0
  %960 = vmatprep.subr.mxu0 0.0
  %961 = vmatpush1.msra.mxu0 0.0
  %962 = vmatprep.mubr.f32.mxu0 0.0
  %963 = vmatmul.mubr.f32.gmra.mrb[0].mxu0 %v896
  %v964 = vpop.f32.mrb[0].mxu0
  %v965 = vadd.f32 0.0, %v964
  %v966 = vpop.f32.mrb[0].mxu0
  %967 = vdwg.mxu0
  %v968 = vadd.f32 %v813, %v965
  %v969 = vxor.u32 %v892, 2147483648
  %v970 = vmul.f32 %v969, 1.442695
  %v971 = vpow.pop %v970
  %v972 = vadd.f32 %v971, 1.0
  %v973 = vrcp.pop %v972
  %v974 = vmul.f32 1.0, %v973
  %v975 = vtanh.pop %v892
  %v977 = vrot.slane %v766, 6
  %v979 = vmul.f32 %v974, %v977
  %981 = vrot.lane.b32.xlu0 %v975, 64
  %v982 = vpop.permute.xlu0 %981
  %v984 = vmul.f32 %v974, %v982
  %986 = vrot.lane.b32.xlu0 %v984, 32
  %v987 = vpop.permute.xlu0 %986
  %v989 = vadd.f32 %v979, %v987
  %v990 = vtanh.pop %v989
  %992 = vrot.lane.b32.xlu0 %v990, 64
  %v993 = vpop.permute.xlu0 %992
  %v995 = vmul.f32 %v974, %v993
  %v996 = vxor.u32 %v968, 2147483648
  %v997 = vmul.f32 %v996, 1.442695
  %v998 = vpow.pop %v997
  %v999 = vadd.f32 %v998, 1.0
  %v1000 = vrcp.pop %v999
  %v1001 = vmul.f32 1.0, %v1000
  %v1002 = vtanh.pop %v968
  %v1004 = vrot.slane %v793, 2
  %v1006 = vmul.f32 %v1001, %v1004
  %1008 = vrot.lane.b32.xlu0 %v1002, 64
  %v1009 = vpop.permute.xlu0 %1008
  %v1011 = vmul.f32 %v1001, %v1009
  %1013 = vrot.lane.b32.xlu0 %v1011, 32
  %v1014 = vpop.permute.xlu0 %1013
  %v1016 = vadd.f32 %v1006, %v1014
  %v1017 = vtanh.pop %v1016
  %1019 = vrot.lane.b32.xlu0 %v1017, 64
  %v1020 = vpop.permute.xlu0 %1019
  %v1022 = vmul.f32 %v1001, %v1020
  %1024 = vrot.lane.b32.xlu0 %v995, 32
  %v1025 = vpop.permute.xlu0 %1024
  %vm1027 = vcmask 261126
  %1028 = vst.msk [vmem:[#allocation2] sm:$0xc0] %vm1027, %v1025
  %1030 = vrot.lane.b32.xlu0 %v1022, 64
  %v1031 = vpop.permute.xlu0 %1030
  %vm1033 = vcmask 517376
  %1034 = vst.msk [vmem:[#allocation2 + $0x8] sm:$0x3] %vm1033, %v1031
  %v1035 = vld [vmem:[#allocation3 + $0x10] sm:$0x3]
  %v1036 = vld [vmem:[#allocation3 + $0x8] sm:$0xc0]
  %v1037 = vrot.slane %v995, 6
  %1038 = vrot.lane.b32.xlu0 %v1037, 32
  %v1039 = vpop.permute.xlu0 %1038
  %v1040 = vsel %vm154, %v1039, 0
  %1042 = vmatprep.subr.mxu0 0.0
  %1043 = vmatpush1.msra.mxu0 %v144
  %1044 = vmatprep.subr.mxu0 0.0
  %1045 = vmatpush1.msra.mxu0 %v145
  %1046 = vmatprep.subr.mxu0 0.0
  %1047 = vmatpush1.msra.mxu0 %v146
  %1048 = vmatprep.subr.mxu0 0.0
  %1049 = vmatpush1.msra.mxu0 %v147
  %1050 = vmatprep.subr.mxu0 0.0
  %1051 = vmatpush1.msra.mxu0 0.0
  %1052 = vmatprep.subr.mxu0 0.0
  %1053 = vmatpush1.msra.mxu0 0.0
  %1054 = vmatprep.subr.mxu0 0.0
  %1055 = vmatpush1.msra.mxu0 0.0
  %1056 = vmatprep.subr.mxu0 0.0
  %1057 = vmatpush1.msra.mxu0 0.0
  %1058 = vmatprep.subr.mxu0 0.0
  %1059 = vmatpush1.msra.mxu0 0.0
  %1060 = vmatprep.subr.mxu0 0.0
  %1061 = vmatpush1.msra.mxu0 0.0
  %1062 = vmatprep.subr.mxu0 0.0
  %1063 = vmatpush1.msra.mxu0 0.0
  %1064 = vmatprep.subr.mxu0 0.0
  %1065 = vmatpush1.msra.mxu0 0.0
  %1066 = vmatprep.subr.mxu0 0.0
  %1067 = vmatpush1.msra.mxu0 0.0
  %1068 = vmatprep.subr.mxu0 0.0
  %1069 = vmatpush1.msra.mxu0 0.0
  %1070 = vmatprep.subr.mxu0 0.0
  %1071 = vmatpush1.msra.mxu0 0.0
  %1072 = vmatprep.subr.mxu0 0.0
  %1073 = vmatpush1.msra.mxu0 0.0
  %1074 = vmatprep.subr.mxu0 0.0
  %1075 = vmatpush1.msra.mxu0 0.0
  %1076 = vmatprep.subr.mxu0 0.0
  %1077 = vmatpush1.msra.mxu0 0.0
  %1078 = vmatprep.subr.mxu0 0.0
  %1079 = vmatpush1.msra.mxu0 0.0
  %1080 = vmatprep.subr.mxu0 0.0
  %1081 = vmatpush1.msra.mxu0 0.0
  %1082 = vmatprep.subr.mxu0 0.0
  %1083 = vmatpush1.msra.mxu0 0.0
  %1084 = vmatprep.subr.mxu0 0.0
  %1085 = vmatpush1.msra.mxu0 0.0
  %1086 = vmatprep.subr.mxu0 0.0
  %1087 = vmatpush1.msra.mxu0 0.0
  %1088 = vmatprep.subr.mxu0 0.0
  %1089 = vmatpush1.msra.mxu0 0.0
  %1090 = vmatprep.subr.mxu0 0.0
  %1091 = vmatpush1.msra.mxu0 0.0
  %1092 = vmatprep.subr.mxu0 0.0
  %1093 = vmatpush1.msra.mxu0 0.0
  %1094 = vmatprep.subr.mxu0 0.0
  %1095 = vmatpush1.msra.mxu0 0.0
  %1096 = vmatprep.subr.mxu0 0.0
  %1097 = vmatpush1.msra.mxu0 0.0
  %1098 = vmatprep.subr.mxu0 0.0
  %1099 = vmatpush1.msra.mxu0 0.0
  %1100 = vmatprep.subr.mxu0 0.0
  %1101 = vmatpush1.msra.mxu0 0.0
  %1102 = vmatprep.subr.mxu0 0.0
  %1103 = vmatpush1.msra.mxu0 0.0
  %1104 = vmatprep.subr.mxu0 0.0
  %1105 = vmatpush1.msra.mxu0 0.0
  %1106 = vmatprep.mubr.f32.mxu0 0.0
  %1107 = vmatmul.mubr.f32.gmra.mrb[0].mxu0 %v1040
  %v1108 = vpop.f32.mrb[0].mxu0
  %v1109 = vadd.f32 0.0, %v1108
  %v1110 = vpop.f32.mrb[0].mxu0
  %1111 = vdwg.mxu0
  %v1112 = vadd.f32 %v1035, %v1109
  %1113 = vrot.lane.b32.xlu0 %v1022, 32
  %v1114 = vpop.permute.xlu0 %1113
  %v1115 = vsel %vm154, %v1114, 0
  %1117 = vmatprep.subr.mxu0 0.0
  %1118 = vmatpush1.msra.mxu0 %v148
  %1119 = vmatprep.subr.mxu0 0.0
  %1120 = vmatpush1.msra.mxu0 %v149
  %1121 = vmatprep.subr.mxu0 0.0
  %1122 = vmatpush1.msra.mxu0 %v150
  %1123 = vmatprep.subr.mxu0 0.0
  %1124 = vmatpush1.msra.mxu0 %v151
  %1125 = vmatprep.subr.mxu0 0.0
  %1126 = vmatpush1.msra.mxu0 0.0
  %1127 = vmatprep.subr.mxu0 0.0
  %1128 = vmatpush1.msra.mxu0 0.0
  %1129 = vmatprep.subr.mxu0 0.0
  %1130 = vmatpush1.msra.mxu0 0.0
  %1131 = vmatprep.subr.mxu0 0.0
  %1132 = vmatpush1.msra.mxu0 0.0
  %1133 = vmatprep.subr.mxu0 0.0
  %1134 = vmatpush1.msra.mxu0 0.0
  %1135 = vmatprep.subr.mxu0 0.0
  %1136 = vmatpush1.msra.mxu0 0.0
  %1137 = vmatprep.subr.mxu0 0.0
  %1138 = vmatpush1.msra.mxu0 0.0
  %1139 = vmatprep.subr.mxu0 0.0
  %1140 = vmatpush1.msra.mxu0 0.0
  %1141 = vmatprep.subr.mxu0 0.0
  %1142 = vmatpush1.msra.mxu0 0.0
  %1143 = vmatprep.subr.mxu0 0.0
  %1144 = vmatpush1.msra.mxu0 0.0
  %1145 = vmatprep.subr.mxu0 0.0
  %1146 = vmatpush1.msra.mxu0 0.0
  %1147 = vmatprep.subr.mxu0 0.0
  %1148 = vmatpush1.msra.mxu0 0.0
  %1149 = vmatprep.subr.mxu0 0.0
  %1150 = vmatpush1.msra.mxu0 0.0
  %1151 = vmatprep.subr.mxu0 0.0
  %1152 = vmatpush1.msra.mxu0 0.0
  %1153 = vmatprep.subr.mxu0 0.0
  %1154 = vmatpush1.msra.mxu0 0.0
  %1155 = vmatprep.subr.mxu0 0.0
  %1156 = vmatpush1.msra.mxu0 0.0
  %1157 = vmatprep.subr.mxu0 0.0
  %1158 = vmatpush1.msra.mxu0 0.0
  %1159 = vmatprep.subr.mxu0 0.0
  %1160 = vmatpush1.msra.mxu0 0.0
  %1161 = vmatprep.subr.mxu0 0.0
  %1162 = vmatpush1.msra.mxu0 0.0
  %1163 = vmatprep.subr.mxu0 0.0
  %1164 = vmatpush1.msra.mxu0 0.0
  %1165 = vmatprep.subr.mxu0 0.0
  %1166 = vmatpush1.msra.mxu0 0.0
  %1167 = vmatprep.subr.mxu0 0.0
  %1168 = vmatpush1.msra.mxu0 0.0
  %1169 = vmatprep.subr.mxu0 0.0
  %1170 = vmatpush1.msra.mxu0 0.0
  %1171 = vmatprep.subr.mxu0 0.0
  %1172 = vmatpush1.msra.mxu0 0.0
  %1173 = vmatprep.subr.mxu0 0.0
  %1174 = vmatpush1.msra.mxu0 0.0
  %1175 = vmatprep.subr.mxu0 0.0
  %1176 = vmatpush1.msra.mxu0 0.0
  %1177 = vmatprep.subr.mxu0 0.0
  %1178 = vmatpush1.msra.mxu0 0.0
  %1179 = vmatprep.subr.mxu0 0.0
  %1180 = vmatpush1.msra.mxu0 0.0
  %1181 = vmatprep.mubr.f32.mxu0 0.0
  %1182 = vmatmul.mubr.f32.gmra.mrb[0].mxu0 %v1115
  %v1183 = vpop.f32.mrb[0].mxu0
  %v1184 = vadd.f32 0.0, %v1183
  %v1185 = vpop.f32.mrb[0].mxu0
  %1186 = vdwg.mxu0
  %v1188 = vrot.slane %v1184, 2
  %v1190 = vadd.f32 %v1036, %v1188
  %v1191 = vxor.u32 %v1112, 2147483648
  %v1192 = vmul.f32 %v1191, 1.442695
  %v1193 = vpow.pop %v1192
  %v1194 = vadd.f32 %v1193, 1.0
  %v1195 = vrcp.pop %v1194
  %v1196 = vmul.f32 1.0, %v1195
  %v1197 = vtanh.pop %v1112
  %v1199 = vrot.slane %v989, 6
  %v1201 = vmul.f32 %v1196, %v1199
  %1203 = vrot.lane.b32.xlu0 %v1197, 64
  %v1204 = vpop.permute.xlu0 %1203
  %v1206 = vmul.f32 %v1196, %v1204
  %1208 = vrot.lane.b32.xlu0 %v1206, 32
  %v1209 = vpop.permute.xlu0 %1208
  %v1211 = vadd.f32 %v1201, %v1209
  %v1212 = vtanh.pop %v1211
  %1214 = vrot.lane.b32.xlu0 %v1212, 64
  %v1215 = vpop.permute.xlu0 %1214
  %v1217 = vmul.f32 %v1196, %v1215
  %v1218 = vxor.u32 %v1190, 2147483648
  %v1219 = vmul.f32 %v1218, 1.442695
  %v1220 = vpow.pop %v1219
  %v1221 = vadd.f32 %v1220, 1.0
  %v1222 = vrcp.pop %v1221
  %v1223 = vmul.f32 1.0, %v1222
  %v1224 = vtanh.pop %v1190
  %v1226 = vrot.slane %v1016, 2
  %v1228 = vmul.f32 %v1223, %v1226
  %1230 = vrot.lane.b32.xlu0 %v1224, 64
  %v1231 = vpop.permute.xlu0 %1230
  %v1233 = vmul.f32 %v1223, %v1231
  %1235 = vrot.lane.b32.xlu0 %v1233, 32
  %v1236 = vpop.permute.xlu0 %1235
  %v1238 = vadd.f32 %v1228, %v1236
  %v1239 = vtanh.pop %v1238
  %1241 = vrot.lane.b32.xlu0 %v1239, 64
  %v1242 = vpop.permute.xlu0 %1241
  %v1244 = vmul.f32 %v1223, %v1242
  %1246 = vrot.lane.b32.xlu0 %v1217, 32
  %v1247 = vpop.permute.xlu0 %1246
  %1249 = vst.msk [vmem:[#allocation2 + $0x8] sm:$0x3] %vm355, %v1247
  %1251 = vrot.lane.b32.xlu0 %v1244, 64
  %v1252 = vpop.permute.xlu0 %1251
  %1254 = vst.msk [vmem:[#allocation2] sm:$0xc0] %vm361, %v1252
  %v1255 = vld [vmem:[#allocation3 + $0x10] sm:$0xc]
  %v1256 = vld [vmem:[#allocation3 + $0x8] sm:$0x30]
  %v1257 = vsel %vm154, %v1247, 0
  %1259 = vmatprep.subr.mxu0 0.0
  %1260 = vmatpush1.msra.mxu0 %v144
  %1261 = vmatprep.subr.mxu0 0.0
  %1262 = vmatpush1.msra.mxu0 %v145
  %1263 = vmatprep.subr.mxu0 0.0
  %1264 = vmatpush1.msra.mxu0 %v146
  %1265 = vmatprep.subr.mxu0 0.0
  %1266 = vmatpush1.msra.mxu0 %v147
  %1267 = vmatprep.subr.mxu0 0.0
  %1268 = vmatpush1.msra.mxu0 0.0
  %1269 = vmatprep.subr.mxu0 0.0
  %1270 = vmatpush1.msra.mxu0 0.0
  %1271 = vmatprep.subr.mxu0 0.0
  %1272 = vmatpush1.msra.mxu0 0.0
  %1273 = vmatprep.subr.mxu0 0.0
  %1274 = vmatpush1.msra.mxu0 0.0
  %1275 = vmatprep.subr.mxu0 0.0
  %1276 = vmatpush1.msra.mxu0 0.0
  %1277 = vmatprep.subr.mxu0 0.0
  %1278 = vmatpush1.msra.mxu0 0.0
  %1279 = vmatprep.subr.mxu0 0.0
  %1280 = vmatpush1.msra.mxu0 0.0
  %1281 = vmatprep.subr.mxu0 0.0
  %1282 = vmatpush1.msra.mxu0 0.0
  %1283 = vmatprep.subr.mxu0 0.0
  %1284 = vmatpush1.msra.mxu0 0.0
  %1285 = vmatprep.subr.mxu0 0.0
  %1286 = vmatpush1.msra.mxu0 0.0
  %1287 = vmatprep.subr.mxu0 0.0
  %1288 = vmatpush1.msra.mxu0 0.0
  %1289 = vmatprep.subr.mxu0 0.0
  %1290 = vmatpush1.msra.mxu0 0.0
  %1291 = vmatprep.subr.mxu0 0.0
  %1292 = vmatpush1.msra.mxu0 0.0
  %1293 = vmatprep.subr.mxu0 0.0
  %1294 = vmatpush1.msra.mxu0 0.0
  %1295 = vmatprep.subr.mxu0 0.0
  %1296 = vmatpush1.msra.mxu0 0.0
  %1297 = vmatprep.subr.mxu0 0.0
  %1298 = vmatpush1.msra.mxu0 0.0
  %1299 = vmatprep.subr.mxu0 0.0
  %1300 = vmatpush1.msra.mxu0 0.0
  %1301 = vmatprep.subr.mxu0 0.0
  %1302 = vmatpush1.msra.mxu0 0.0
  %1303 = vmatprep.subr.mxu0 0.0
  %1304 = vmatpush1.msra.mxu0 0.0
  %1305 = vmatprep.subr.mxu0 0.0
  %1306 = vmatpush1.msra.mxu0 0.0
  %1307 = vmatprep.subr.mxu0 0.0
  %1308 = vmatpush1.msra.mxu0 0.0
  %1309 = vmatprep.subr.mxu0 0.0
  %1310 = vmatpush1.msra.mxu0 0.0
  %1311 = vmatprep.subr.mxu0 0.0
  %1312 = vmatpush1.msra.mxu0 0.0
  %1313 = vmatprep.subr.mxu0 0.0
  %1314 = vmatpush1.msra.mxu0 0.0
  %1315 = vmatprep.subr.mxu0 0.0
  %1316 = vmatpush1.msra.mxu0 0.0
  %1317 = vmatprep.subr.mxu0 0.0
  %1318 = vmatpush1.msra.mxu0 0.0
  %1319 = vmatprep.subr.mxu0 0.0
  %1320 = vmatpush1.msra.mxu0 0.0
  %1321 = vmatprep.subr.mxu0 0.0
  %1322 = vmatpush1.msra.mxu0 0.0
  %1323 = vmatprep.mubr.f32.mxu0 0.0
  %1324 = vmatmul.mubr.f32.gmra.mrb[0].mxu0 %v1257
  %v1325 = vpop.f32.mrb[0].mxu0
  %v1326 = vadd.f32 0.0, %v1325
  %v1327 = vpop.f32.mrb[0].mxu0
  %1328 = vdwg.mxu0
  %v1330 = vrot.slane %v1326, 6
  %v1332 = vadd.f32 %v1255, %v1330
  %v1333 = vrot.slane %v1244, 6
  %1334 = vrot.lane.b32.xlu0 %v1333, 32
  %v1335 = vpop.permute.xlu0 %1334
  %v1336 = vsel %vm154, %v1335, 0
  %1338 = vmatprep.subr.mxu0 0.0
  %1339 = vmatpush1.msra.mxu0 %v148
  %1340 = vmatprep.subr.mxu0 0.0
  %1341 = vmatpush1.msra.mxu0 %v149
  %1342 = vmatprep.subr.mxu0 0.0
  %1343 = vmatpush1.msra.mxu0 %v150
  %1344 = vmatprep.subr.mxu0 0.0
  %1345 = vmatpush1.msra.mxu0 %v151
  %1346 = vmatprep.subr.mxu0 0.0
  %1347 = vmatpush1.msra.mxu0 0.0
  %1348 = vmatprep.subr.mxu0 0.0
  %1349 = vmatpush1.msra.mxu0 0.0
  %1350 = vmatprep.subr.mxu0 0.0
  %1351 = vmatpush1.msra.mxu0 0.0
  %1352 = vmatprep.subr.mxu0 0.0
  %1353 = vmatpush1.msra.mxu0 0.0
  %1354 = vmatprep.subr.mxu0 0.0
  %1355 = vmatpush1.msra.mxu0 0.0
  %1356 = vmatprep.subr.mxu0 0.0
  %1357 = vmatpush1.msra.mxu0 0.0
  %1358 = vmatprep.subr.mxu0 0.0
  %1359 = vmatpush1.msra.mxu0 0.0
  %1360 = vmatprep.subr.mxu0 0.0
  %1361 = vmatpush1.msra.mxu0 0.0
  %1362 = vmatprep.subr.mxu0 0.0
  %1363 = vmatpush1.msra.mxu0 0.0
  %1364 = vmatprep.subr.mxu0 0.0
  %1365 = vmatpush1.msra.mxu0 0.0
  %1366 = vmatprep.subr.mxu0 0.0
  %1367 = vmatpush1.msra.mxu0 0.0
  %1368 = vmatprep.subr.mxu0 0.0
  %1369 = vmatpush1.msra.mxu0 0.0
  %1370 = vmatprep.subr.mxu0 0.0
  %1371 = vmatpush1.msra.mxu0 0.0
  %1372 = vmatprep.subr.mxu0 0.0
  %1373 = vmatpush1.msra.mxu0 0.0
  %1374 = vmatprep.subr.mxu0 0.0
  %1375 = vmatpush1.msra.mxu0 0.0
  %1376 = vmatprep.subr.mxu0 0.0
  %1377 = vmatpush1.msra.mxu0 0.0
  %1378 = vmatprep.subr.mxu0 0.0
  %1379 = vmatpush1.msra.mxu0 0.0
  %1380 = vmatprep.subr.mxu0 0.0
  %1381 = vmatpush1.msra.mxu0 0.0
  %1382 = vmatprep.subr.mxu0 0.0
  %1383 = vmatpush1.msra.mxu0 0.0
  %1384 = vmatprep.subr.mxu0 0.0
  %1385 = vmatpush1.msra.mxu0 0.0
  %1386 = vmatprep.subr.mxu0 0.0
  %1387 = vmatpush1.msra.mxu0 0.0
  %1388 = vmatprep.subr.mxu0 0.0
  %1389 = vmatpush1.msra.mxu0 0.0
  %1390 = vmatprep.subr.mxu0 0.0
  %1391 = vmatpush1.msra.mxu0 0.0
  %1392 = vmatprep.subr.mxu0 0.0
  %1393 = vmatpush1.msra.mxu0 0.0
  %1394 = vmatprep.subr.mxu0 0.0
  %1395 = vmatpush1.msra.mxu0 0.0
  %1396 = vmatprep.subr.mxu0 0.0
  %1397 = vmatpush1.msra.mxu0 0.0
  %1398 = vmatprep.subr.mxu0 0.0
  %1399 = vmatpush1.msra.mxu0 0.0
  %1400 = vmatprep.subr.mxu0 0.0
  %1401 = vmatpush1.msra.mxu0 0.0
  %1402 = vmatprep.mubr.f32.mxu0 0.0
  %1403 = vmatmul.mubr.f32.gmra.mrb[0].mxu0 %v1336
  %v1404 = vpop.f32.mrb[0].mxu0
  %v1405 = vadd.f32 0.0, %v1404
  %v1406 = vpop.f32.mrb[0].mxu0
  %1407 = vdwg.mxu0
  %v1409 = vrot.slane %v1405, 4
  %v1411 = vadd.f32 %v1256, %v1409
  %v1412 = vxor.u32 %v1332, 2147483648
  %v1413 = vmul.f32 %v1412, 1.442695
  %v1414 = vpow.pop %v1413
  %v1415 = vadd.f32 %v1414, 1.0
  %v1416 = vrcp.pop %v1415
  %v1417 = vmul.f32 1.0, %v1416
  %v1418 = vtanh.pop %v1332
  %v1420 = vrot.slane %v1211, 6
  %v1422 = vmul.f32 %v1417, %v1420
  %1424 = vrot.lane.b32.xlu0 %v1418, 64
  %v1425 = vpop.permute.xlu0 %1424
  %v1427 = vmul.f32 %v1417, %v1425
  %1429 = vrot.lane.b32.xlu0 %v1427, 32
  %v1430 = vpop.permute.xlu0 %1429
  %v1432 = vadd.f32 %v1422, %v1430
  %v1433 = vtanh.pop %v1432
  %1435 = vrot.lane.b32.xlu0 %v1433, 64
  %v1436 = vpop.permute.xlu0 %1435
  %v1438 = vmul.f32 %v1417, %v1436
  %v1439 = vxor.u32 %v1411, 2147483648
  %v1440 = vmul.f32 %v1439, 1.442695
  %v1441 = vpow.pop %v1440
  %v1442 = vadd.f32 %v1441, 1.0
  %v1443 = vrcp.pop %v1442
  %v1444 = vmul.f32 1.0, %v1443
  %v1445 = vtanh.pop %v1411
  %v1447 = vrot.slane %v1238, 2
  %v1449 = vmul.f32 %v1444, %v1447
  %1451 = vrot.lane.b32.xlu0 %v1445, 64
  %v1452 = vpop.permute.xlu0 %1451
  %v1454 = vmul.f32 %v1444, %v1452
  %1456 = vrot.lane.b32.xlu0 %v1454, 32
  %v1457 = vpop.permute.xlu0 %1456
  %v1459 = vadd.f32 %v1449, %v1457
  %v1460 = vtanh.pop %v1459
  %1462 = vrot.lane.b32.xlu0 %v1460, 64
  %v1463 = vpop.permute.xlu0 %1462
  %v1465 = vmul.f32 %v1444, %v1463
  %1467 = vrot.lane.b32.xlu0 %v1438, 32
  %v1468 = vpop.permute.xlu0 %1467
  %1470 = vst.msk [vmem:[#allocation2 + $0x8] sm:$0xc] %vm578, %v1468
  %1472 = vrot.lane.b32.xlu0 %v1465, 64
  %v1473 = vpop.permute.xlu0 %1472
  %1475 = vst.msk [vmem:[#allocation2] sm:$0x30] %vm584, %v1473
  %v1476 = vld [vmem:[#allocation3 + $0x10] sm:$0x30]
  %v1477 = vld [vmem:[#allocation3 + $0x8] sm:$0xc]
  %v1478 = vrot.slane %v1438, 2
  %1479 = vrot.lane.b32.xlu0 %v1478, 32
  %v1480 = vpop.permute.xlu0 %1479
  %v1481 = vsel %vm154, %v1480, 0
  %1483 = vmatprep.subr.mxu0 0.0
  %1484 = vmatpush1.msra.mxu0 %v144
  %1485 = vmatprep.subr.mxu0 0.0
  %1486 = vmatpush1.msra.mxu0 %v145
  %1487 = vmatprep.subr.mxu0 0.0
  %1488 = vmatpush1.msra.mxu0 %v146
  %1489 = vmatprep.subr.mxu0 0.0
  %1490 = vmatpush1.msra.mxu0 %v147
  %1491 = vmatprep.subr.mxu0 0.0
  %1492 = vmatpush1.msra.mxu0 0.0
  %1493 = vmatprep.subr.mxu0 0.0
  %1494 = vmatpush1.msra.mxu0 0.0
  %1495 = vmatprep.subr.mxu0 0.0
  %1496 = vmatpush1.msra.mxu0 0.0
  %1497 = vmatprep.subr.mxu0 0.0
  %1498 = vmatpush1.msra.mxu0 0.0
  %1499 = vmatprep.subr.mxu0 0.0
  %1500 = vmatpush1.msra.mxu0 0.0
  %1501 = vmatprep.subr.mxu0 0.0
  %1502 = vmatpush1.msra.mxu0 0.0
  %1503 = vmatprep.subr.mxu0 0.0
  %1504 = vmatpush1.msra.mxu0 0.0
  %1505 = vmatprep.subr.mxu0 0.0
  %1506 = vmatpush1.msra.mxu0 0.0
  %1507 = vmatprep.subr.mxu0 0.0
  %1508 = vmatpush1.msra.mxu0 0.0
  %1509 = vmatprep.subr.mxu0 0.0
  %1510 = vmatpush1.msra.mxu0 0.0
  %1511 = vmatprep.subr.mxu0 0.0
  %1512 = vmatpush1.msra.mxu0 0.0
  %1513 = vmatprep.subr.mxu0 0.0
  %1514 = vmatpush1.msra.mxu0 0.0
  %1515 = vmatprep.subr.mxu0 0.0
  %1516 = vmatpush1.msra.mxu0 0.0
  %1517 = vmatprep.subr.mxu0 0.0
  %1518 = vmatpush1.msra.mxu0 0.0
  %1519 = vmatprep.subr.mxu0 0.0
  %1520 = vmatpush1.msra.mxu0 0.0
  %1521 = vmatprep.subr.mxu0 0.0
  %1522 = vmatpush1.msra.mxu0 0.0
  %1523 = vmatprep.subr.mxu0 0.0
  %1524 = vmatpush1.msra.mxu0 0.0
  %1525 = vmatprep.subr.mxu0 0.0
  %1526 = vmatpush1.msra.mxu0 0.0
  %1527 = vmatprep.subr.mxu0 0.0
  %1528 = vmatpush1.msra.mxu0 0.0
  %1529 = vmatprep.subr.mxu0 0.0
  %1530 = vmatpush1.msra.mxu0 0.0
  %1531 = vmatprep.subr.mxu0 0.0
  %1532 = vmatpush1.msra.mxu0 0.0
  %1533 = vmatprep.subr.mxu0 0.0
  %1534 = vmatpush1.msra.mxu0 0.0
  %1535 = vmatprep.subr.mxu0 0.0
  %1536 = vmatpush1.msra.mxu0 0.0
  %1537 = vmatprep.subr.mxu0 0.0
  %1538 = vmatpush1.msra.mxu0 0.0
  %1539 = vmatprep.subr.mxu0 0.0
  %1540 = vmatpush1.msra.mxu0 0.0
  %1541 = vmatprep.subr.mxu0 0.0
  %1542 = vmatpush1.msra.mxu0 0.0
  %1543 = vmatprep.subr.mxu0 0.0
  %1544 = vmatpush1.msra.mxu0 0.0
  %1545 = vmatprep.subr.mxu0 0.0
  %1546 = vmatpush1.msra.mxu0 0.0
  %1547 = vmatprep.mubr.f32.mxu0 0.0
  %1548 = vmatmul.mubr.f32.gmra.mrb[0].mxu0 %v1481
  %v1549 = vpop.f32.mrb[0].mxu0
  %v1550 = vadd.f32 0.0, %v1549
  %v1551 = vpop.f32.mrb[0].mxu0
  %1552 = vdwg.mxu0
  %v1554 = vrot.slane %v1550, 4
  %v1556 = vadd.f32 %v1476, %v1554
  %v1557 = vrot.slane %v1465, 4
  %1558 = vrot.lane.b32.xlu0 %v1557, 32
  %v1559 = vpop.permute.xlu0 %1558
  %v1560 = vsel %vm154, %v1559, 0
  %1562 = vmatprep.subr.mxu0 0.0
  %1563 = vmatpush1.msra.mxu0 %v148
  %1564 = vmatprep.subr.mxu0 0.0
  %1565 = vmatpush1.msra.mxu0 %v149
  %1566 = vmatprep.subr.mxu0 0.0
  %1567 = vmatpush1.msra.mxu0 %v150
  %1568 = vmatprep.subr.mxu0 0.0
  %1569 = vmatpush1.msra.mxu0 %v151
  %1570 = vmatprep.subr.mxu0 0.0
  %1571 = vmatpush1.msra.mxu0 0.0
  %1572 = vmatprep.subr.mxu0 0.0
  %1573 = vmatpush1.msra.mxu0 0.0
  %1574 = vmatprep.subr.mxu0 0.0
  %1575 = vmatpush1.msra.mxu0 0.0
  %1576 = vmatprep.subr.mxu0 0.0
  %1577 = vmatpush1.msra.mxu0 0.0
  %1578 = vmatprep.subr.mxu0 0.0
  %1579 = vmatpush1.msra.mxu0 0.0
  %1580 = vmatprep.subr.mxu0 0.0
  %1581 = vmatpush1.msra.mxu0 0.0
  %1582 = vmatprep.subr.mxu0 0.0
  %1583 = vmatpush1.msra.mxu0 0.0
  %1584 = vmatprep.subr.mxu0 0.0
  %1585 = vmatpush1.msra.mxu0 0.0
  %1586 = vmatprep.subr.mxu0 0.0
  %1587 = vmatpush1.msra.mxu0 0.0
  %1588 = vmatprep.subr.mxu0 0.0
  %1589 = vmatpush1.msra.mxu0 0.0
  %1590 = vmatprep.subr.mxu0 0.0
  %1591 = vmatpush1.msra.mxu0 0.0
  %1592 = vmatprep.subr.mxu0 0.0
  %1593 = vmatpush1.msra.mxu0 0.0
  %1594 = vmatprep.subr.mxu0 0.0
  %1595 = vmatpush1.msra.mxu0 0.0
  %1596 = vmatprep.subr.mxu0 0.0
  %1597 = vmatpush1.msra.mxu0 0.0
  %1598 = vmatprep.subr.mxu0 0.0
  %1599 = vmatpush1.msra.mxu0 0.0
  %1600 = vmatprep.subr.mxu0 0.0
  %1601 = vmatpush1.msra.mxu0 0.0
  %1602 = vmatprep.subr.mxu0 0.0
  %1603 = vmatpush1.msra.mxu0 0.0
  %1604 = vmatprep.subr.mxu0 0.0
  %1605 = vmatpush1.msra.mxu0 0.0
  %1606 = vmatprep.subr.mxu0 0.0
  %1607 = vmatpush1.msra.mxu0 0.0
  %1608 = vmatprep.subr.mxu0 0.0
  %1609 = vmatpush1.msra.mxu0 0.0
  %1610 = vmatprep.subr.mxu0 0.0
  %1611 = vmatpush1.msra.mxu0 0.0
  %1612 = vmatprep.subr.mxu0 0.0
  %1613 = vmatpush1.msra.mxu0 0.0
  %1614 = vmatprep.subr.mxu0 0.0
  %1615 = vmatpush1.msra.mxu0 0.0
  %1616 = vmatprep.subr.mxu0 0.0
  %1617 = vmatpush1.msra.mxu0 0.0
  %1618 = vmatprep.subr.mxu0 0.0
  %1619 = vmatpush1.msra.mxu0 0.0
  %1620 = vmatprep.subr.mxu0 0.0
  %1621 = vmatpush1.msra.mxu0 0.0
  %1622 = vmatprep.subr.mxu0 0.0
  %1623 = vmatpush1.msra.mxu0 0.0
  %1624 = vmatprep.subr.mxu0 0.0
  %1625 = vmatpush1.msra.mxu0 0.0
  %1626 = vmatprep.mubr.f32.mxu0 0.0
  %1627 = vmatmul.mubr.f32.gmra.mrb[0].mxu0 %v1560
  %v1628 = vpop.f32.mrb[0].mxu0
  %v1629 = vadd.f32 0.0, %v1628
  %v1630 = vpop.f32.mrb[0].mxu0
  %1631 = vdwg.mxu0
  %v1633 = vrot.slane %v1629, 6
  %v1635 = vadd.f32 %v1477, %v1633
  %v1636 = vxor.u32 %v1556, 2147483648
  %v1637 = vmul.f32 %v1636, 1.442695
  %v1638 = vpow.pop %v1637
  %v1639 = vadd.f32 %v1638, 1.0
  %v1640 = vrcp.pop %v1639
  %v1641 = vmul.f32 1.0, %v1640
  %v1642 = vtanh.pop %v1556
  %v1644 = vrot.slane %v1432, 6
  %v1646 = vmul.f32 %v1641, %v1644
  %1648 = vrot.lane.b32.xlu0 %v1642, 64
  %v1649 = vpop.permute.xlu0 %1648
  %v1651 = vmul.f32 %v1641, %v1649
  %1653 = vrot.lane.b32.xlu0 %v1651, 32
  %v1654 = vpop.permute.xlu0 %1653
  %v1656 = vadd.f32 %v1646, %v1654
  %v1657 = vtanh.pop %v1656
  %1659 = vrot.lane.b32.xlu0 %v1657, 64
  %v1660 = vpop.permute.xlu0 %1659
  %v1662 = vmul.f32 %v1641, %v1660
  %v1663 = vxor.u32 %v1635, 2147483648
  %v1664 = vmul.f32 %v1663, 1.442695
  %v1665 = vpow.pop %v1664
  %v1666 = vadd.f32 %v1665, 1.0
  %v1667 = vrcp.pop %v1666
  %v1668 = vmul.f32 1.0, %v1667
  %v1669 = vtanh.pop %v1635
  %v1671 = vrot.slane %v1459, 2
  %v1673 = vmul.f32 %v1668, %v1671
  %1675 = vrot.lane.b32.xlu0 %v1669, 64
  %v1676 = vpop.permute.xlu0 %1675
  %v1678 = vmul.f32 %v1668, %v1676
  %1680 = vrot.lane.b32.xlu0 %v1678, 32
  %v1681 = vpop.permute.xlu0 %1680
  %v1683 = vadd.f32 %v1673, %v1681
  %v1684 = vtanh.pop %v1683
  %1686 = vrot.lane.b32.xlu0 %v1684, 64
  %v1687 = vpop.permute.xlu0 %1686
  %v1689 = vmul.f32 %v1668, %v1687
  %1691 = vrot.lane.b32.xlu0 %v1662, 32
  %v1692 = vpop.permute.xlu0 %1691
  %1694 = vst.msk [vmem:[#allocation2 + $0x8] sm:$0x30] %vm804, %v1692
  %1696 = vrot.lane.b32.xlu0 %v1689, 64
  %v1697 = vpop.permute.xlu0 %1696
  %1699 = vst.msk [vmem:[#allocation2] sm:$0xc] %vm810, %v1697
  %v1700 = vld [vmem:[#allocation3 + $0x10] sm:$0xc0]
  %v1701 = vld [vmem:[#allocation3 + $0x8] sm:$0x3]
  %v1702 = vrot.slane %v1662, 4
  %1703 = vrot.lane.b32.xlu0 %v1702, 32
  %v1704 = vpop.permute.xlu0 %1703
  %v1705 = vsel %vm154, %v1704, 0
  %1707 = vmatprep.subr.mxu0 0.0
  %1708 = vmatpush1.msra.mxu0 %v144
  %1709 = vmatprep.subr.mxu0 0.0
  %1710 = vmatpush1.msra.mxu0 %v145
  %1711 = vmatprep.subr.mxu0 0.0
  %1712 = vmatpush1.msra.mxu0 %v146
  %1713 = vmatprep.subr.mxu0 0.0
  %1714 = vmatpush1.msra.mxu0 %v147
  %1715 = vmatprep.subr.mxu0 0.0
  %1716 = vmatpush1.msra.mxu0 0.0
  %1717 = vmatprep.subr.mxu0 0.0
  %1718 = vmatpush1.msra.mxu0 0.0
  %1719 = vmatprep.subr.mxu0 0.0
  %1720 = vmatpush1.msra.mxu0 0.0
  %1721 = vmatprep.subr.mxu0 0.0
  %1722 = vmatpush1.msra.mxu0 0.0
  %1723 = vmatprep.subr.mxu0 0.0
  %1724 = vmatpush1.msra.mxu0 0.0
  %1725 = vmatprep.subr.mxu0 0.0
  %1726 = vmatpush1.msra.mxu0 0.0
  %1727 = vmatprep.subr.mxu0 0.0
  %1728 = vmatpush1.msra.mxu0 0.0
  %1729 = vmatprep.subr.mxu0 0.0
  %1730 = vmatpush1.msra.mxu0 0.0
  %1731 = vmatprep.subr.mxu0 0.0
  %1732 = vmatpush1.msra.mxu0 0.0
  %1733 = vmatprep.subr.mxu0 0.0
  %1734 = vmatpush1.msra.mxu0 0.0
  %1735 = vmatprep.subr.mxu0 0.0
  %1736 = vmatpush1.msra.mxu0 0.0
  %1737 = vmatprep.subr.mxu0 0.0
  %1738 = vmatpush1.msra.mxu0 0.0
  %1739 = vmatprep.subr.mxu0 0.0
  %1740 = vmatpush1.msra.mxu0 0.0
  %1741 = vmatprep.subr.mxu0 0.0
  %1742 = vmatpush1.msra.mxu0 0.0
  %1743 = vmatprep.subr.mxu0 0.0
  %1744 = vmatpush1.msra.mxu0 0.0
  %1745 = vmatprep.subr.mxu0 0.0
  %1746 = vmatpush1.msra.mxu0 0.0
  %1747 = vmatprep.subr.mxu0 0.0
  %1748 = vmatpush1.msra.mxu0 0.0
  %1749 = vmatprep.subr.mxu0 0.0
  %1750 = vmatpush1.msra.mxu0 0.0
  %1751 = vmatprep.subr.mxu0 0.0
  %1752 = vmatpush1.msra.mxu0 0.0
  %1753 = vmatprep.subr.mxu0 0.0
  %1754 = vmatpush1.msra.mxu0 0.0
  %1755 = vmatprep.subr.mxu0 0.0
  %1756 = vmatpush1.msra.mxu0 0.0
  %1757 = vmatprep.subr.mxu0 0.0
  %1758 = vmatpush1.msra.mxu0 0.0
  %1759 = vmatprep.subr.mxu0 0.0
  %1760 = vmatpush1.msra.mxu0 0.0
  %1761 = vmatprep.subr.mxu0 0.0
  %1762 = vmatpush1.msra.mxu0 0.0
  %1763 = vmatprep.subr.mxu0 0.0
  %1764 = vmatpush1.msra.mxu0 0.0
  %1765 = vmatprep.subr.mxu0 0.0
  %1766 = vmatpush1.msra.mxu0 0.0
  %1767 = vmatprep.subr.mxu0 0.0
  %1768 = vmatpush1.msra.mxu0 0.0
  %1769 = vmatprep.subr.mxu0 0.0
  %1770 = vmatpush1.msra.mxu0 0.0
  %1771 = vmatprep.mubr.f32.mxu0 0.0
  %1772 = vmatmul.mubr.f32.gmra.mrb[0].mxu0 %v1705
  %v1773 = vpop.f32.mrb[0].mxu0
  %v1774 = vadd.f32 0.0, %v1773
  %v1775 = vpop.f32.mrb[0].mxu0
  %1776 = vdwg.mxu0
  %v1778 = vrot.slane %v1774, 2
  %v1780 = vadd.f32 %v1700, %v1778
  %v1781 = vrot.slane %v1689, 2
  %1782 = vrot.lane.b32.xlu0 %v1781, 32
  %v1783 = vpop.permute.xlu0 %1782
  %v1784 = vsel %vm154, %v1783, 0
  %1786 = vmatprep.subr.mxu0 0.0
  %1787 = vmatpush1.msra.mxu0 %v148
  %1788 = vmatprep.subr.mxu0 0.0
  %1789 = vmatpush1.msra.mxu0 %v149
  %1790 = vmatprep.subr.mxu0 0.0
  %1791 = vmatpush1.msra.mxu0 %v150
  %1792 = vmatprep.subr.mxu0 0.0
  %1793 = vmatpush1.msra.mxu0 %v151
  %1794 = vmatprep.subr.mxu0 0.0
  %1795 = vmatpush1.msra.mxu0 0.0
  %1796 = vmatprep.subr.mxu0 0.0
  %1797 = vmatpush1.msra.mxu0 0.0
  %1798 = vmatprep.subr.mxu0 0.0
  %1799 = vmatpush1.msra.mxu0 0.0
  %1800 = vmatprep.subr.mxu0 0.0
  %1801 = vmatpush1.msra.mxu0 0.0
  %1802 = vmatprep.subr.mxu0 0.0
  %1803 = vmatpush1.msra.mxu0 0.0
  %1804 = vmatprep.subr.mxu0 0.0
  %1805 = vmatpush1.msra.mxu0 0.0
  %1806 = vmatprep.subr.mxu0 0.0
  %1807 = vmatpush1.msra.mxu0 0.0
  %1808 = vmatprep.subr.mxu0 0.0
  %1809 = vmatpush1.msra.mxu0 0.0
  %1810 = vmatprep.subr.mxu0 0.0
  %1811 = vmatpush1.msra.mxu0 0.0
  %1812 = vmatprep.subr.mxu0 0.0
  %1813 = vmatpush1.msra.mxu0 0.0
  %1814 = vmatprep.subr.mxu0 0.0
  %1815 = vmatpush1.msra.mxu0 0.0
  %1816 = vmatprep.subr.mxu0 0.0
  %1817 = vmatpush1.msra.mxu0 0.0
  %1818 = vmatprep.subr.mxu0 0.0
  %1819 = vmatpush1.msra.mxu0 0.0
  %1820 = vmatprep.subr.mxu0 0.0
  %1821 = vmatpush1.msra.mxu0 0.0
  %1822 = vmatprep.subr.mxu0 0.0
  %1823 = vmatpush1.msra.mxu0 0.0
  %1824 = vmatprep.subr.mxu0 0.0
  %1825 = vmatpush1.msra.mxu0 0.0
  %1826 = vmatprep.subr.mxu0 0.0
  %1827 = vmatpush1.msra.mxu0 0.0
  %1828 = vmatprep.subr.mxu0 0.0
  %1829 = vmatpush1.msra.mxu0 0.0
  %1830 = vmatprep.subr.mxu0 0.0
  %1831 = vmatpush1.msra.mxu0 0.0
  %1832 = vmatprep.subr.mxu0 0.0
  %1833 = vmatpush1.msra.mxu0 0.0
  %1834 = vmatprep.subr.mxu0 0.0
  %1835 = vmatpush1.msra.mxu0 0.0
  %1836 = vmatprep.subr.mxu0 0.0
  %1837 = vmatpush1.msra.mxu0 0.0
  %1838 = vmatprep.subr.mxu0 0.0
  %1839 = vmatpush1.msra.mxu0 0.0
  %1840 = vmatprep.subr.mxu0 0.0
  %1841 = vmatpush1.msra.mxu0 0.0
  %1842 = vmatprep.subr.mxu0 0.0
  %1843 = vmatpush1.msra.mxu0 0.0
  %1844 = vmatprep.subr.mxu0 0.0
  %1845 = vmatpush1.msra.mxu0 0.0
  %1846 = vmatprep.subr.mxu0 0.0
  %1847 = vmatpush1.msra.mxu0 0.0
  %1848 = vmatprep.subr.mxu0 0.0
  %1849 = vmatpush1.msra.mxu0 0.0
  %1850 = vmatprep.mubr.f32.mxu0 0.0
  %1851 = vmatmul.mubr.f32.gmra.mrb[0].mxu0 %v1784
  %v1852 = vpop.f32.mrb[0].mxu0
  %v1853 = vadd.f32 0.0, %v1852
  %v1854 = vpop.f32.mrb[0].mxu0
  %1855 = vdwg.mxu0
  %v1856 = vadd.f32 %v1701, %v1853
  %v1857 = vxor.u32 %v1780, 2147483648
  %v1858 = vmul.f32 %v1857, 1.442695
  %v1859 = vpow.pop %v1858
  %v1860 = vadd.f32 %v1859, 1.0
  %v1861 = vrcp.pop %v1860
  %v1862 = vmul.f32 1.0, %v1861
  %v1863 = vtanh.pop %v1780
  %v1865 = vrot.slane %v1656, 6
  %v1867 = vmul.f32 %v1862, %v1865
  %1869 = vrot.lane.b32.xlu0 %v1863, 64
  %v1870 = vpop.permute.xlu0 %1869
  %v1872 = vmul.f32 %v1862, %v1870
  %1874 = vrot.lane.b32.xlu0 %v1872, 32
  %v1875 = vpop.permute.xlu0 %1874
  %v1877 = vadd.f32 %v1867, %v1875
  %v1878 = vtanh.pop %v1877
  %1880 = vrot.lane.b32.xlu0 %v1878, 64
  %v1881 = vpop.permute.xlu0 %1880
  %v1883 = vmul.f32 %v1862, %v1881
  %v1884 = vxor.u32 %v1856, 2147483648
  %v1885 = vmul.f32 %v1884, 1.442695
  %v1886 = vpow.pop %v1885
  %v1887 = vadd.f32 %v1886, 1.0
  %v1888 = vrcp.pop %v1887
  %v1889 = vmul.f32 1.0, %v1888
  %v1890 = vtanh.pop %v1856
  %v1892 = vrot.slane %v1683, 2
  %v1894 = vmul.f32 %v1889, %v1892
  %1896 = vrot.lane.b32.xlu0 %v1890, 64
  %v1897 = vpop.permute.xlu0 %1896
  %v1899 = vmul.f32 %v1889, %v1897
  %1901 = vrot.lane.b32.xlu0 %v1899, 32
  %v1902 = vpop.permute.xlu0 %1901
  %v1904 = vadd.f32 %v1894, %v1902
  %v1905 = vtanh.pop %v1904
  %1907 = vrot.lane.b32.xlu0 %v1905, 64
  %v1908 = vpop.permute.xlu0 %1907
  %v1910 = vmul.f32 %v1889, %v1908
  %1912 = vrot.lane.b32.xlu0 %v1883, 32
  %v1913 = vpop.permute.xlu0 %1912
  %1915 = vst.msk [vmem:[#allocation2 + $0x8] sm:$0xc0] %vm1027, %v1913
  %1917 = vrot.lane.b32.xlu0 %v1910, 64
  %v1918 = vpop.permute.xlu0 %1917
  %1920 = vst.msk [vmem:[#allocation2] sm:$0x3] %vm1033, %v1918
  %v1921 = vld [vmem:[#allocation2] sm:$0xff]
  %v1922 = vld [vmem:[#allocation2 + $0x8] sm:$0xff]
  %v1923 = vld [vmem:[%s5] sm:$0xff]
  %v1924 = vld [vmem:[%s5 + $0x8] sm:$0xff]
  %v1925 = vld [vmem:[%s5 + $0x10] sm:$0xff]
  %v1926 = vld [vmem:[%s5 + $0x18] sm:$0xff]
  %v1927 = vld [vmem:[%s5 + $0x20] sm:$0xff]
  %v1928 = vld [vmem:[%s5 + $0x28] sm:$0xff]
  %v1929 = vld [vmem:[%s5 + $0x30] sm:$0xff]
  %v1930 = vld [vmem:[%s5 + $0x38] sm:$0xff]
  %v1931 = vld [vmem:[%s6] sm:$0x1]
  %v1933 = vlaneseq
  %v1934 = vshrl.u32 %v1933, 7
  %v1935 = vsub.s32 0, %v1934
  %v1936 = vrot.slane %v1931, %v1935
  %v1939 = vsel %vm56, %v1921, 0
  %v1942 = vsel %vm56, %v1922, 0
  %1944 = vmatprep.subr.mxu0 0.0
  %1945 = vmatpush1.msra.mxu0 %v1923
  %1946 = vmatprep.subr.mxu0 0.0
  %1947 = vmatpush1.msra.mxu0 %v1924
  %1948 = vmatprep.subr.mxu0 0.0
  %1949 = vmatpush1.msra.mxu0 %v1925
  %1950 = vmatprep.subr.mxu0 0.0
  %1951 = vmatpush1.msra.mxu0 %v1926
  %1952 = vmatprep.subr.mxu0 0.0
  %1953 = vmatpush1.msra.mxu0 %v1927
  %1954 = vmatprep.subr.mxu0 0.0
  %1955 = vmatpush1.msra.mxu0 %v1928
  %1956 = vmatprep.subr.mxu0 0.0
  %1957 = vmatpush1.msra.mxu0 %v1929
  %1958 = vmatprep.subr.mxu0 0.0
  %1959 = vmatpush1.msra.mxu0 %v1930
  %1960 = vmatprep.subr.mxu0 0.0
  %1961 = vmatpush1.msra.mxu0 0.0
  %1962 = vmatprep.subr.mxu0 0.0
  %1963 = vmatpush1.msra.mxu0 0.0
  %1964 = vmatprep.subr.mxu0 0.0
  %1965 = vmatpush1.msra.mxu0 0.0
  %1966 = vmatprep.subr.mxu0 0.0
  %1967 = vmatpush1.msra.mxu0 0.0
  %1968 = vmatprep.subr.mxu0 0.0
  %1969 = vmatpush1.msra.mxu0 0.0
  %1970 = vmatprep.subr.mxu0 0.0
  %1971 = vmatpush1.msra.mxu0 0.0
  %1972 = vmatprep.subr.mxu0 0.0
  %1973 = vmatpush1.msra.mxu0 0.0
  %1974 = vmatprep.subr.mxu0 0.0
  %1975 = vmatpush1.msra.mxu0 0.0
  %1976 = vmatprep.subr.mxu0 0.0
  %1977 = vmatpush1.msra.mxu0 0.0
  %1978 = vmatprep.subr.mxu0 0.0
  %1979 = vmatpush1.msra.mxu0 0.0
  %1980 = vmatprep.subr.mxu0 0.0
  %1981 = vmatpush1.msra.mxu0 0.0
  %1982 = vmatprep.subr.mxu0 0.0
  %1983 = vmatpush1.msra.mxu0 0.0
  %1984 = vmatprep.subr.mxu0 0.0
  %1985 = vmatpush1.msra.mxu0 0.0
  %1986 = vmatprep.subr.mxu0 0.0
  %1987 = vmatpush1.msra.mxu0 0.0
  %1988 = vmatprep.subr.mxu0 0.0
  %1989 = vmatpush1.msra.mxu0 0.0
  %1990 = vmatprep.subr.mxu0 0.0
  %1991 = vmatpush1.msra.mxu0 0.0
  %1992 = vmatprep.subr.mxu0 0.0
  %1993 = vmatpush1.msra.mxu0 0.0
  %1994 = vmatprep.subr.mxu0 0.0
  %1995 = vmatpush1.msra.mxu0 0.0
  %1996 = vmatprep.subr.mxu0 0.0
  %1997 = vmatpush1.msra.mxu0 0.0
  %1998 = vmatprep.subr.mxu0 0.0
  %1999 = vmatpush1.msra.mxu0 0.0
  %2000 = vmatprep.subr.mxu0 0.0
  %2001 = vmatpush1.msra.mxu0 0.0
  %2002 = vmatprep.subr.mxu0 0.0
  %2003 = vmatpush1.msra.mxu0 0.0
  %2004 = vmatprep.subr.mxu0 0.0
  %2005 = vmatpush1.msra.mxu0 0.0
  %2006 = vmatprep.subr.mxu0 0.0
  %2007 = vmatpush1.msra.mxu0 0.0
  %2008 = vmatprep.mubr.f32.mxu0 0.0
  %2009 = vmatmul.mubr.f32.gmra.mrb[0].mxu0 %v1939
  %v2010 = vpop.f32.mrb[0].mxu0
  %v2011 = vadd.f32 %v1936, %v2010
  %v2012 = vpop.f32.mrb[0].mxu0
  %2013 = vmatprep.mubr.f32.mxu0 0.0
  %2014 = vmatmul.mubr.f32.gmra.mrb[0].mxu0 %v1942
  %v2015 = vpop.f32.mrb[0].mxu0
  %v2016 = vadd.f32 %v1936, %v2015
  %v2017 = vpop.f32.mrb[0].mxu0
  %2018 = vdwg.mxu0
  %vm2019 = vcmask 64512
  %2020 = vst.msk [vmem:[%s7] sm:$0xff] %vm2019, %v2011
  %2021 = vst.msk [vmem:[%s7 + $0x8] sm:$0xff] %vm2019, %v2016
  // Predicated region
  $region30: #{lstm_ner_forward.3} parent=0 // pred_check
    _
  $region31: #{lstm_ner_forward.3} parent=0 // pred_check_branch
    %2023 = sbr.rel (0) target = $region33
  $region32: #{lstm_ner_forward.3} parent=0 // pred_region
    _
  $region33: #{lstm_ner_forward.3} parent=0 // pred_fallthru
    _
  // Predicated region
  $region34: #{lstm_ner_forward.3} parent=0 // pred_check
    _
  $region35: #{lstm_ner_forward.3} parent=0 // pred_check_branch
    %2025 = sbr.rel (0) target = $region37
  $region36: #{lstm_ner_forward.3} parent=0 // pred_region
    _
  $region37: #{lstm_ner_forward.3} parent=0 // pred_fallthru
    _

// kernel: lstm_ner_forward.2
$region0: #{lstm_ner_forward.2}
  #allocation0 [shape = 'u32[]', space=smem, size = 0x4, offset = 0x4, fixed_abs, tag = 'smem constant byte address 0x4 - core index']
  #allocation1 [shape = 'u32[144,128]{1,0:T(1,128)}', space=vmem, size = 0x12000, scoped, tag = 'internal scratch']
  #allocation2 [shape = 'f32[16,256]{1,0:T(8,128)}', space=vmem, size = 0x4000, scoped, tag = 'scratch operand']
  %s0 = inlined_call_operand.vmem [shape: f32[16,32], index: 0, kind: input, shape index: {}]
  %s1 = inlined_call_operand.vmem [shape: f32[32,256], index: 1, kind: input, shape index: {}]
  %s2 = inlined_call_operand.vmem [shape: f32[32,128], index: 2, kind: input, shape index: {}]
  %s3 = inlined_call_operand.vmem [shape: f32[32,128], index: 3, kind: input, shape index: {}]
  %s4 = inlined_call_operand.vmem [shape: f32[1,256], index: 4, kind: input, shape index: {}]
  %s5 = inlined_call_operand.vmem [shape: f32[16,64], index: 5, kind: output, shape index: {}]
  %s6 = sld [smem:[#allocation0]]
  $region30: #{lstm_ner_forward.2} parent=0
    _
  %s8 = ssub.s32 1, %s6
  %s9 = scalar_select 0, %s8, %s6
  // Predicated region
  $region2: #{lstm_ner_forward.2} parent=0 // pred_check
    _
  $region3: #{lstm_ner_forward.2} parent=0 // pred_check_branch
    %11 = sbr.rel (0) target = $region5
  $region4: #{lstm_ner_forward.2} parent=0 // pred_region
    _
  $region5: #{lstm_ner_forward.2} parent=0 // pred_fallthru
    _
  // Predicated region
  $region6: #{lstm_ner_forward.2} parent=0 // pred_check
    _
  $region7: #{lstm_ner_forward.2} parent=0 // pred_check_branch
    %13 = sbr.rel (0) target = $region9
  $region8: #{lstm_ner_forward.2} parent=0 // pred_region
    _
  $region9: #{lstm_ner_forward.2} parent=0 // pred_fallthru
    _
  // Predicated region
  $region10: #{lstm_ner_forward.2} parent=0 // pred_check
    _
  $region11: #{lstm_ner_forward.2} parent=0 // pred_check_branch
    %15 = sbr.rel (0) target = $region13
  $region12: #{lstm_ner_forward.2} parent=0 // pred_region
    _
  $region13: #{lstm_ner_forward.2} parent=0 // pred_fallthru
    _
  // Predicated region
  $region14: #{lstm_ner_forward.2} parent=0 // pred_check
    _
  $region15: #{lstm_ner_forward.2} parent=0 // pred_check_branch
    %17 = sbr.rel (0) target = $region17
  $region16: #{lstm_ner_forward.2} parent=0 // pred_region
    _
  $region17: #{lstm_ner_forward.2} parent=0 // pred_fallthru
    _
  // Predicated region
  $region18: #{lstm_ner_forward.2} parent=0 // pred_check
    _
  $region19: #{lstm_ner_forward.2} parent=0 // pred_check_branch
    %19 = sbr.rel (0) target = $region21
  $region20: #{lstm_ner_forward.2} parent=0 // pred_region
    _
  $region21: #{lstm_ner_forward.2} parent=0 // pred_fallthru
    _
  %v20 = vld [vmem:[%s0] sm:$0xff]
  %v21 = vld [vmem:[%s0 + $0x8] sm:$0xff]
  %v22 = vld [vmem:[%s1] sm:$0xff]
  %v23 = vld [vmem:[%s1 + $0x8] sm:$0xff]
  %v24 = vld [vmem:[%s1 + $0x10] sm:$0xff]
  %v25 = vld [vmem:[%s1 + $0x18] sm:$0xff]
  %v26 = vld [vmem:[%s1 + $0x20] sm:$0xff]
  %v27 = vld [vmem:[%s1 + $0x28] sm:$0xff]
  %v28 = vld [vmem:[%s1 + $0x30] sm:$0xff]
  %v29 = vld [vmem:[%s1 + $0x38] sm:$0xff]
  %v30 = vld [vmem:[%s4] sm:$0x3]
  %v32 = vlaneseq
  %v33 = vshrl.u32 %v32, 7
  %v34 = vsub.s32 0, %v33
  %v35 = vrot.slane %v30, %v34
  %v36 = vlaneseq
  %v37 = vshrl.u32 %v36, 7
  %v38 = vsub.s32 1, %v37
  %v39 = vrot.slane %v30, %v38
  %vm42 = vcmask 261120
  %v44 = vsel %vm42, %v20, 0
  %v47 = vsel %vm42, %v21, 0
  %49 = vmatprep.subr.mxu0 %v23
  %50 = vmatpush1.msra.mxu0 %v22
  %51 = vmatprep.subr.mxu0 %v25
  %52 = vmatpush1.msra.mxu0 %v24
  %53 = vmatprep.subr.mxu0 %v27
  %54 = vmatpush1.msra.mxu0 %v26
  %55 = vmatprep.subr.mxu0 %v29
  %56 = vmatpush1.msra.mxu0 %v28
  %57 = vmatprep.subr.mxu0 0.0
  %58 = vmatpush1.msra.mxu0 0.0
  %59 = vmatprep.subr.mxu0 0.0
  %60 = vmatpush1.msra.mxu0 0.0
  %61 = vmatprep.subr.mxu0 0.0
  %62 = vmatpush1.msra.mxu0 0.0
  %63 = vmatprep.subr.mxu0 0.0
  %64 = vmatpush1.msra.mxu0 0.0
  %65 = vmatprep.subr.mxu0 0.0
  %66 = vmatpush1.msra.mxu0 0.0
  %67 = vmatprep.subr.mxu0 0.0
  %68 = vmatpush1.msra.mxu0 0.0
  %69 = vmatprep.subr.mxu0 0.0
  %70 = vmatpush1.msra.mxu0 0.0
  %71 = vmatprep.subr.mxu0 0.0
  %72 = vmatpush1.msra.mxu0 0.0
  %73 = vmatprep.subr.mxu0 0.0
  %74 = vmatpush1.msra.mxu0 0.0
  %75 = vmatprep.subr.mxu0 0.0
  %76 = vmatpush1.msra.mxu0 0.0
  %77 = vmatprep.subr.mxu0 0.0
  %78 = vmatpush1.msra.mxu0 0.0
  %79 = vmatprep.subr.mxu0 0.0
  %80 = vmatpush1.msra.mxu0 0.0
  %81 = vmatprep.subr.mxu0 0.0
  %82 = vmatpush1.msra.mxu0 0.0
  %83 = vmatprep.subr.mxu0 0.0
  %84 = vmatpush1.msra.mxu0 0.0
  %85 = vmatprep.subr.mxu0 0.0
  %86 = vmatpush1.msra.mxu0 0.0
  %87 = vmatprep.subr.mxu0 0.0
  %88 = vmatpush1.msra.mxu0 0.0
  %89 = vmatprep.subr.mxu0 0.0
  %90 = vmatpush1.msra.mxu0 0.0
  %91 = vmatprep.subr.mxu0 0.0
  %92 = vmatpush1.msra.mxu0 0.0
  %93 = vmatprep.subr.mxu0 0.0
  %94 = vmatpush1.msra.mxu0 0.0
  %95 = vmatprep.subr.mxu0 0.0
  %96 = vmatpush1.msra.mxu0 0.0
  %97 = vmatprep.subr.mxu0 0.0
  %98 = vmatpush1.msra.mxu0 0.0
  %99 = vmatprep.subr.mxu0 0.0
  %100 = vmatpush1.msra.mxu0 0.0
  %101 = vmatprep.subr.mxu0 0.0
  %102 = vmatpush1.msra.mxu0 0.0
  %103 = vmatprep.subr.mxu0 0.0
  %104 = vmatpush1.msra.mxu0 0.0
  %105 = vmatprep.subr.mxu0 0.0
  %106 = vmatpush1.msra.mxu0 0.0
  %107 = vmatprep.subr.mxu0 0.0
  %108 = vmatpush1.msra.mxu0 0.0
  %109 = vmatprep.subr.mxu0 0.0
  %110 = vmatpush1.msra.mxu0 0.0
  %111 = vmatprep.subr.mxu0 0.0
  %112 = vmatpush1.msra.mxu0 0.0
  %113 = vmatprep.mubr.f32.mxu0 0.0
  %114 = vmatmul.mubr.f32.gmra.mrb[0].mxu0 %v44
  %v115 = vpop.f32.mrb[0].mxu0
  %v116 = vadd.f32 %v35, %v115
  %v117 = vpop.f32.mrb[0].mxu0
  %v118 = vadd.f32 %v39, %v117
  %119 = vmatprep.mubr.f32.mxu0 0.0
  %120 = vmatmul.mubr.f32.gmra.mrb[0].mxu0 %v47
  %v121 = vpop.f32.mrb[0].mxu0
  %v122 = vadd.f32 %v35, %v121
  %v123 = vpop.f32.mrb[0].mxu0
  %v124 = vadd.f32 %v39, %v123
  %125 = vdwg.mxu0
  %126 = vst [vmem:[#allocation2] sm:$0xff] %v116
  %127 = vst [vmem:[#allocation2 + $0x8] sm:$0xff] %v118
  %128 = vst [vmem:[#allocation2 + $0x10] sm:$0xff] %v122
  %129 = vst [vmem:[#allocation2 + $0x18] sm:$0xff] %v124
  %v130 = vld [vmem:[%s2] sm:$0xff]
  %v131 = vld [vmem:[%s2 + $0x8] sm:$0xff]
  %v132 = vld [vmem:[%s2 + $0x10] sm:$0xff]
  %v133 = vld [vmem:[%s2 + $0x18] sm:$0xff]
  %v134 = vld [vmem:[%s3] sm:$0xff]
  %v135 = vld [vmem:[%s3 + $0x8] sm:$0xff]
  %v136 = vld [vmem:[%s3 + $0x10] sm:$0xff]
  %v137 = vld [vmem:[%s3 + $0x18] sm:$0xff]
  %v138 = vld [vmem:[#allocation2] sm:$0x3]
  %v139 = vld [vmem:[#allocation2 + $0x18] sm:$0xc0]
  %v141 = vsel %vm42, 0.0, 0
  %143 = vmatprep.subr.mxu0 0.0
  %144 = vmatpush1.msra.mxu0 %v130
  %145 = vmatprep.subr.mxu0 0.0
  %146 = vmatpush1.msra.mxu0 %v131
  %147 = vmatprep.subr.mxu0 0.0
  %148 = vmatpush1.msra.mxu0 %v132
  %149 = vmatprep.subr.mxu0 0.0
  %150 = vmatpush1.msra.mxu0 %v133
  %151 = vmatprep.subr.mxu0 0.0
  %152 = vmatpush1.msra.mxu0 0.0
  %153 = vmatprep.subr.mxu0 0.0
  %154 = vmatpush1.msra.mxu0 0.0
  %155 = vmatprep.subr.mxu0 0.0
  %156 = vmatpush1.msra.mxu0 0.0
  %157 = vmatprep.subr.mxu0 0.0
  %158 = vmatpush1.msra.mxu0 0.0
  %159 = vmatprep.subr.mxu0 0.0
  %160 = vmatpush1.msra.mxu0 0.0
  %161 = vmatprep.subr.mxu0 0.0
  %162 = vmatpush1.msra.mxu0 0.0
  %163 = vmatprep.subr.mxu0 0.0
  %164 = vmatpush1.msra.mxu0 0.0
  %165 = vmatprep.subr.mxu0 0.0
  %166 = vmatpush1.msra.mxu0 0.0
  %167 = vmatprep.subr.mxu0 0.0
  %168 = vmatpush1.msra.mxu0 0.0
  %169 = vmatprep.subr.mxu0 0.0
  %170 = vmatpush1.msra.mxu0 0.0
  %171 = vmatprep.subr.mxu0 0.0
  %172 = vmatpush1.msra.mxu0 0.0
  %173 = vmatprep.subr.mxu0 0.0
  %174 = vmatpush1.msra.mxu0 0.0
  %175 = vmatprep.subr.mxu0 0.0
  %176 = vmatpush1.msra.mxu0 0.0
  %177 = vmatprep.subr.mxu0 0.0
  %178 = vmatpush1.msra.mxu0 0.0
  %179 = vmatprep.subr.mxu0 0.0
  %180 = vmatpush1.msra.mxu0 0.0
  %181 = vmatprep.subr.mxu0 0.0
  %182 = vmatpush1.msra.mxu0 0.0
  %183 = vmatprep.subr.mxu0 0.0
  %184 = vmatpush1.msra.mxu0 0.0
  %185 = vmatprep.subr.mxu0 0.0
  %186 = vmatpush1.msra.mxu0 0.0
  %187 = vmatprep.subr.mxu0 0.0
  %188 = vmatpush1.msra.mxu0 0.0
  %189 = vmatprep.subr.mxu0 0.0
  %190 = vmatpush1.msra.mxu0 0.0
  %191 = vmatprep.subr.mxu0 0.0
  %192 = vmatpush1.msra.mxu0 0.0
  %193 = vmatprep.subr.mxu0 0.0
  %194 = vmatpush1.msra.mxu0 0.0
  %195 = vmatprep.subr.mxu0 0.0
  %196 = vmatpush1.msra.mxu0 0.0
  %197 = vmatprep.subr.mxu0 0.0
  %198 = vmatpush1.msra.mxu0 0.0
  %199 = vmatprep.subr.mxu0 0.0
  %200 = vmatpush1.msra.mxu0 0.0
  %201 = vmatprep.subr.mxu0 0.0
  %202 = vmatpush1.msra.mxu0 0.0
  %203 = vmatprep.subr.mxu0 0.0
  %204 = vmatpush1.msra.mxu0 0.0
  %205 = vmatprep.subr.mxu0 0.0
  %206 = vmatpush1.msra.mxu0 0.0
  %207 = vmatprep.mubr.f32.mxu0 0.0
  %208 = vmatmul.mubr.f32.gmra.mrb[0].mxu0 %v141
  %v209 = vpop.f32.mrb[0].mxu0
  %v210 = vadd.f32 0.0, %v209
  %v211 = vpop.f32.mrb[0].mxu0
  %212 = vdwg.mxu0
  %v213 = vadd.f32 %v138, %v210
  %214 = vmatprep.subr.mxu0 0.0
  %215 = vmatpush1.msra.mxu0 %v134
  %216 = vmatprep.subr.mxu0 0.0
  %217 = vmatpush1.msra.mxu0 %v135
  %218 = vmatprep.subr.mxu0 0.0
  %219 = vmatpush1.msra.mxu0 %v136
  %220 = vmatprep.subr.mxu0 0.0
  %221 = vmatpush1.msra.mxu0 %v137
  %222 = vmatprep.subr.mxu0 0.0
  %223 = vmatpush1.msra.mxu0 0.0
  %224 = vmatprep.subr.mxu0 0.0
  %225 = vmatpush1.msra.mxu0 0.0
  %226 = vmatprep.subr.mxu0 0.0
  %227 = vmatpush1.msra.mxu0 0.0
  %228 = vmatprep.subr.mxu0 0.0
  %229 = vmatpush1.msra.mxu0 0.0
  %230 = vmatprep.subr.mxu0 0.0
  %231 = vmatpush1.msra.mxu0 0.0
  %232 = vmatprep.subr.mxu0 0.0
  %233 = vmatpush1.msra.mxu0 0.0
  %234 = vmatprep.subr.mxu0 0.0
  %235 = vmatpush1.msra.mxu0 0.0
  %236 = vmatprep.subr.mxu0 0.0
  %237 = vmatpush1.msra.mxu0 0.0
  %238 = vmatprep.subr.mxu0 0.0
  %239 = vmatpush1.msra.mxu0 0.0
  %240 = vmatprep.subr.mxu0 0.0
  %241 = vmatpush1.msra.mxu0 0.0
  %242 = vmatprep.subr.mxu0 0.0
  %243 = vmatpush1.msra.mxu0 0.0
  %244 = vmatprep.subr.mxu0 0.0
  %245 = vmatpush1.msra.mxu0 0.0
  %246 = vmatprep.subr.mxu0 0.0
  %247 = vmatpush1.msra.mxu0 0.0
  %248 = vmatprep.subr.mxu0 0.0
  %249 = vmatpush1.msra.mxu0 0.0
  %250 = vmatprep.subr.mxu0 0.0
  %251 = vmatpush1.msra.mxu0 0.0
  %252 = vmatprep.subr.mxu0 0.0
  %253 = vmatpush1.msra.mxu0 0.0
  %254 = vmatprep.subr.mxu0 0.0
  %255 = vmatpush1.msra.mxu0 0.0
  %256 = vmatprep.subr.mxu0 0.0
  %257 = vmatpush1.msra.mxu0 0.0
  %258 = vmatprep.subr.mxu0 0.0
  %259 = vmatpush1.msra.mxu0 0.0
  %260 = vmatprep.subr.mxu0 0.0
  %261 = vmatpush1.msra.mxu0 0.0
  %262 = vmatprep.subr.mxu0 0.0
  %263 = vmatpush1.msra.mxu0 0.0
  %264 = vmatprep.subr.mxu0 0.0
  %265 = vmatpush1.msra.mxu0 0.0
  %266 = vmatprep.subr.mxu0 0.0
  %267 = vmatpush1.msra.mxu0 0.0
  %268 = vmatprep.subr.mxu0 0.0
  %269 = vmatpush1.msra.mxu0 0.0
  %270 = vmatprep.subr.mxu0 0.0
  %271 = vmatpush1.msra.mxu0 0.0
  %272 = vmatprep.subr.mxu0 0.0
  %273 = vmatpush1.msra.mxu0 0.0
  %274 = vmatprep.subr.mxu0 0.0
  %275 = vmatpush1.msra.mxu0 0.0
  %276 = vmatprep.subr.mxu0 0.0
  %277 = vmatpush1.msra.mxu0 0.0
  %278 = vmatprep.mubr.f32.mxu0 0.0
  %279 = vmatmul.mubr.f32.gmra.mrb[0].mxu0 %v141
  %v280 = vpop.f32.mrb[0].mxu0
  %v281 = vadd.f32 0.0, %v280
  %v282 = vpop.f32.mrb[0].mxu0
  %283 = vdwg.mxu0
  %v285 = vrot.slane %v281, 2
  %v287 = vadd.f32 %v139, %v285
  %v288 = vxor.u32 %v213, 2147483648
  %v289 = vmul.f32 %v288, 1.442695
  %v290 = vpow.pop %v289
  %v291 = vadd.f32 %v290, 1.0
  %v292 = vrcp.pop %v291
  %v293 = vmul.f32 1.0, %v292
  %v294 = vtanh.pop %v213
  %v295 = vmul.f32 %v293, 0.0
  %297 = vrot.lane.b32.xlu0 %v294, 64
  %v298 = vpop.permute.xlu0 %297
  %v300 = vmul.f32 %v293, %v298
  %302 = vrot.lane.b32.xlu0 %v300, 32
  %v303 = vpop.permute.xlu0 %302
  %v305 = vadd.f32 %v295, %v303
  %v306 = vtanh.pop %v305
  %308 = vrot.lane.b32.xlu0 %v306, 64
  %v309 = vpop.permute.xlu0 %308
  %v311 = vmul.f32 %v293, %v309
  %v312 = vxor.u32 %v287, 2147483648
  %v313 = vmul.f32 %v312, 1.442695
  %v314 = vpow.pop %v313
  %v315 = vadd.f32 %v314, 1.0
  %v316 = vrcp.pop %v315
  %v317 = vmul.f32 1.0, %v316
  %v318 = vtanh.pop %v287
  %v319 = vmul.f32 %v317, 0.0
  %321 = vrot.lane.b32.xlu0 %v318, 64
  %v322 = vpop.permute.xlu0 %321
  %v324 = vmul.f32 %v317, %v322
  %326 = vrot.lane.b32.xlu0 %v324, 32
  %v327 = vpop.permute.xlu0 %326
  %v329 = vadd.f32 %v319, %v327
  %v330 = vtanh.pop %v329
  %332 = vrot.lane.b32.xlu0 %v330, 64
  %v333 = vpop.permute.xlu0 %332
  %v335 = vmul.f32 %v317, %v333
  %337 = vrot.lane.b32.xlu0 %v311, 32
  %v338 = vpop.permute.xlu0 %337
  %vm340 = vcmask 254976
  %341 = vst.msk [vmem:[%s5] sm:$0x3] %vm340, %v338
  %343 = vrot.lane.b32.xlu0 %v335, 64
  %v344 = vpop.permute.xlu0 %343
  %vm346 = vcmask 523526
  %347 = vst.msk [vmem:[%s5 + $0x8] sm:$0xc0] %vm346, %v344
  %v348 = vld [vmem:[#allocation2] sm:$0xc]
  %v349 = vld [vmem:[#allocation2 + $0x18] sm:$0x30]
  %v350 = vsel %vm42, %v338, 0
  %352 = vmatprep.subr.mxu0 0.0
  %353 = vmatpush1.msra.mxu0 %v130
  %354 = vmatprep.subr.mxu0 0.0
  %355 = vmatpush1.msra.mxu0 %v131
  %356 = vmatprep.subr.mxu0 0.0
  %357 = vmatpush1.msra.mxu0 %v132
  %358 = vmatprep.subr.mxu0 0.0
  %359 = vmatpush1.msra.mxu0 %v133
  %360 = vmatprep.subr.mxu0 0.0
  %361 = vmatpush1.msra.mxu0 0.0
  %362 = vmatprep.subr.mxu0 0.0
  %363 = vmatpush1.msra.mxu0 0.0
  %364 = vmatprep.subr.mxu0 0.0
  %365 = vmatpush1.msra.mxu0 0.0
  %366 = vmatprep.subr.mxu0 0.0
  %367 = vmatpush1.msra.mxu0 0.0
  %368 = vmatprep.subr.mxu0 0.0
  %369 = vmatpush1.msra.mxu0 0.0
  %370 = vmatprep.subr.mxu0 0.0
  %371 = vmatpush1.msra.mxu0 0.0
  %372 = vmatprep.subr.mxu0 0.0
  %373 = vmatpush1.msra.mxu0 0.0
  %374 = vmatprep.subr.mxu0 0.0
  %375 = vmatpush1.msra.mxu0 0.0
  %376 = vmatprep.subr.mxu0 0.0
  %377 = vmatpush1.msra.mxu0 0.0
  %378 = vmatprep.subr.mxu0 0.0
  %379 = vmatpush1.msra.mxu0 0.0
  %380 = vmatprep.subr.mxu0 0.0
  %381 = vmatpush1.msra.mxu0 0.0
  %382 = vmatprep.subr.mxu0 0.0
  %383 = vmatpush1.msra.mxu0 0.0
  %384 = vmatprep.subr.mxu0 0.0
  %385 = vmatpush1.msra.mxu0 0.0
  %386 = vmatprep.subr.mxu0 0.0
  %387 = vmatpush1.msra.mxu0 0.0
  %388 = vmatprep.subr.mxu0 0.0
  %389 = vmatpush1.msra.mxu0 0.0
  %390 = vmatprep.subr.mxu0 0.0
  %391 = vmatpush1.msra.mxu0 0.0
  %392 = vmatprep.subr.mxu0 0.0
  %393 = vmatpush1.msra.mxu0 0.0
  %394 = vmatprep.subr.mxu0 0.0
  %395 = vmatpush1.msra.mxu0 0.0
  %396 = vmatprep.subr.mxu0 0.0
  %397 = vmatpush1.msra.mxu0 0.0
  %398 = vmatprep.subr.mxu0 0.0
  %399 = vmatpush1.msra.mxu0 0.0
  %400 = vmatprep.subr.mxu0 0.0
  %401 = vmatpush1.msra.mxu0 0.0
  %402 = vmatprep.subr.mxu0 0.0
  %403 = vmatpush1.msra.mxu0 0.0
  %404 = vmatprep.subr.mxu0 0.0
  %405 = vmatpush1.msra.mxu0 0.0
  %406 = vmatprep.subr.mxu0 0.0
  %407 = vmatpush1.msra.mxu0 0.0
  %408 = vmatprep.subr.mxu0 0.0
  %409 = vmatpush1.msra.mxu0 0.0
  %410 = vmatprep.subr.mxu0 0.0
  %411 = vmatpush1.msra.mxu0 0.0
  %412 = vmatprep.subr.mxu0 0.0
  %413 = vmatpush1.msra.mxu0 0.0
  %414 = vmatprep.subr.mxu0 0.0
  %415 = vmatpush1.msra.mxu0 0.0
  %416 = vmatprep.mubr.f32.mxu0 0.0
  %417 = vmatmul.mubr.f32.gmra.mrb[0].mxu0 %v350
  %v418 = vpop.f32.mrb[0].mxu0
  %v419 = vadd.f32 0.0, %v418
  %v420 = vpop.f32.mrb[0].mxu0
  %421 = vdwg.mxu0
  %v423 = vrot.slane %v419, 6
  %v425 = vadd.f32 %v348, %v423
  %v426 = vrot.slane %v335, 6
  %427 = vrot.lane.b32.xlu0 %v426, 32
  %v428 = vpop.permute.xlu0 %427
  %v429 = vsel %vm42, %v428, 0
  %431 = vmatprep.subr.mxu0 0.0
  %432 = vmatpush1.msra.mxu0 %v134
  %433 = vmatprep.subr.mxu0 0.0
  %434 = vmatpush1.msra.mxu0 %v135
  %435 = vmatprep.subr.mxu0 0.0
  %436 = vmatpush1.msra.mxu0 %v136
  %437 = vmatprep.subr.mxu0 0.0
  %438 = vmatpush1.msra.mxu0 %v137
  %439 = vmatprep.subr.mxu0 0.0
  %440 = vmatpush1.msra.mxu0 0.0
  %441 = vmatprep.subr.mxu0 0.0
  %442 = vmatpush1.msra.mxu0 0.0
  %443 = vmatprep.subr.mxu0 0.0
  %444 = vmatpush1.msra.mxu0 0.0
  %445 = vmatprep.subr.mxu0 0.0
  %446 = vmatpush1.msra.mxu0 0.0
  %447 = vmatprep.subr.mxu0 0.0
  %448 = vmatpush1.msra.mxu0 0.0
  %449 = vmatprep.subr.mxu0 0.0
  %450 = vmatpush1.msra.mxu0 0.0
  %451 = vmatprep.subr.mxu0 0.0
  %452 = vmatpush1.msra.mxu0 0.0
  %453 = vmatprep.subr.mxu0 0.0
  %454 = vmatpush1.msra.mxu0 0.0
  %455 = vmatprep.subr.mxu0 0.0
  %456 = vmatpush1.msra.mxu0 0.0
  %457 = vmatprep.subr.mxu0 0.0
  %458 = vmatpush1.msra.mxu0 0.0
  %459 = vmatprep.subr.mxu0 0.0
  %460 = vmatpush1.msra.mxu0 0.0
  %461 = vmatprep.subr.mxu0 0.0
  %462 = vmatpush1.msra.mxu0 0.0
  %463 = vmatprep.subr.mxu0 0.0
  %464 = vmatpush1.msra.mxu0 0.0
  %465 = vmatprep.subr.mxu0 0.0
  %466 = vmatpush1.msra.mxu0 0.0
  %467 = vmatprep.subr.mxu0 0.0
  %468 = vmatpush1.msra.mxu0 0.0
  %469 = vmatprep.subr.mxu0 0.0
  %470 = vmatpush1.msra.mxu0 0.0
  %471 = vmatprep.subr.mxu0 0.0
  %472 = vmatpush1.msra.mxu0 0.0
  %473 = vmatprep.subr.mxu0 0.0
  %474 = vmatpush1.msra.mxu0 0.0
  %475 = vmatprep.subr.mxu0 0.0
  %476 = vmatpush1.msra.mxu0 0.0
  %477 = vmatprep.subr.mxu0 0.0
  %478 = vmatpush1.msra.mxu0 0.0
  %479 = vmatprep.subr.mxu0 0.0
  %480 = vmatpush1.msra.mxu0 0.0
  %481 = vmatprep.subr.mxu0 0.0
  %482 = vmatpush1.msra.mxu0 0.0
  %483 = vmatprep.subr.mxu0 0.0
  %484 = vmatpush1.msra.mxu0 0.0
  %485 = vmatprep.subr.mxu0 0.0
  %486 = vmatpush1.msra.mxu0 0.0
  %487 = vmatprep.subr.mxu0 0.0
  %488 = vmatpush1.msra.mxu0 0.0
  %489 = vmatprep.subr.mxu0 0.0
  %490 = vmatpush1.msra.mxu0 0.0
  %491 = vmatprep.subr.mxu0 0.0
  %492 = vmatpush1.msra.mxu0 0.0
  %493 = vmatprep.subr.mxu0 0.0
  %494 = vmatpush1.msra.mxu0 0.0
  %495 = vmatprep.mubr.f32.mxu0 0.0
  %496 = vmatmul.mubr.f32.gmra.mrb[0].mxu0 %v429
  %v497 = vpop.f32.mrb[0].mxu0
  %v498 = vadd.f32 0.0, %v497
  %v499 = vpop.f32.mrb[0].mxu0
  %500 = vdwg.mxu0
  %v502 = vrot.slane %v498, 4
  %v504 = vadd.f32 %v349, %v502
  %v505 = vxor.u32 %v425, 2147483648
  %v506 = vmul.f32 %v505, 1.442695
  %v507 = vpow.pop %v506
  %v508 = vadd.f32 %v507, 1.0
  %v509 = vrcp.pop %v508
  %v510 = vmul.f32 1.0, %v509
  %v511 = vtanh.pop %v425
  %v513 = vrot.slane %v305, 6
  %v515 = vmul.f32 %v510, %v513
  %517 = vrot.lane.b32.xlu0 %v511, 64
  %v518 = vpop.permute.xlu0 %517
  %v520 = vmul.f32 %v510, %v518
  %522 = vrot.lane.b32.xlu0 %v520, 32
  %v523 = vpop.permute.xlu0 %522
  %v525 = vadd.f32 %v515, %v523
  %v526 = vtanh.pop %v525
  %528 = vrot.lane.b32.xlu0 %v526, 64
  %v529 = vpop.permute.xlu0 %528
  %v531 = vmul.f32 %v510, %v529
  %v532 = vxor.u32 %v504, 2147483648
  %v533 = vmul.f32 %v532, 1.442695
  %v534 = vpow.pop %v533
  %v535 = vadd.f32 %v534, 1.0
  %v536 = vrcp.pop %v535
  %v537 = vmul.f32 1.0, %v536
  %v538 = vtanh.pop %v504
  %v540 = vrot.slane %v329, 2
  %v542 = vmul.f32 %v537, %v540
  %544 = vrot.lane.b32.xlu0 %v538, 64
  %v545 = vpop.permute.xlu0 %544
  %v547 = vmul.f32 %v537, %v545
  %549 = vrot.lane.b32.xlu0 %v547, 32
  %v550 = vpop.permute.xlu0 %549
  %v552 = vadd.f32 %v542, %v550
  %v553 = vtanh.pop %v552
  %555 = vrot.lane.b32.xlu0 %v553, 64
  %v556 = vpop.permute.xlu0 %555
  %v558 = vmul.f32 %v537, %v556
  %560 = vrot.lane.b32.xlu0 %v531, 32
  %v561 = vpop.permute.xlu0 %560
  %vm563 = vcmask 257026
  %564 = vst.msk [vmem:[%s5] sm:$0xc] %vm563, %v561
  %566 = vrot.lane.b32.xlu0 %v558, 64
  %v567 = vpop.permute.xlu0 %566
  %vm569 = vcmask 521476
  %570 = vst.msk [vmem:[%s5 + $0x8] sm:$0x30] %vm569, %v567
  %v571 = vld [vmem:[#allocation2] sm:$0x30]
  %v572 = vld [vmem:[#allocation2 + $0x18] sm:$0xc]
  %v573 = vrot.slane %v531, 2
  %574 = vrot.lane.b32.xlu0 %v573, 32
  %v575 = vpop.permute.xlu0 %574
  %v576 = vsel %vm42, %v575, 0
  %578 = vmatprep.subr.mxu0 0.0
  %579 = vmatpush1.msra.mxu0 %v130
  %580 = vmatprep.subr.mxu0 0.0
  %581 = vmatpush1.msra.mxu0 %v131
  %582 = vmatprep.subr.mxu0 0.0
  %583 = vmatpush1.msra.mxu0 %v132
  %584 = vmatprep.subr.mxu0 0.0
  %585 = vmatpush1.msra.mxu0 %v133
  %586 = vmatprep.subr.mxu0 0.0
  %587 = vmatpush1.msra.mxu0 0.0
  %588 = vmatprep.subr.mxu0 0.0
  %589 = vmatpush1.msra.mxu0 0.0
  %590 = vmatprep.subr.mxu0 0.0
  %591 = vmatpush1.msra.mxu0 0.0
  %592 = vmatprep.subr.mxu0 0.0
  %593 = vmatpush1.msra.mxu0 0.0
  %594 = vmatprep.subr.mxu0 0.0
  %595 = vmatpush1.msra.mxu0 0.0
  %596 = vmatprep.subr.mxu0 0.0
  %597 = vmatpush1.msra.mxu0 0.0
  %598 = vmatprep.subr.mxu0 0.0
  %599 = vmatpush1.msra.mxu0 0.0
  %600 = vmatprep.subr.mxu0 0.0
  %601 = vmatpush1.msra.mxu0 0.0
  %602 = vmatprep.subr.mxu0 0.0
  %603 = vmatpush1.msra.mxu0 0.0
  %604 = vmatprep.subr.mxu0 0.0
  %605 = vmatpush1.msra.mxu0 0.0
  %606 = vmatprep.subr.mxu0 0.0
  %607 = vmatpush1.msra.mxu0 0.0
  %608 = vmatprep.subr.mxu0 0.0
  %609 = vmatpush1.msra.mxu0 0.0
  %610 = vmatprep.subr.mxu0 0.0
  %611 = vmatpush1.msra.mxu0 0.0
  %612 = vmatprep.subr.mxu0 0.0
  %613 = vmatpush1.msra.mxu0 0.0
  %614 = vmatprep.subr.mxu0 0.0
  %615 = vmatpush1.msra.mxu0 0.0
  %616 = vmatprep.subr.mxu0 0.0
  %617 = vmatpush1.msra.mxu0 0.0
  %618 = vmatprep.subr.mxu0 0.0
  %619 = vmatpush1.msra.mxu0 0.0
  %620 = vmatprep.subr.mxu0 0.0
  %621 = vmatpush1.msra.mxu0 0.0
  %622 = vmatprep.subr.mxu0 0.0
  %623 = vmatpush1.msra.mxu0 0.0
  %624 = vmatprep.subr.mxu0 0.0
  %625 = vmatpush1.msra.mxu0 0.0
  %626 = vmatprep.subr.mxu0 0.0
  %627 = vmatpush1.msra.mxu0 0.0
  %628 = vmatprep.subr.mxu0 0.0
  %629 = vmatpush1.msra.mxu0 0.0
  %630 = vmatprep.subr.mxu0 0.0
  %631 = vmatpush1.msra.mxu0 0.0
  %632 = vmatprep.subr.mxu0 0.0
  %633 = vmatpush1.msra.mxu0 0.0
  %634 = vmatprep.subr.mxu0 0.0
  %635 = vmatpush1.msra.mxu0 0.0
  %636 = vmatprep.subr.mxu0 0.0
  %637 = vmatpush1.msra.mxu0 0.0
  %638 = vmatprep.subr.mxu0 0.0
  %639 = vmatpush1.msra.mxu0 0.0
  %640 = vmatprep.subr.mxu0 0.0
  %641 = vmatpush1.msra.mxu0 0.0
  %642 = vmatprep.mubr.f32.mxu0 0.0
  %643 = vmatmul.mubr.f32.gmra.mrb[0].mxu0 %v576
  %v644 = vpop.f32.mrb[0].mxu0
  %v645 = vadd.f32 0.0, %v644
  %v646 = vpop.f32.mrb[0].mxu0
  %647 = vdwg.mxu0
  %v649 = vrot.slane %v645, 4
  %v651 = vadd.f32 %v571, %v649
  %v652 = vrot.slane %v558, 4
  %653 = vrot.lane.b32.xlu0 %v652, 32
  %v654 = vpop.permute.xlu0 %653
  %v655 = vsel %vm42, %v654, 0
  %657 = vmatprep.subr.mxu0 0.0
  %658 = vmatpush1.msra.mxu0 %v134
  %659 = vmatprep.subr.mxu0 0.0
  %660 = vmatpush1.msra.mxu0 %v135
  %661 = vmatprep.subr.mxu0 0.0
  %662 = vmatpush1.msra.mxu0 %v136
  %663 = vmatprep.subr.mxu0 0.0
  %664 = vmatpush1.msra.mxu0 %v137
  %665 = vmatprep.subr.mxu0 0.0
  %666 = vmatpush1.msra.mxu0 0.0
  %667 = vmatprep.subr.mxu0 0.0
  %668 = vmatpush1.msra.mxu0 0.0
  %669 = vmatprep.subr.mxu0 0.0
  %670 = vmatpush1.msra.mxu0 0.0
  %671 = vmatprep.subr.mxu0 0.0
  %672 = vmatpush1.msra.mxu0 0.0
  %673 = vmatprep.subr.mxu0 0.0
  %674 = vmatpush1.msra.mxu0 0.0
  %675 = vmatprep.subr.mxu0 0.0
  %676 = vmatpush1.msra.mxu0 0.0
  %677 = vmatprep.subr.mxu0 0.0
  %678 = vmatpush1.msra.mxu0 0.0
  %679 = vmatprep.subr.mxu0 0.0
  %680 = vmatpush1.msra.mxu0 0.0
  %681 = vmatprep.subr.mxu0 0.0
  %682 = vmatpush1.msra.mxu0 0.0
  %683 = vmatprep.subr.mxu0 0.0
  %684 = vmatpush1.msra.mxu0 0.0
  %685 = vmatprep.subr.mxu0 0.0
  %686 = vmatpush1.msra.mxu0 0.0
  %687 = vmatprep.subr.mxu0 0.0
  %688 = vmatpush1.msra.mxu0 0.0
  %689 = vmatprep.subr.mxu0 0.0
  %690 = vmatpush1.msra.mxu0 0.0
  %691 = vmatprep.subr.mxu0 0.0
  %692 = vmatpush1.msra.mxu0 0.0
  %693 = vmatprep.subr.mxu0 0.0
  %694 = vmatpush1.msra.mxu0 0.0
  %695 = vmatprep.subr.mxu0 0.0
  %696 = vmatpush1.msra.mxu0 0.0
  %697 = vmatprep.subr.mxu0 0.0
  %698 = vmatpush1.msra.mxu0 0.0
  %699 = vmatprep.subr.mxu0 0.0
  %700 = vmatpush1.msra.mxu0 0.0
  %701 = vmatprep.subr.mxu0 0.0
  %702 = vmatpush1.msra.mxu0 0.0
  %703 = vmatprep.subr.mxu0 0.0
  %704 = vmatpush1.msra.mxu0 0.0
  %705 = vmatprep.subr.mxu0 0.0
  %706 = vmatpush1.msra.mxu0 0.0
  %707 = vmatprep.subr.mxu0 0.0
  %708 = vmatpush1.msra.mxu0 0.0
  %709 = vmatprep.subr.mxu0 0.0
  %710 = vmatpush1.msra.mxu0 0.0
  %711 = vmatprep.subr.mxu0 0.0
  %712 = vmatpush1.msra.mxu0 0.0
  %713 = vmatprep.subr.mxu0 0.0
  %714 = vmatpush1.msra.mxu0 0.0
  %715 = vmatprep.subr.mxu0 0.0
  %716 = vmatpush1.msra.mxu0 0.0
  %717 = vmatprep.subr.mxu0 0.0
  %718 = vmatpush1.msra.mxu0 0.0
  %719 = vmatprep.subr.mxu0 0.0
  %720 = vmatpush1.msra.mxu0 0.0
  %721 = vmatprep.mubr.f32.mxu0 0.0
  %722 = vmatmul.mubr.f32.gmra.mrb[0].mxu0 %v655
  %v723 = vpop.f32.mrb[0].mxu0
  %v724 = vadd.f32 0.0, %v723
  %v725 = vpop.f32.mrb[0].mxu0
  %726 = vdwg.mxu0
  %v728 = vrot.slane %v724, 6
  %v730 = vadd.f32 %v572, %v728
  %v731 = vxor.u32 %v651, 2147483648
  %v732 = vmul.f32 %v731, 1.442695
  %v733 = vpow.pop %v732
  %v734 = vadd.f32 %v733, 1.0
  %v735 = vrcp.pop %v734
  %v736 = vmul.f32 1.0, %v735
  %v737 = vtanh.pop %v651
  %v739 = vrot.slane %v525, 6
  %v741 = vmul.f32 %v736, %v739
  %743 = vrot.lane.b32.xlu0 %v737, 64
  %v744 = vpop.permute.xlu0 %743
  %v746 = vmul.f32 %v736, %v744
  %748 = vrot.lane.b32.xlu0 %v746, 32
  %v749 = vpop.permute.xlu0 %748
  %v751 = vadd.f32 %v741, %v749
  %v752 = vtanh.pop %v751
  %754 = vrot.lane.b32.xlu0 %v752, 64
  %v755 = vpop.permute.xlu0 %754
  %v757 = vmul.f32 %v736, %v755
  %v758 = vxor.u32 %v730, 2147483648
  %v759 = vmul.f32 %v758, 1.442695
  %v760 = vpow.pop %v759
  %v761 = vadd.f32 %v760, 1.0
  %v762 = vrcp.pop %v761
  %v763 = vmul.f32 1.0, %v762
  %v764 = vtanh.pop %v730
  %v766 = vrot.slane %v552, 2
  %v768 = vmul.f32 %v763, %v766
  %770 = vrot.lane.b32.xlu0 %v764, 64
  %v771 = vpop.permute.xlu0 %770
  %v773 = vmul.f32 %v763, %v771
  %775 = vrot.lane.b32.xlu0 %v773, 32
  %v776 = vpop.permute.xlu0 %775
  %v778 = vadd.f32 %v768, %v776
  %v779 = vtanh.pop %v778
  %781 = vrot.lane.b32.xlu0 %v779, 64
  %v782 = vpop.permute.xlu0 %781
  %v784 = vmul.f32 %v763, %v782
  %786 = vrot.lane.b32.xlu0 %v757, 32
  %v787 = vpop.permute.xlu0 %786
  %vm789 = vcmask 259076
  %790 = vst.msk [vmem:[%s5] sm:$0x30] %vm789, %v787
  %792 = vrot.lane.b32.xlu0 %v784, 64
  %v793 = vpop.permute.xlu0 %792
  %vm795 = vcmask 519426
  %796 = vst.msk [vmem:[%s5 + $0x8] sm:$0xc] %vm795, %v793
  %v797 = vld [vmem:[#allocation2] sm:$0xc0]
  %v798 = vld [vmem:[#allocation2 + $0x18] sm:$0x3]
  %v799 = vrot.slane %v757, 4
  %800 = vrot.lane.b32.xlu0 %v799, 32
  %v801 = vpop.permute.xlu0 %800
  %v802 = vsel %vm42, %v801, 0
  %804 = vmatprep.subr.mxu0 0.0
  %805 = vmatpush1.msra.mxu0 %v130
  %806 = vmatprep.subr.mxu0 0.0
  %807 = vmatpush1.msra.mxu0 %v131
  %808 = vmatprep.subr.mxu0 0.0
  %809 = vmatpush1.msra.mxu0 %v132
  %810 = vmatprep.subr.mxu0 0.0
  %811 = vmatpush1.msra.mxu0 %v133
  %812 = vmatprep.subr.mxu0 0.0
  %813 = vmatpush1.msra.mxu0 0.0
  %814 = vmatprep.subr.mxu0 0.0
  %815 = vmatpush1.msra.mxu0 0.0
  %816 = vmatprep.subr.mxu0 0.0
  %817 = vmatpush1.msra.mxu0 0.0
  %818 = vmatprep.subr.mxu0 0.0
  %819 = vmatpush1.msra.mxu0 0.0
  %820 = vmatprep.subr.mxu0 0.0
  %821 = vmatpush1.msra.mxu0 0.0
  %822 = vmatprep.subr.mxu0 0.0
  %823 = vmatpush1.msra.mxu0 0.0
  %824 = vmatprep.subr.mxu0 0.0
  %825 = vmatpush1.msra.mxu0 0.0
  %826 = vmatprep.subr.mxu0 0.0
  %827 = vmatpush1.msra.mxu0 0.0
  %828 = vmatprep.subr.mxu0 0.0
  %829 = vmatpush1.msra.mxu0 0.0
  %830 = vmatprep.subr.mxu0 0.0
  %831 = vmatpush1.msra.mxu0 0.0
  %832 = vmatprep.subr.mxu0 0.0
  %833 = vmatpush1.msra.mxu0 0.0
  %834 = vmatprep.subr.mxu0 0.0
  %835 = vmatpush1.msra.mxu0 0.0
  %836 = vmatprep.subr.mxu0 0.0
  %837 = vmatpush1.msra.mxu0 0.0
  %838 = vmatprep.subr.mxu0 0.0
  %839 = vmatpush1.msra.mxu0 0.0
  %840 = vmatprep.subr.mxu0 0.0
  %841 = vmatpush1.msra.mxu0 0.0
  %842 = vmatprep.subr.mxu0 0.0
  %843 = vmatpush1.msra.mxu0 0.0
  %844 = vmatprep.subr.mxu0 0.0
  %845 = vmatpush1.msra.mxu0 0.0
  %846 = vmatprep.subr.mxu0 0.0
  %847 = vmatpush1.msra.mxu0 0.0
  %848 = vmatprep.subr.mxu0 0.0
  %849 = vmatpush1.msra.mxu0 0.0
  %850 = vmatprep.subr.mxu0 0.0
  %851 = vmatpush1.msra.mxu0 0.0
  %852 = vmatprep.subr.mxu0 0.0
  %853 = vmatpush1.msra.mxu0 0.0
  %854 = vmatprep.subr.mxu0 0.0
  %855 = vmatpush1.msra.mxu0 0.0
  %856 = vmatprep.subr.mxu0 0.0
  %857 = vmatpush1.msra.mxu0 0.0
  %858 = vmatprep.subr.mxu0 0.0
  %859 = vmatpush1.msra.mxu0 0.0
  %860 = vmatprep.subr.mxu0 0.0
  %861 = vmatpush1.msra.mxu0 0.0
  %862 = vmatprep.subr.mxu0 0.0
  %863 = vmatpush1.msra.mxu0 0.0
  %864 = vmatprep.subr.mxu0 0.0
  %865 = vmatpush1.msra.mxu0 0.0
  %866 = vmatprep.subr.mxu0 0.0
  %867 = vmatpush1.msra.mxu0 0.0
  %868 = vmatprep.mubr.f32.mxu0 0.0
  %869 = vmatmul.mubr.f32.gmra.mrb[0].mxu0 %v802
  %v870 = vpop.f32.mrb[0].mxu0
  %v871 = vadd.f32 0.0, %v870
  %v872 = vpop.f32.mrb[0].mxu0
  %873 = vdwg.mxu0
  %v875 = vrot.slane %v871, 2
  %v877 = vadd.f32 %v797, %v875
  %v878 = vrot.slane %v784, 2
  %879 = vrot.lane.b32.xlu0 %v878, 32
  %v880 = vpop.permute.xlu0 %879
  %v881 = vsel %vm42, %v880, 0
  %883 = vmatprep.subr.mxu0 0.0
  %884 = vmatpush1.msra.mxu0 %v134
  %885 = vmatprep.subr.mxu0 0.0
  %886 = vmatpush1.msra.mxu0 %v135
  %887 = vmatprep.subr.mxu0 0.0
  %888 = vmatpush1.msra.mxu0 %v136
  %889 = vmatprep.subr.mxu0 0.0
  %890 = vmatpush1.msra.mxu0 %v137
  %891 = vmatprep.subr.mxu0 0.0
  %892 = vmatpush1.msra.mxu0 0.0
  %893 = vmatprep.subr.mxu0 0.0
  %894 = vmatpush1.msra.mxu0 0.0
  %895 = vmatprep.subr.mxu0 0.0
  %896 = vmatpush1.msra.mxu0 0.0
  %897 = vmatprep.subr.mxu0 0.0
  %898 = vmatpush1.msra.mxu0 0.0
  %899 = vmatprep.subr.mxu0 0.0
  %900 = vmatpush1.msra.mxu0 0.0
  %901 = vmatprep.subr.mxu0 0.0
  %902 = vmatpush1.msra.mxu0 0.0
  %903 = vmatprep.subr.mxu0 0.0
  %904 = vmatpush1.msra.mxu0 0.0
  %905 = vmatprep.subr.mxu0 0.0
  %906 = vmatpush1.msra.mxu0 0.0
  %907 = vmatprep.subr.mxu0 0.0
  %908 = vmatpush1.msra.mxu0 0.0
  %909 = vmatprep.subr.mxu0 0.0
  %910 = vmatpush1.msra.mxu0 0.0
  %911 = vmatprep.subr.mxu0 0.0
  %912 = vmatpush1.msra.mxu0 0.0
  %913 = vmatprep.subr.mxu0 0.0
  %914 = vmatpush1.msra.mxu0 0.0
  %915 = vmatprep.subr.mxu0 0.0
  %916 = vmatpush1.msra.mxu0 0.0
  %917 = vmatprep.subr.mxu0 0.0
  %918 = vmatpush1.msra.mxu0 0.0
  %919 = vmatprep.subr.mxu0 0.0
  %920 = vmatpush1.msra.mxu0 0.0
  %921 = vmatprep.subr.mxu0 0.0
  %922 = vmatpush1.msra.mxu0 0.0
  %923 = vmatprep.subr.mxu0 0.0
  %924 = vmatpush1.msra.mxu0 0.0
  %925 = vmatprep.subr.mxu0 0.0
  %926 = vmatpush1.msra.mxu0 0.0
  %927 = vmatprep.subr.mxu0 0.0
  %928 = vmatpush1.msra.mxu0 0.0
  %929 = vmatprep.subr.mxu0 0.0
  %930 = vmatpush1.msra.mxu0 0.0
  %931 = vmatprep.subr.mxu0 0.0
  %932 = vmatpush1.msra.mxu0 0.0
  %933 = vmatprep.subr.mxu0 0.0
  %934 = vmatpush1.msra.mxu0 0.0
  %935 = vmatprep.subr.mxu0 0.0
  %936 = vmatpush1.msra.mxu0 0.0
  %937 = vmatprep.subr.mxu0 0.0
  %938 = vmatpush1.msra.mxu0 0.0
  %939 = vmatprep.subr.mxu0 0.0
  %940 = vmatpush1.msra.mxu0 0.0
  %941 = vmatprep.subr.mxu0 0.0
  %942 = vmatpush1.msra.mxu0 0.0
  %943 = vmatprep.subr.mxu0 0.0
  %944 = vmatpush1.msra.mxu0 0.0
  %945 = vmatprep.subr.mxu0 0.0
  %946 = vmatpush1.msra.mxu0 0.0
  %947 = vmatprep.mubr.f32.mxu0 0.0
  %948 = vmatmul.mubr.f32.gmra.mrb[0].mxu0 %v881
  %v949 = vpop.f32.mrb[0].mxu0
  %v950 = vadd.f32 0.0, %v949
  %v951 = vpop.f32.mrb[0].mxu0
  %952 = vdwg.mxu0
  %v953 = vadd.f32 %v798, %v950
  %v954 = vxor.u32 %v877, 2147483648
  %v955 = vmul.f32 %v954, 1.442695
  %v956 = vpow.pop %v955
  %v957 = vadd.f32 %v956, 1.0
  %v958 = vrcp.pop %v957
  %v959 = vmul.f32 1.0, %v958
  %v960 = vtanh.pop %v877
  %v962 = vrot.slane %v751, 6
  %v964 = vmul.f32 %v959, %v962
  %966 = vrot.lane.b32.xlu0 %v960, 64
  %v967 = vpop.permute.xlu0 %966
  %v969 = vmul.f32 %v959, %v967
  %971 = vrot.lane.b32.xlu0 %v969, 32
  %v972 = vpop.permute.xlu0 %971
  %v974 = vadd.f32 %v964, %v972
  %v975 = vtanh.pop %v974
  %977 = vrot.lane.b32.xlu0 %v975, 64
  %v978 = vpop.permute.xlu0 %977
  %v980 = vmul.f32 %v959, %v978
  %v981 = vxor.u32 %v953, 2147483648
  %v982 = vmul.f32 %v981, 1.442695
  %v983 = vpow.pop %v982
  %v984 = vadd.f32 %v983, 1.0
  %v985 = vrcp.pop %v984
  %v986 = vmul.f32 1.0, %v985
  %v987 = vtanh.pop %v953
  %v989 = vrot.slane %v778, 2
  %v991 = vmul.f32 %v986, %v989
  %993 = vrot.lane.b32.xlu0 %v987, 64
  %v994 = vpop.permute.xlu0 %993
  %v996 = vmul.f32 %v986, %v994
  %998 = vrot.lane.b32.xlu0 %v996, 32
  %v999 = vpop.permute.xlu0 %998
  %v1001 = vadd.f32 %v991, %v999
  %v1002 = vtanh.pop %v1001
  %1004 = vrot.lane.b32.xlu0 %v1002, 64
  %v1005 = vpop.permute.xlu0 %1004
  %v1007 = vmul.f32 %v986, %v1005
  %1009 = vrot.lane.b32.xlu0 %v980, 32
  %v1010 = vpop.permute.xlu0 %1009
  %vm1012 = vcmask 261126
  %1013 = vst.msk [vmem:[%s5] sm:$0xc0] %vm1012, %v1010
  %1015 = vrot.lane.b32.xlu0 %v1007, 64
  %v1016 = vpop.permute.xlu0 %1015
  %vm1018 = vcmask 517376
  %1019 = vst.msk [vmem:[%s5 + $0x8] sm:$0x3] %vm1018, %v1016
  %v1020 = vld [vmem:[#allocation2 + $0x10] sm:$0x3]
  %v1021 = vld [vmem:[#allocation2 + $0x8] sm:$0xc0]
  %v1022 = vrot.slane %v980, 6
  %1023 = vrot.lane.b32.xlu0 %v1022, 32
  %v1024 = vpop.permute.xlu0 %1023
  %v1025 = vsel %vm42, %v1024, 0
  %1027 = vmatprep.subr.mxu0 0.0
  %1028 = vmatpush1.msra.mxu0 %v130
  %1029 = vmatprep.subr.mxu0 0.0
  %1030 = vmatpush1.msra.mxu0 %v131
  %1031 = vmatprep.subr.mxu0 0.0
  %1032 = vmatpush1.msra.mxu0 %v132
  %1033 = vmatprep.subr.mxu0 0.0
  %1034 = vmatpush1.msra.mxu0 %v133
  %1035 = vmatprep.subr.mxu0 0.0
  %1036 = vmatpush1.msra.mxu0 0.0
  %1037 = vmatprep.subr.mxu0 0.0
  %1038 = vmatpush1.msra.mxu0 0.0
  %1039 = vmatprep.subr.mxu0 0.0
  %1040 = vmatpush1.msra.mxu0 0.0
  %1041 = vmatprep.subr.mxu0 0.0
  %1042 = vmatpush1.msra.mxu0 0.0
  %1043 = vmatprep.subr.mxu0 0.0
  %1044 = vmatpush1.msra.mxu0 0.0
  %1045 = vmatprep.subr.mxu0 0.0
  %1046 = vmatpush1.msra.mxu0 0.0
  %1047 = vmatprep.subr.mxu0 0.0
  %1048 = vmatpush1.msra.mxu0 0.0
  %1049 = vmatprep.subr.mxu0 0.0
  %1050 = vmatpush1.msra.mxu0 0.0
  %1051 = vmatprep.subr.mxu0 0.0
  %1052 = vmatpush1.msra.mxu0 0.0
  %1053 = vmatprep.subr.mxu0 0.0
  %1054 = vmatpush1.msra.mxu0 0.0
  %1055 = vmatprep.subr.mxu0 0.0
  %1056 = vmatpush1.msra.mxu0 0.0
  %1057 = vmatprep.subr.mxu0 0.0
  %1058 = vmatpush1.msra.mxu0 0.0
  %1059 = vmatprep.subr.mxu0 0.0
  %1060 = vmatpush1.msra.mxu0 0.0
  %1061 = vmatprep.subr.mxu0 0.0
  %1062 = vmatpush1.msra.mxu0 0.0
  %1063 = vmatprep.subr.mxu0 0.0
  %1064 = vmatpush1.msra.mxu0 0.0
  %1065 = vmatprep.subr.mxu0 0.0
  %1066 = vmatpush1.msra.mxu0 0.0
  %1067 = vmatprep.subr.mxu0 0.0
  %1068 = vmatpush1.msra.mxu0 0.0
  %1069 = vmatprep.subr.mxu0 0.0
  %1070 = vmatpush1.msra.mxu0 0.0
  %1071 = vmatprep.subr.mxu0 0.0
  %1072 = vmatpush1.msra.mxu0 0.0
  %1073 = vmatprep.subr.mxu0 0.0
  %1074 = vmatpush1.msra.mxu0 0.0
  %1075 = vmatprep.subr.mxu0 0.0
  %1076 = vmatpush1.msra.mxu0 0.0
  %1077 = vmatprep.subr.mxu0 0.0
  %1078 = vmatpush1.msra.mxu0 0.0
  %1079 = vmatprep.subr.mxu0 0.0
  %1080 = vmatpush1.msra.mxu0 0.0
  %1081 = vmatprep.subr.mxu0 0.0
  %1082 = vmatpush1.msra.mxu0 0.0
  %1083 = vmatprep.subr.mxu0 0.0
  %1084 = vmatpush1.msra.mxu0 0.0
  %1085 = vmatprep.subr.mxu0 0.0
  %1086 = vmatpush1.msra.mxu0 0.0
  %1087 = vmatprep.subr.mxu0 0.0
  %1088 = vmatpush1.msra.mxu0 0.0
  %1089 = vmatprep.subr.mxu0 0.0
  %1090 = vmatpush1.msra.mxu0 0.0
  %1091 = vmatprep.mubr.f32.mxu0 0.0
  %1092 = vmatmul.mubr.f32.gmra.mrb[0].mxu0 %v1025
  %v1093 = vpop.f32.mrb[0].mxu0
  %v1094 = vadd.f32 0.0, %v1093
  %v1095 = vpop.f32.mrb[0].mxu0
  %1096 = vdwg.mxu0
  %v1097 = vadd.f32 %v1020, %v1094
  %1098 = vrot.lane.b32.xlu0 %v1007, 32
  %v1099 = vpop.permute.xlu0 %1098
  %v1100 = vsel %vm42, %v1099, 0
  %1102 = vmatprep.subr.mxu0 0.0
  %1103 = vmatpush1.msra.mxu0 %v134
  %1104 = vmatprep.subr.mxu0 0.0
  %1105 = vmatpush1.msra.mxu0 %v135
  %1106 = vmatprep.subr.mxu0 0.0
  %1107 = vmatpush1.msra.mxu0 %v136
  %1108 = vmatprep.subr.mxu0 0.0
  %1109 = vmatpush1.msra.mxu0 %v137
  %1110 = vmatprep.subr.mxu0 0.0
  %1111 = vmatpush1.msra.mxu0 0.0
  %1112 = vmatprep.subr.mxu0 0.0
  %1113 = vmatpush1.msra.mxu0 0.0
  %1114 = vmatprep.subr.mxu0 0.0
  %1115 = vmatpush1.msra.mxu0 0.0
  %1116 = vmatprep.subr.mxu0 0.0
  %1117 = vmatpush1.msra.mxu0 0.0
  %1118 = vmatprep.subr.mxu0 0.0
  %1119 = vmatpush1.msra.mxu0 0.0
  %1120 = vmatprep.subr.mxu0 0.0
  %1121 = vmatpush1.msra.mxu0 0.0
  %1122 = vmatprep.subr.mxu0 0.0
  %1123 = vmatpush1.msra.mxu0 0.0
  %1124 = vmatprep.subr.mxu0 0.0
  %1125 = vmatpush1.msra.mxu0 0.0
  %1126 = vmatprep.subr.mxu0 0.0
  %1127 = vmatpush1.msra.mxu0 0.0
  %1128 = vmatprep.subr.mxu0 0.0
  %1129 = vmatpush1.msra.mxu0 0.0
  %1130 = vmatprep.subr.mxu0 0.0
  %1131 = vmatpush1.msra.mxu0 0.0
  %1132 = vmatprep.subr.mxu0 0.0
  %1133 = vmatpush1.msra.mxu0 0.0
  %1134 = vmatprep.subr.mxu0 0.0
  %1135 = vmatpush1.msra.mxu0 0.0
  %1136 = vmatprep.subr.mxu0 0.0
  %1137 = vmatpush1.msra.mxu0 0.0
  %1138 = vmatprep.subr.mxu0 0.0
  %1139 = vmatpush1.msra.mxu0 0.0
  %1140 = vmatprep.subr.mxu0 0.0
  %1141 = vmatpush1.msra.mxu0 0.0
  %1142 = vmatprep.subr.mxu0 0.0
  %1143 = vmatpush1.msra.mxu0 0.0
  %1144 = vmatprep.subr.mxu0 0.0
  %1145 = vmatpush1.msra.mxu0 0.0
  %1146 = vmatprep.subr.mxu0 0.0
  %1147 = vmatpush1.msra.mxu0 0.0
  %1148 = vmatprep.subr.mxu0 0.0
  %1149 = vmatpush1.msra.mxu0 0.0
  %1150 = vmatprep.subr.mxu0 0.0
  %1151 = vmatpush1.msra.mxu0 0.0
  %1152 = vmatprep.subr.mxu0 0.0
  %1153 = vmatpush1.msra.mxu0 0.0
  %1154 = vmatprep.subr.mxu0 0.0
  %1155 = vmatpush1.msra.mxu0 0.0
  %1156 = vmatprep.subr.mxu0 0.0
  %1157 = vmatpush1.msra.mxu0 0.0
  %1158 = vmatprep.subr.mxu0 0.0
  %1159 = vmatpush1.msra.mxu0 0.0
  %1160 = vmatprep.subr.mxu0 0.0
  %1161 = vmatpush1.msra.mxu0 0.0
  %1162 = vmatprep.subr.mxu0 0.0
  %1163 = vmatpush1.msra.mxu0 0.0
  %1164 = vmatprep.subr.mxu0 0.0
  %1165 = vmatpush1.msra.mxu0 0.0
  %1166 = vmatprep.mubr.f32.mxu0 0.0
  %1167 = vmatmul.mubr.f32.gmra.mrb[0].mxu0 %v1100
  %v1168 = vpop.f32.mrb[0].mxu0
  %v1169 = vadd.f32 0.0, %v1168
  %v1170 = vpop.f32.mrb[0].mxu0
  %1171 = vdwg.mxu0
  %v1173 = vrot.slane %v1169, 2
  %v1175 = vadd.f32 %v1021, %v1173
  %v1176 = vxor.u32 %v1097, 2147483648
  %v1177 = vmul.f32 %v1176, 1.442695
  %v1178 = vpow.pop %v1177
  %v1179 = vadd.f32 %v1178, 1.0
  %v1180 = vrcp.pop %v1179
  %v1181 = vmul.f32 1.0, %v1180
  %v1182 = vtanh.pop %v1097
  %v1184 = vrot.slane %v974, 6
  %v1186 = vmul.f32 %v1181, %v1184
  %1188 = vrot.lane.b32.xlu0 %v1182, 64
  %v1189 = vpop.permute.xlu0 %1188
  %v1191 = vmul.f32 %v1181, %v1189
  %1193 = vrot.lane.b32.xlu0 %v1191, 32
  %v1194 = vpop.permute.xlu0 %1193
  %v1196 = vadd.f32 %v1186, %v1194
  %v1197 = vtanh.pop %v1196
  %1199 = vrot.lane.b32.xlu0 %v1197, 64
  %v1200 = vpop.permute.xlu0 %1199
  %v1202 = vmul.f32 %v1181, %v1200
  %v1203 = vxor.u32 %v1175, 2147483648
  %v1204 = vmul.f32 %v1203, 1.442695
  %v1205 = vpow.pop %v1204
  %v1206 = vadd.f32 %v1205, 1.0
  %v1207 = vrcp.pop %v1206
  %v1208 = vmul.f32 1.0, %v1207
  %v1209 = vtanh.pop %v1175
  %v1211 = vrot.slane %v1001, 2
  %v1213 = vmul.f32 %v1208, %v1211
  %1215 = vrot.lane.b32.xlu0 %v1209, 64
  %v1216 = vpop.permute.xlu0 %1215
  %v1218 = vmul.f32 %v1208, %v1216
  %1220 = vrot.lane.b32.xlu0 %v1218, 32
  %v1221 = vpop.permute.xlu0 %1220
  %v1223 = vadd.f32 %v1213, %v1221
  %v1224 = vtanh.pop %v1223
  %1226 = vrot.lane.b32.xlu0 %v1224, 64
  %v1227 = vpop.permute.xlu0 %1226
  %v1229 = vmul.f32 %v1208, %v1227
  %1231 = vrot.lane.b32.xlu0 %v1202, 32
  %v1232 = vpop.permute.xlu0 %1231
  %1234 = vst.msk [vmem:[%s5 + $0x8] sm:$0x3] %vm340, %v1232
  %1236 = vrot.lane.b32.xlu0 %v1229, 64
  %v1237 = vpop.permute.xlu0 %1236
  %1239 = vst.msk [vmem:[%s5] sm:$0xc0] %vm346, %v1237
  %v1240 = vld [vmem:[#allocation2 + $0x10] sm:$0xc]
  %v1241 = vld [vmem:[#allocation2 + $0x8] sm:$0x30]
  %v1242 = vsel %vm42, %v1232, 0
  %1244 = vmatprep.subr.mxu0 0.0
  %1245 = vmatpush1.msra.mxu0 %v130
  %1246 = vmatprep.subr.mxu0 0.0
  %1247 = vmatpush1.msra.mxu0 %v131
  %1248 = vmatprep.subr.mxu0 0.0
  %1249 = vmatpush1.msra.mxu0 %v132
  %1250 = vmatprep.subr.mxu0 0.0
  %1251 = vmatpush1.msra.mxu0 %v133
  %1252 = vmatprep.subr.mxu0 0.0
  %1253 = vmatpush1.msra.mxu0 0.0
  %1254 = vmatprep.subr.mxu0 0.0
  %1255 = vmatpush1.msra.mxu0 0.0
  %1256 = vmatprep.subr.mxu0 0.0
  %1257 = vmatpush1.msra.mxu0 0.0
  %1258 = vmatprep.subr.mxu0 0.0
  %1259 = vmatpush1.msra.mxu0 0.0
  %1260 = vmatprep.subr.mxu0 0.0
  %1261 = vmatpush1.msra.mxu0 0.0
  %1262 = vmatprep.subr.mxu0 0.0
  %1263 = vmatpush1.msra.mxu0 0.0
  %1264 = vmatprep.subr.mxu0 0.0
  %1265 = vmatpush1.msra.mxu0 0.0
  %1266 = vmatprep.subr.mxu0 0.0
  %1267 = vmatpush1.msra.mxu0 0.0
  %1268 = vmatprep.subr.mxu0 0.0
  %1269 = vmatpush1.msra.mxu0 0.0
  %1270 = vmatprep.subr.mxu0 0.0
  %1271 = vmatpush1.msra.mxu0 0.0
  %1272 = vmatprep.subr.mxu0 0.0
  %1273 = vmatpush1.msra.mxu0 0.0
  %1274 = vmatprep.subr.mxu0 0.0
  %1275 = vmatpush1.msra.mxu0 0.0
  %1276 = vmatprep.subr.mxu0 0.0
  %1277 = vmatpush1.msra.mxu0 0.0
  %1278 = vmatprep.subr.mxu0 0.0
  %1279 = vmatpush1.msra.mxu0 0.0
  %1280 = vmatprep.subr.mxu0 0.0
  %1281 = vmatpush1.msra.mxu0 0.0
  %1282 = vmatprep.subr.mxu0 0.0
  %1283 = vmatpush1.msra.mxu0 0.0
  %1284 = vmatprep.subr.mxu0 0.0
  %1285 = vmatpush1.msra.mxu0 0.0
  %1286 = vmatprep.subr.mxu0 0.0
  %1287 = vmatpush1.msra.mxu0 0.0
  %1288 = vmatprep.subr.mxu0 0.0
  %1289 = vmatpush1.msra.mxu0 0.0
  %1290 = vmatprep.subr.mxu0 0.0
  %1291 = vmatpush1.msra.mxu0 0.0
  %1292 = vmatprep.subr.mxu0 0.0
  %1293 = vmatpush1.msra.mxu0 0.0
  %1294 = vmatprep.subr.mxu0 0.0
  %1295 = vmatpush1.msra.mxu0 0.0
  %1296 = vmatprep.subr.mxu0 0.0
  %1297 = vmatpush1.msra.mxu0 0.0
  %1298 = vmatprep.subr.mxu0 0.0
  %1299 = vmatpush1.msra.mxu0 0.0
  %1300 = vmatprep.subr.mxu0 0.0
  %1301 = vmatpush1.msra.mxu0 0.0
  %1302 = vmatprep.subr.mxu0 0.0
  %1303 = vmatpush1.msra.mxu0 0.0
  %1304 = vmatprep.subr.mxu0 0.0
  %1305 = vmatpush1.msra.mxu0 0.0
  %1306 = vmatprep.subr.mxu0 0.0
  %1307 = vmatpush1.msra.mxu0 0.0
  %1308 = vmatprep.mubr.f32.mxu0 0.0
  %1309 = vmatmul.mubr.f32.gmra.mrb[0].mxu0 %v1242
  %v1310 = vpop.f32.mrb[0].mxu0
  %v1311 = vadd.f32 0.0, %v1310
  %v1312 = vpop.f32.mrb[0].mxu0
  %1313 = vdwg.mxu0
  %v1315 = vrot.slane %v1311, 6
  %v1317 = vadd.f32 %v1240, %v1315
  %v1318 = vrot.slane %v1229, 6
  %1319 = vrot.lane.b32.xlu0 %v1318, 32
  %v1320 = vpop.permute.xlu0 %1319
  %v1321 = vsel %vm42, %v1320, 0
  %1323 = vmatprep.subr.mxu0 0.0
  %1324 = vmatpush1.msra.mxu0 %v134
  %1325 = vmatprep.subr.mxu0 0.0
  %1326 = vmatpush1.msra.mxu0 %v135
  %1327 = vmatprep.subr.mxu0 0.0
  %1328 = vmatpush1.msra.mxu0 %v136
  %1329 = vmatprep.subr.mxu0 0.0
  %1330 = vmatpush1.msra.mxu0 %v137
  %1331 = vmatprep.subr.mxu0 0.0
  %1332 = vmatpush1.msra.mxu0 0.0
  %1333 = vmatprep.subr.mxu0 0.0
  %1334 = vmatpush1.msra.mxu0 0.0
  %1335 = vmatprep.subr.mxu0 0.0
  %1336 = vmatpush1.msra.mxu0 0.0
  %1337 = vmatprep.subr.mxu0 0.0
  %1338 = vmatpush1.msra.mxu0 0.0
  %1339 = vmatprep.subr.mxu0 0.0
  %1340 = vmatpush1.msra.mxu0 0.0
  %1341 = vmatprep.subr.mxu0 0.0
  %1342 = vmatpush1.msra.mxu0 0.0
  %1343 = vmatprep.subr.mxu0 0.0
  %1344 = vmatpush1.msra.mxu0 0.0
  %1345 = vmatprep.subr.mxu0 0.0
  %1346 = vmatpush1.msra.mxu0 0.0
  %1347 = vmatprep.subr.mxu0 0.0
  %1348 = vmatpush1.msra.mxu0 0.0
  %1349 = vmatprep.subr.mxu0 0.0
  %1350 = vmatpush1.msra.mxu0 0.0
  %1351 = vmatprep.subr.mxu0 0.0
  %1352 = vmatpush1.msra.mxu0 0.0
  %1353 = vmatprep.subr.mxu0 0.0
  %1354 = vmatpush1.msra.mxu0 0.0
  %1355 = vmatprep.subr.mxu0 0.0
  %1356 = vmatpush1.msra.mxu0 0.0
  %1357 = vmatprep.subr.mxu0 0.0
  %1358 = vmatpush1.msra.mxu0 0.0
  %1359 = vmatprep.subr.mxu0 0.0
  %1360 = vmatpush1.msra.mxu0 0.0
  %1361 = vmatprep.subr.mxu0 0.0
  %1362 = vmatpush1.msra.mxu0 0.0
  %1363 = vmatprep.subr.mxu0 0.0
  %1364 = vmatpush1.msra.mxu0 0.0
  %1365 = vmatprep.subr.mxu0 0.0
  %1366 = vmatpush1.msra.mxu0 0.0
  %1367 = vmatprep.subr.mxu0 0.0
  %1368 = vmatpush1.msra.mxu0 0.0
  %1369 = vmatprep.subr.mxu0 0.0
  %1370 = vmatpush1.msra.mxu0 0.0
  %1371 = vmatprep.subr.mxu0 0.0
  %1372 = vmatpush1.msra.mxu0 0.0
  %1373 = vmatprep.subr.mxu0 0.0
  %1374 = vmatpush1.msra.mxu0 0.0
  %1375 = vmatprep.subr.mxu0 0.0
  %1376 = vmatpush1.msra.mxu0 0.0
  %1377 = vmatprep.subr.mxu0 0.0
  %1378 = vmatpush1.msra.mxu0 0.0
  %1379 = vmatprep.subr.mxu0 0.0
  %1380 = vmatpush1.msra.mxu0 0.0
  %1381 = vmatprep.subr.mxu0 0.0
  %1382 = vmatpush1.msra.mxu0 0.0
  %1383 = vmatprep.subr.mxu0 0.0
  %1384 = vmatpush1.msra.mxu0 0.0
  %1385 = vmatprep.subr.mxu0 0.0
  %1386 = vmatpush1.msra.mxu0 0.0
  %1387 = vmatprep.mubr.f32.mxu0 0.0
  %1388 = vmatmul.mubr.f32.gmra.mrb[0].mxu0 %v1321
  %v1389 = vpop.f32.mrb[0].mxu0
  %v1390 = vadd.f32 0.0, %v1389
  %v1391 = vpop.f32.mrb[0].mxu0
  %1392 = vdwg.mxu0
  %v1394 = vrot.slane %v1390, 4
  %v1396 = vadd.f32 %v1241, %v1394
  %v1397 = vxor.u32 %v1317, 2147483648
  %v1398 = vmul.f32 %v1397, 1.442695
  %v1399 = vpow.pop %v1398
  %v1400 = vadd.f32 %v1399, 1.0
  %v1401 = vrcp.pop %v1400
  %v1402 = vmul.f32 1.0, %v1401
  %v1403 = vtanh.pop %v1317
  %v1405 = vrot.slane %v1196, 6
  %v1407 = vmul.f32 %v1402, %v1405
  %1409 = vrot.lane.b32.xlu0 %v1403, 64
  %v1410 = vpop.permute.xlu0 %1409
  %v1412 = vmul.f32 %v1402, %v1410
  %1414 = vrot.lane.b32.xlu0 %v1412, 32
  %v1415 = vpop.permute.xlu0 %1414
  %v1417 = vadd.f32 %v1407, %v1415
  %v1418 = vtanh.pop %v1417
  %1420 = vrot.lane.b32.xlu0 %v1418, 64
  %v1421 = vpop.permute.xlu0 %1420
  %v1423 = vmul.f32 %v1402, %v1421
  %v1424 = vxor.u32 %v1396, 2147483648
  %v1425 = vmul.f32 %v1424, 1.442695
  %v1426 = vpow.pop %v1425
  %v1427 = vadd.f32 %v1426, 1.0
  %v1428 = vrcp.pop %v1427
  %v1429 = vmul.f32 1.0, %v1428
  %v1430 = vtanh.pop %v1396
  %v1432 = vrot.slane %v1223, 2
  %v1434 = vmul.f32 %v1429, %v1432
  %1436 = vrot.lane.b32.xlu0 %v1430, 64
  %v1437 = vpop.permute.xlu0 %1436
  %v1439 = vmul.f32 %v1429, %v1437
  %1441 = vrot.lane.b32.xlu0 %v1439, 32
  %v1442 = vpop.permute.xlu0 %1441
  %v1444 = vadd.f32 %v1434, %v1442
  %v1445 = vtanh.pop %v1444
  %1447 = vrot.lane.b32.xlu0 %v1445, 64
  %v1448 = vpop.permute.xlu0 %1447
  %v1450 = vmul.f32 %v1429, %v1448
  %1452 = vrot.lane.b32.xlu0 %v1423, 32
  %v1453 = vpop.permute.xlu0 %1452
  %1455 = vst.msk [vmem:[%s5 + $0x8] sm:$0xc] %vm563, %v1453
  %1457 = vrot.lane.b32.xlu0 %v1450, 64
  %v1458 = vpop.permute.xlu0 %1457
  %1460 = vst.msk [vmem:[%s5] sm:$0x30] %vm569, %v1458
  %v1461 = vld [vmem:[#allocation2 + $0x10] sm:$0x30]
  %v1462 = vld [vmem:[#allocation2 + $0x8] sm:$0xc]
  %v1463 = vrot.slane %v1423, 2
  %1464 = vrot.lane.b32.xlu0 %v1463, 32
  %v1465 = vpop.permute.xlu0 %1464
  %v1466 = vsel %vm42, %v1465, 0
  %1468 = vmatprep.subr.mxu0 0.0
  %1469 = vmatpush1.msra.mxu0 %v130
  %1470 = vmatprep.subr.mxu0 0.0
  %1471 = vmatpush1.msra.mxu0 %v131
  %1472 = vmatprep.subr.mxu0 0.0
  %1473 = vmatpush1.msra.mxu0 %v132
  %1474 = vmatprep.subr.mxu0 0.0
  %1475 = vmatpush1.msra.mxu0 %v133
  %1476 = vmatprep.subr.mxu0 0.0
  %1477 = vmatpush1.msra.mxu0 0.0
  %1478 = vmatprep.subr.mxu0 0.0
  %1479 = vmatpush1.msra.mxu0 0.0
  %1480 = vmatprep.subr.mxu0 0.0
  %1481 = vmatpush1.msra.mxu0 0.0
  %1482 = vmatprep.subr.mxu0 0.0
  %1483 = vmatpush1.msra.mxu0 0.0
  %1484 = vmatprep.subr.mxu0 0.0
  %1485 = vmatpush1.msra.mxu0 0.0
  %1486 = vmatprep.subr.mxu0 0.0
  %1487 = vmatpush1.msra.mxu0 0.0
  %1488 = vmatprep.subr.mxu0 0.0
  %1489 = vmatpush1.msra.mxu0 0.0
  %1490 = vmatprep.subr.mxu0 0.0
  %1491 = vmatpush1.msra.mxu0 0.0
  %1492 = vmatprep.subr.mxu0 0.0
  %1493 = vmatpush1.msra.mxu0 0.0
  %1494 = vmatprep.subr.mxu0 0.0
  %1495 = vmatpush1.msra.mxu0 0.0
  %1496 = vmatprep.subr.mxu0 0.0
  %1497 = vmatpush1.msra.mxu0 0.0
  %1498 = vmatprep.subr.mxu0 0.0
  %1499 = vmatpush1.msra.mxu0 0.0
  %1500 = vmatprep.subr.mxu0 0.0
  %1501 = vmatpush1.msra.mxu0 0.0
  %1502 = vmatprep.subr.mxu0 0.0
  %1503 = vmatpush1.msra.mxu0 0.0
  %1504 = vmatprep.subr.mxu0 0.0
  %1505 = vmatpush1.msra.mxu0 0.0
  %1506 = vmatprep.subr.mxu0 0.0
  %1507 = vmatpush1.msra.mxu0 0.0
  %1508 = vmatprep.subr.mxu0 0.0
  %1509 = vmatpush1.msra.mxu0 0.0
  %1510 = vmatprep.subr.mxu0 0.0
  %1511 = vmatpush1.msra.mxu0 0.0
  %1512 = vmatprep.subr.mxu0 0.0
  %1513 = vmatpush1.msra.mxu0 0.0
  %1514 = vmatprep.subr.mxu0 0.0
  %1515 = vmatpush1.msra.mxu0 0.0
  %1516 = vmatprep.subr.mxu0 0.0
  %1517 = vmatpush1.msra.mxu0 0.0
  %1518 = vmatprep.subr.mxu0 0.0
  %1519 = vmatpush1.msra.mxu0 0.0
  %1520 = vmatprep.subr.mxu0 0.0
  %1521 = vmatpush1.msra.mxu0 0.0
  %1522 = vmatprep.subr.mxu0 0.0
  %1523 = vmatpush1.msra.mxu0 0.0
  %1524 = vmatprep.subr.mxu0 0.0
  %1525 = vmatpush1.msra.mxu0 0.0
  %1526 = vmatprep.subr.mxu0 0.0
  %1527 = vmatpush1.msra.mxu0 0.0
  %1528 = vmatprep.subr.mxu0 0.0
  %1529 = vmatpush1.msra.mxu0 0.0
  %1530 = vmatprep.subr.mxu0 0.0
  %1531 = vmatpush1.msra.mxu0 0.0
  %1532 = vmatprep.mubr.f32.mxu0 0.0
  %1533 = vmatmul.mubr.f32.gmra.mrb[0].mxu0 %v1466
  %v1534 = vpop.f32.mrb[0].mxu0
  %v1535 = vadd.f32 0.0, %v1534
  %v1536 = vpop.f32.mrb[0].mxu0
  %1537 = vdwg.mxu0
  %v1539 = vrot.slane %v1535, 4
  %v1541 = vadd.f32 %v1461, %v1539
  %v1542 = vrot.slane %v1450, 4
  %1543 = vrot.lane.b32.xlu0 %v1542, 32
  %v1544 = vpop.permute.xlu0 %1543
  %v1545 = vsel %vm42, %v1544, 0
  %1547 = vmatprep.subr.mxu0 0.0
  %1548 = vmatpush1.msra.mxu0 %v134
  %1549 = vmatprep.subr.mxu0 0.0
  %1550 = vmatpush1.msra.mxu0 %v135
  %1551 = vmatprep.subr.mxu0 0.0
  %1552 = vmatpush1.msra.mxu0 %v136
  %1553 = vmatprep.subr.mxu0 0.0
  %1554 = vmatpush1.msra.mxu0 %v137
  %1555 = vmatprep.subr.mxu0 0.0
  %1556 = vmatpush1.msra.mxu0 0.0
  %1557 = vmatprep.subr.mxu0 0.0
  %1558 = vmatpush1.msra.mxu0 0.0
  %1559 = vmatprep.subr.mxu0 0.0
  %1560 = vmatpush1.msra.mxu0 0.0
  %1561 = vmatprep.subr.mxu0 0.0
  %1562 = vmatpush1.msra.mxu0 0.0
  %1563 = vmatprep.subr.mxu0 0.0
  %1564 = vmatpush1.msra.mxu0 0.0
  %1565 = vmatprep.subr.mxu0 0.0
  %1566 = vmatpush1.msra.mxu0 0.0
  %1567 = vmatprep.subr.mxu0 0.0
  %1568 = vmatpush1.msra.mxu0 0.0
  %1569 = vmatprep.subr.mxu0 0.0
  %1570 = vmatpush1.msra.mxu0 0.0
  %1571 = vmatprep.subr.mxu0 0.0
  %1572 = vmatpush1.msra.mxu0 0.0
  %1573 = vmatprep.subr.mxu0 0.0
  %1574 = vmatpush1.msra.mxu0 0.0
  %1575 = vmatprep.subr.mxu0 0.0
  %1576 = vmatpush1.msra.mxu0 0.0
  %1577 = vmatprep.subr.mxu0 0.0
  %1578 = vmatpush1.msra.mxu0 0.0
  %1579 = vmatprep.subr.mxu0 0.0
  %1580 = vmatpush1.msra.mxu0 0.0
  %1581 = vmatprep.subr.mxu0 0.0
  %1582 = vmatpush1.msra.mxu0 0.0
  %1583 = vmatprep.subr.mxu0 0.0
  %1584 = vmatpush1.msra.mxu0 0.0
  %1585 = vmatprep.subr.mxu0 0.0
  %1586 = vmatpush1.msra.mxu0 0.0
  %1587 = vmatprep.subr.mxu0 0.0
  %1588 = vmatpush1.msra.mxu0 0.0
  %1589 = vmatprep.subr.mxu0 0.0
  %1590 = vmatpush1.msra.mxu0 0.0
  %1591 = vmatprep.subr.mxu0 0.0
  %1592 = vmatpush1.msra.mxu0 0.0
  %1593 = vmatprep.subr.mxu0 0.0
  %1594 = vmatpush1.msra.mxu0 0.0
  %1595 = vmatprep.subr.mxu0 0.0
  %1596 = vmatpush1.msra.mxu0 0.0
  %1597 = vmatprep.subr.mxu0 0.0
  %1598 = vmatpush1.msra.mxu0 0.0
  %1599 = vmatprep.subr.mxu0 0.0
  %1600 = vmatpush1.msra.mxu0 0.0
  %1601 = vmatprep.subr.mxu0 0.0
  %1602 = vmatpush1.msra.mxu0 0.0
  %1603 = vmatprep.subr.mxu0 0.0
  %1604 = vmatpush1.msra.mxu0 0.0
  %1605 = vmatprep.subr.mxu0 0.0
  %1606 = vmatpush1.msra.mxu0 0.0
  %1607 = vmatprep.subr.mxu0 0.0
  %1608 = vmatpush1.msra.mxu0 0.0
  %1609 = vmatprep.subr.mxu0 0.0
  %1610 = vmatpush1.msra.mxu0 0.0
  %1611 = vmatprep.mubr.f32.mxu0 0.0
  %1612 = vmatmul.mubr.f32.gmra.mrb[0].mxu0 %v1545
  %v1613 = vpop.f32.mrb[0].mxu0
  %v1614 = vadd.f32 0.0, %v1613
  %v1615 = vpop.f32.mrb[0].mxu0
  %1616 = vdwg.mxu0
  %v1618 = vrot.slane %v1614, 6
  %v1620 = vadd.f32 %v1462, %v1618
  %v1621 = vxor.u32 %v1541, 2147483648
  %v1622 = vmul.f32 %v1621, 1.442695
  %v1623 = vpow.pop %v1622
  %v1624 = vadd.f32 %v1623, 1.0
  %v1625 = vrcp.pop %v1624
  %v1626 = vmul.f32 1.0, %v1625
  %v1627 = vtanh.pop %v1541
  %v1629 = vrot.slane %v1417, 6
  %v1631 = vmul.f32 %v1626, %v1629
  %1633 = vrot.lane.b32.xlu0 %v1627, 64
  %v1634 = vpop.permute.xlu0 %1633
  %v1636 = vmul.f32 %v1626, %v1634
  %1638 = vrot.lane.b32.xlu0 %v1636, 32
  %v1639 = vpop.permute.xlu0 %1638
  %v1641 = vadd.f32 %v1631, %v1639
  %v1642 = vtanh.pop %v1641
  %1644 = vrot.lane.b32.xlu0 %v1642, 64
  %v1645 = vpop.permute.xlu0 %1644
  %v1647 = vmul.f32 %v1626, %v1645
  %v1648 = vxor.u32 %v1620, 2147483648
  %v1649 = vmul.f32 %v1648, 1.442695
  %v1650 = vpow.pop %v1649
  %v1651 = vadd.f32 %v1650, 1.0
  %v1652 = vrcp.pop %v1651
  %v1653 = vmul.f32 1.0, %v1652
  %v1654 = vtanh.pop %v1620
  %v1656 = vrot.slane %v1444, 2
  %v1658 = vmul.f32 %v1653, %v1656
  %1660 = vrot.lane.b32.xlu0 %v1654, 64
  %v1661 = vpop.permute.xlu0 %1660
  %v1663 = vmul.f32 %v1653, %v1661
  %1665 = vrot.lane.b32.xlu0 %v1663, 32
  %v1666 = vpop.permute.xlu0 %1665
  %v1668 = vadd.f32 %v1658, %v1666
  %v1669 = vtanh.pop %v1668
  %1671 = vrot.lane.b32.xlu0 %v1669, 64
  %v1672 = vpop.permute.xlu0 %1671
  %v1674 = vmul.f32 %v1653, %v1672
  %1676 = vrot.lane.b32.xlu0 %v1647, 32
  %v1677 = vpop.permute.xlu0 %1676
  %1679 = vst.msk [vmem:[%s5 + $0x8] sm:$0x30] %vm789, %v1677
  %1681 = vrot.lane.b32.xlu0 %v1674, 64
  %v1682 = vpop.permute.xlu0 %1681
  %1684 = vst.msk [vmem:[%s5] sm:$0xc] %vm795, %v1682
  %v1685 = vld [vmem:[#allocation2 + $0x10] sm:$0xc0]
  %v1686 = vld [vmem:[#allocation2 + $0x8] sm:$0x3]
  %v1687 = vrot.slane %v1647, 4
  %1688 = vrot.lane.b32.xlu0 %v1687, 32
  %v1689 = vpop.permute.xlu0 %1688
  %v1690 = vsel %vm42, %v1689, 0
  %1692 = vmatprep.subr.mxu0 0.0
  %1693 = vmatpush1.msra.mxu0 %v130
  %1694 = vmatprep.subr.mxu0 0.0
  %1695 = vmatpush1.msra.mxu0 %v131
  %1696 = vmatprep.subr.mxu0 0.0
  %1697 = vmatpush1.msra.mxu0 %v132
  %1698 = vmatprep.subr.mxu0 0.0
  %1699 = vmatpush1.msra.mxu0 %v133
  %1700 = vmatprep.subr.mxu0 0.0
  %1701 = vmatpush1.msra.mxu0 0.0
  %1702 = vmatprep.subr.mxu0 0.0
  %1703 = vmatpush1.msra.mxu0 0.0
  %1704 = vmatprep.subr.mxu0 0.0
  %1705 = vmatpush1.msra.mxu0 0.0
  %1706 = vmatprep.subr.mxu0 0.0
  %1707 = vmatpush1.msra.mxu0 0.0
  %1708 = vmatprep.subr.mxu0 0.0
  %1709 = vmatpush1.msra.mxu0 0.0
  %1710 = vmatprep.subr.mxu0 0.0
  %1711 = vmatpush1.msra.mxu0 0.0
  %1712 = vmatprep.subr.mxu0 0.0
  %1713 = vmatpush1.msra.mxu0 0.0
  %1714 = vmatprep.subr.mxu0 0.0
  %1715 = vmatpush1.msra.mxu0 0.0
  %1716 = vmatprep.subr.mxu0 0.0
  %1717 = vmatpush1.msra.mxu0 0.0
  %1718 = vmatprep.subr.mxu0 0.0
  %1719 = vmatpush1.msra.mxu0 0.0
  %1720 = vmatprep.subr.mxu0 0.0
  %1721 = vmatpush1.msra.mxu0 0.0
  %1722 = vmatprep.subr.mxu0 0.0
  %1723 = vmatpush1.msra.mxu0 0.0
  %1724 = vmatprep.subr.mxu0 0.0
  %1725 = vmatpush1.msra.mxu0 0.0
  %1726 = vmatprep.subr.mxu0 0.0
  %1727 = vmatpush1.msra.mxu0 0.0
  %1728 = vmatprep.subr.mxu0 0.0
  %1729 = vmatpush1.msra.mxu0 0.0
  %1730 = vmatprep.subr.mxu0 0.0
  %1731 = vmatpush1.msra.mxu0 0.0
  %1732 = vmatprep.subr.mxu0 0.0
  %1733 = vmatpush1.msra.mxu0 0.0
  %1734 = vmatprep.subr.mxu0 0.0
  %1735 = vmatpush1.msra.mxu0 0.0
  %1736 = vmatprep.subr.mxu0 0.0
  %1737 = vmatpush1.msra.mxu0 0.0
  %1738 = vmatprep.subr.mxu0 0.0
  %1739 = vmatpush1.msra.mxu0 0.0
  %1740 = vmatprep.subr.mxu0 0.0
  %1741 = vmatpush1.msra.mxu0 0.0
  %1742 = vmatprep.subr.mxu0 0.0
  %1743 = vmatpush1.msra.mxu0 0.0
  %1744 = vmatprep.subr.mxu0 0.0
  %1745 = vmatpush1.msra.mxu0 0.0
  %1746 = vmatprep.subr.mxu0 0.0
  %1747 = vmatpush1.msra.mxu0 0.0
  %1748 = vmatprep.subr.mxu0 0.0
  %1749 = vmatpush1.msra.mxu0 0.0
  %1750 = vmatprep.subr.mxu0 0.0
  %1751 = vmatpush1.msra.mxu0 0.0
  %1752 = vmatprep.subr.mxu0 0.0
  %1753 = vmatpush1.msra.mxu0 0.0
  %1754 = vmatprep.subr.mxu0 0.0
  %1755 = vmatpush1.msra.mxu0 0.0
  %1756 = vmatprep.mubr.f32.mxu0 0.0
  %1757 = vmatmul.mubr.f32.gmra.mrb[0].mxu0 %v1690
  %v1758 = vpop.f32.mrb[0].mxu0
  %v1759 = vadd.f32 0.0, %v1758
  %v1760 = vpop.f32.mrb[0].mxu0
  %1761 = vdwg.mxu0
  %v1763 = vrot.slane %v1759, 2
  %v1765 = vadd.f32 %v1685, %v1763
  %v1766 = vrot.slane %v1674, 2
  %1767 = vrot.lane.b32.xlu0 %v1766, 32
  %v1768 = vpop.permute.xlu0 %1767
  %v1769 = vsel %vm42, %v1768, 0
  %1771 = vmatprep.subr.mxu0 0.0
  %1772 = vmatpush1.msra.mxu0 %v134
  %1773 = vmatprep.subr.mxu0 0.0
  %1774 = vmatpush1.msra.mxu0 %v135
  %1775 = vmatprep.subr.mxu0 0.0
  %1776 = vmatpush1.msra.mxu0 %v136
  %1777 = vmatprep.subr.mxu0 0.0
  %1778 = vmatpush1.msra.mxu0 %v137
  %1779 = vmatprep.subr.mxu0 0.0
  %1780 = vmatpush1.msra.mxu0 0.0
  %1781 = vmatprep.subr.mxu0 0.0
  %1782 = vmatpush1.msra.mxu0 0.0
  %1783 = vmatprep.subr.mxu0 0.0
  %1784 = vmatpush1.msra.mxu0 0.0
  %1785 = vmatprep.subr.mxu0 0.0
  %1786 = vmatpush1.msra.mxu0 0.0
  %1787 = vmatprep.subr.mxu0 0.0
  %1788 = vmatpush1.msra.mxu0 0.0
  %1789 = vmatprep.subr.mxu0 0.0
  %1790 = vmatpush1.msra.mxu0 0.0
  %1791 = vmatprep.subr.mxu0 0.0
  %1792 = vmatpush1.msra.mxu0 0.0
  %1793 = vmatprep.subr.mxu0 0.0
  %1794 = vmatpush1.msra.mxu0 0.0
  %1795 = vmatprep.subr.mxu0 0.0
  %1796 = vmatpush1.msra.mxu0 0.0
  %1797 = vmatprep.subr.mxu0 0.0
  %1798 = vmatpush1.msra.mxu0 0.0
  %1799 = vmatprep.subr.mxu0 0.0
  %1800 = vmatpush1.msra.mxu0 0.0
  %1801 = vmatprep.subr.mxu0 0.0
  %1802 = vmatpush1.msra.mxu0 0.0
  %1803 = vmatprep.subr.mxu0 0.0
  %1804 = vmatpush1.msra.mxu0 0.0
  %1805 = vmatprep.subr.mxu0 0.0
  %1806 = vmatpush1.msra.mxu0 0.0
  %1807 = vmatprep.subr.mxu0 0.0
  %1808 = vmatpush1.msra.mxu0 0.0
  %1809 = vmatprep.subr.mxu0 0.0
  %1810 = vmatpush1.msra.mxu0 0.0
  %1811 = vmatprep.subr.mxu0 0.0
  %1812 = vmatpush1.msra.mxu0 0.0
  %1813 = vmatprep.subr.mxu0 0.0
  %1814 = vmatpush1.msra.mxu0 0.0
  %1815 = vmatprep.subr.mxu0 0.0
  %1816 = vmatpush1.msra.mxu0 0.0
  %1817 = vmatprep.subr.mxu0 0.0
  %1818 = vmatpush1.msra.mxu0 0.0
  %1819 = vmatprep.subr.mxu0 0.0
  %1820 = vmatpush1.msra.mxu0 0.0
  %1821 = vmatprep.subr.mxu0 0.0
  %1822 = vmatpush1.msra.mxu0 0.0
  %1823 = vmatprep.subr.mxu0 0.0
  %1824 = vmatpush1.msra.mxu0 0.0
  %1825 = vmatprep.subr.mxu0 0.0
  %1826 = vmatpush1.msra.mxu0 0.0
  %1827 = vmatprep.subr.mxu0 0.0
  %1828 = vmatpush1.msra.mxu0 0.0
  %1829 = vmatprep.subr.mxu0 0.0
  %1830 = vmatpush1.msra.mxu0 0.0
  %1831 = vmatprep.subr.mxu0 0.0
  %1832 = vmatpush1.msra.mxu0 0.0
  %1833 = vmatprep.subr.mxu0 0.0
  %1834 = vmatpush1.msra.mxu0 0.0
  %1835 = vmatprep.mubr.f32.mxu0 0.0
  %1836 = vmatmul.mubr.f32.gmra.mrb[0].mxu0 %v1769
  %v1837 = vpop.f32.mrb[0].mxu0
  %v1838 = vadd.f32 0.0, %v1837
  %v1839 = vpop.f32.mrb[0].mxu0
  %1840 = vdwg.mxu0
  %v1841 = vadd.f32 %v1686, %v1838
  %v1842 = vxor.u32 %v1765, 2147483648
  %v1843 = vmul.f32 %v1842, 1.442695
  %v1844 = vpow.pop %v1843
  %v1845 = vadd.f32 %v1844, 1.0
  %v1846 = vrcp.pop %v1845
  %v1847 = vmul.f32 1.0, %v1846
  %v1848 = vtanh.pop %v1765
  %v1850 = vrot.slane %v1641, 6
  %v1852 = vmul.f32 %v1847, %v1850
  %1854 = vrot.lane.b32.xlu0 %v1848, 64
  %v1855 = vpop.permute.xlu0 %1854
  %v1857 = vmul.f32 %v1847, %v1855
  %1859 = vrot.lane.b32.xlu0 %v1857, 32
  %v1860 = vpop.permute.xlu0 %1859
  %v1862 = vadd.f32 %v1852, %v1860
  %v1863 = vtanh.pop %v1862
  %1865 = vrot.lane.b32.xlu0 %v1863, 64
  %v1866 = vpop.permute.xlu0 %1865
  %v1868 = vmul.f32 %v1847, %v1866
  %v1869 = vxor.u32 %v1841, 2147483648
  %v1870 = vmul.f32 %v1869, 1.442695
  %v1871 = vpow.pop %v1870
  %v1872 = vadd.f32 %v1871, 1.0
  %v1873 = vrcp.pop %v1872
  %v1874 = vmul.f32 1.0, %v1873
  %v1875 = vtanh.pop %v1841
  %v1877 = vrot.slane %v1668, 2
  %v1879 = vmul.f32 %v1874, %v1877
  %1881 = vrot.lane.b32.xlu0 %v1875, 64
  %v1882 = vpop.permute.xlu0 %1881
  %v1884 = vmul.f32 %v1874, %v1882
  %1886 = vrot.lane.b32.xlu0 %v1884, 32
  %v1887 = vpop.permute.xlu0 %1886
  %v1889 = vadd.f32 %v1879, %v1887
  %v1890 = vtanh.pop %v1889
  %1892 = vrot.lane.b32.xlu0 %v1890, 64
  %v1893 = vpop.permute.xlu0 %1892
  %v1895 = vmul.f32 %v1874, %v1893
  %1897 = vrot.lane.b32.xlu0 %v1868, 32
  %v1898 = vpop.permute.xlu0 %1897
  %1900 = vst.msk [vmem:[%s5 + $0x8] sm:$0xc0] %vm1012, %v1898
  %1902 = vrot.lane.b32.xlu0 %v1895, 64
  %v1903 = vpop.permute.xlu0 %1902
  %1905 = vst.msk [vmem:[%s5] sm:$0x3] %vm1018, %v1903
  // Predicated region
  $region22: #{lstm_ner_forward.2} parent=0 // pred_check
    _
  $region23: #{lstm_ner_forward.2} parent=0 // pred_check_branch
    %1907 = sbr.rel (0) target = $region25
  $region24: #{lstm_ner_forward.2} parent=0 // pred_region
    _
  $region25: #{lstm_ner_forward.2} parent=0 // pred_fallthru
    _
  // Predicated region
  $region26: #{lstm_ner_forward.2} parent=0 // pred_check
    _
  $region27: #{lstm_ner_forward.2} parent=0 // pred_check_branch
    %1909 = sbr.rel (0) target = $region29
  $region28: #{lstm_ner_forward.2} parent=0 // pred_region
    _
  $region29: #{lstm_ner_forward.2} parent=0 // pred_fallthru
    _

</llo_original>
